<compile_context>
chip_gen: v5e
topology: v5e:2x2
jax: 0.10.0
libtpu: 0.0.40
codegen_flags: <defaults>
</compile_context>

<pallas_src>
import functools

import jax
import jax.numpy as jnp
from jax.experimental import pallas as pl
from jax.experimental.pallas import tpu as pltpu

EPS = 1e-5  # torch.nn.InstanceNorm2d default


# ----------------------------- in-kernel helpers ---------------------------- #

def _in_affine(a, g, b):
    # InstanceNorm2d over the spatial axis (axis 0) of a [M, C] f32 activation.
    mean = jnp.mean(a, axis=0, keepdims=True)
    var = jnp.mean((a - mean) ** 2, axis=0, keepdims=True)
    return (a - mean) * jax.lax.rsqrt(var + EPS) * g + b


def _res_conv3x3(y, w, v, *, H, W, relu):
    # 3x3 stride-1 reflect-pad-1 conv + IN (+ReLU) on y: [H*W, 64] f32 (row major
    # spatial).  Built as a single [H*W, 576] im2col matmul; the padded rows /
    # im2col are assembled with contiguous slices + concats only (no reshapes of
    # tiled dims), cast to bf16 once.
    yb = y.astype(jnp.bfloat16)
    rows = [yb[h * W:(h + 1) * W] for h in range(H)]                  # [W, 64]
    pr = [None] * (H + 2)
    for h in range(H):                                                # rows 1..H
        r = rows[h]
        pr[h + 1] = jnp.concatenate([r[1:2], r, r[W - 2:W - 1]], axis=0)  # [W+2,64]
    pr[0], pr[H + 1] = pr[2], pr[H - 1]                               # reflect rows
    wide = [jnp.concatenate([p[0:W], p[1:W + 1], p[2:W + 2]], axis=1) for p in pr]
    lhs = jnp.concatenate(
        [jnp.concatenate([wide[h], wide[h + 1], wide[h + 2]], axis=1)
         for h in range(H)], axis=0)                                  # [H*W, 576]
    a = jnp.dot(lhs, w, preferred_element_type=jnp.float32) + v[0:1, :]
    out = _in_affine(a, v[1:2, :], v[2:3, :])
    return jnp.maximum(out, 0.0) if relu else out


# ------------------------------- Pallas kernels ----------------------------- #

def _conv1_kernel(p_ref, w_ref, v_ref, o_ref):
    # conv1 (9x9, 1->16, stride 1) + InstanceNorm + ReLU.
    # p_ref: [1, M, 81] bf16 im2col patches; w_ref: [81, 16] bf16;
    # v_ref: [3, 16] f32 (bias, gamma, beta); o_ref: [1, M, 16] bf16.
    acc = jnp.dot(p_ref[0], w_ref[...], preferred_element_type=jnp.float32)
    acc = acc + v_ref[0:1, :]
    y = _in_affine(acc, v_ref[1:2, :], v_ref[2:3, :])
    o_ref[0] = jnp.maximum(y, 0.0).astype(o_ref.dtype)


def _stack_kernel(p2_ref, w2_ref, v2_ref, w3_ref, v3_ref, wr_ref, vr_ref, o_ref,
                  *, H2, W2):
    # Fused conv2 + IN + ReLU -> conv3 + IN + ReLU -> res1 -> res2 -> res3.
    # p2_ref: [1, H2*W2, 144] bf16 conv2 im2col, rows ordered output-phase-major:
    #         row = ph*(H3*W3) + a*W3 + b with ph = 2*sh + sw and the output
    #         position being (2a+sh, 2b+sw) on conv2's H2 x W2 grid.
    # w2: [144, 32] bf16; w3: [288, 64] bf16; wr: [6, 576, 64] bf16 (residual
    # convs); v*: [3, C] f32 (bias, gamma, beta); o_ref: [1, H3*W3, 64] f32.
    H3, W3 = H2 // 2, W2 // 2
    M3 = H3 * W3

    # ---- conv2 (3x3 stride 2, 16->32): one matmul + IN + ReLU ------------
    a2 = jnp.dot(p2_ref[0], w2_ref[...], preferred_element_type=jnp.float32)
    a2 = a2 + v2_ref[0:1, :]
    y2 = _in_affine(a2, v2_ref[1:2, :], v2_ref[2:3, :])
    y2 = jnp.maximum(y2, 0.0).astype(jnp.bfloat16)        # [H2*W2, 32] phase-major

    # ---- rebuild conv3's reflect-padded stride-2 input phases ------------
    # ph_img[sh][sw][a, b, :] = conv2 output at spatial (2a+sh, 2b+sw).
    ph_img = [[None, None], [None, None]]
    for sh in range(2):
        for sw in range(2):
            blk = y2[(2 * sh + sw) * M3:(2 * sh + sw + 1) * M3]          # [M3, 32]
            ph_img[sh][sw] = jnp.stack(
                [blk[a * W3:(a + 1) * W3] for a in range(H3)], axis=0)   # [H3,W3,32]
    # Padded-phase [Rh, Rw] of the reflect-pad-1 conv2 output comes from the
    # unpadded phase (1-Rh, 1-Rw) with one edge row/col replicated.
    xpp = [[None, None], [None, None]]
    for rh in range(2):
        for rw in range(2):
            z = ph_img[1 - rh][1 - rw]
            z = (jnp.concatenate([z[0:1], z], axis=0) if rh == 0
                 else jnp.concatenate([z, z[H3 - 1:H3]], axis=0))        # [H3+1,..]
            z = (jnp.concatenate([z[:, 0:1], z], axis=1) if rw == 0
                 else jnp.concatenate([z, z[:, W3 - 1:W3]], axis=1))     # [..,W3+1]
            xpp[rh][rw] = z

    # ---- conv3 (3x3 stride 2, 32->64): one [M3, 288] matmul + IN + ReLU --
    rows3 = []
    for ho in range(H3):
        taps = [xpp[di % 2][dj % 2][ho + di // 2, dj // 2:dj // 2 + W3, :]
                for di in range(3) for dj in range(3)]                   # 9x[W3,32]
        rows3.append(jnp.concatenate(taps, axis=1))                      # [W3, 288]
    lhs3 = jnp.concatenate(rows3, axis=0)                                # [M3, 288]
    a3 = jnp.dot(lhs3, w3_ref[...], preferred_element_type=jnp.float32)
    a3 = a3 + v3_ref[0:1, :]
    y = _in_affine(a3, v3_ref[1:2, :], v3_ref[2:3, :])
    y = jnp.maximum(y, 0.0)                                              # [M3, 64] f32

    # ---- 3 residual blocks: (conv+IN+ReLU, conv+IN) + residual add -------
    for blk in range(3):
        res = y
        y = _res_conv3x3(y, wr_ref[2 * blk], vr_ref[2 * blk],
                         H=H3, W=W3, relu=True)
        y = _res_conv3x3(y, wr_ref[2 * blk + 1], vr_ref[2 * blk + 1],
                         H=H3, W=W3, relu=False) + res

    o_ref[0] = y


# ------------------------------ wrappers / model ----------------------------- #

def _cparams():
    return pltpu.CompilerParams(
        dimension_semantics=("parallel",),
        vmem_limit_bytes=32 * 1024 * 1024)


def l_block_forward(pp, x_nchw):
    """x_nchw: [N, 1, H, W] f32 (PyTorch NCHW).  Returns [N, 64, H//4, W//4]."""
    N, _, H, W = x_nchw.shape
    assert H % 4 == 0 and W % 4 == 0 and H >= 12 and W >= 12
    x = jnp.transpose(x_nchw, (0, 2, 3, 1))                    # NHWC

    # conv1 im2col (9x9, reflect pad 4) -- one XLA patches op on the tiny 1-ch
    # input (per review, replaces the 81-slice python loop).
    xp = jnp.pad(x, ((0, 0), (4, 4), (4, 4), (0, 0)), mode="reflect")
    p1 = jax.lax.conv_general_dilated_patches(
        xp, (9, 9), (1, 1), "VALID",
        dimension_numbers=("NHWC", "HWIO", "NHWC"))            # [N, H, W, 81]
    p1 = p1.reshape(N, H * W, 81).astype(jnp.bfloat16)

    o1 = pl.pallas_call(
        _conv1_kernel,
        out_shape=jax.ShapeDtypeStruct((N, H * W, 16), jnp.bfloat16),
        grid=(N,),
        in_specs=[pl.BlockSpec((1, H * W, 81), lambda n: (n, 0, 0)),
                  pl.BlockSpec((81, 16), lambda n: (0, 0)),
                  pl.BlockSpec((3, 16), lambda n: (0, 0))],
        out_specs=pl.BlockSpec((1, H * W, 16), lambda n: (n, 0, 0)),
        compiler_params=_cparams(),
    )(p1, pp["w1"], pp["v1"])

    # conv2 im2col (3x3, stride 2, reflect pad 1) on the bf16 conv1 output,
    # rows reordered output-phase-major so the fused kernel never needs a
    # strided access for conv3's stride-2 downsampling.
    H2, W2 = H // 2, W // 2
    y1 = o1.reshape(N, H, W, 16)
    y1p = jnp.pad(y1, ((0, 0), (1, 1), (1, 1), (0, 0)), mode="reflect")
    taps = [y1p[:, di:di + 2 * H2:2, dj:dj + 2 * W2:2, :]
            for di in range(3) for dj in range(3)]             # 9 x [N,H2,W2,16]
    p2 = jnp.stack(taps, axis=3).reshape(N, H2, W2, 144)
    p2 = p2.reshape(N, H2 // 2, 2, W2 // 2, 2, 144)
    p2 = jnp.transpose(p2, (0, 2, 4, 1, 3, 5)).reshape(N, H2 * W2, 144)

    H3, W3 = H2 // 2, W2 // 2
    out = pl.pallas_call(
        functools.partial(_stack_kernel, H2=H2, W2=W2),
        out_shape=jax.ShapeDtypeStruct((N, H3 * W3, 64), jnp.float32),
        grid=(N,),
        in_specs=[pl.BlockSpec((1, H2 * W2, 144), lambda n: (n, 0, 0)),
                  pl.BlockSpec((144, 32), lambda n: (0, 0)),
                  pl.BlockSpec((3, 32), lambda n: (0, 0)),
                  pl.BlockSpec((288, 64), lambda n: (0, 0)),
                  pl.BlockSpec((3, 64), lambda n: (0, 0)),
                  pl.BlockSpec((6, 576, 64), lambda n: (0, 0, 0)),
                  pl.BlockSpec((6, 3, 64), lambda n: (0, 0, 0))],
        out_specs=pl.BlockSpec((1, H3 * W3, 64), lambda n: (n, 0, 0)),
        compiler_params=_cparams(),
    )(p2, pp["w2"], pp["v2"], pp["w3"], pp["v3"], pp["wr"], pp["vr"])

    y = out.reshape(N, H3, W3, 64)
    return jnp.transpose(y, (0, 3, 1, 2))                      # NHWC -> NCHW


# ------------------------------ params / packing ----------------------------- #

def _conv_init(key, cout, cin, k):
    kw, kb = jax.random.split(key)
    bound = 1.0 / jnp.sqrt(jnp.float32(cin * k * k))
    w = jax.random.uniform(kw, (cout, cin, k, k), jnp.float32, -bound, bound)
    b = jax.random.uniform(kb, (cout,), jnp.float32, -bound, bound)
    return w, b


def init_params(key):
    """PyTorch-convention parameters (Conv2d [Cout,Cin,k,k], IN affine)."""
    params = {}
    keys = iter(jax.random.split(key, 16))

    def add_conv(name, cout, cin, k):
        w, b = _conv_init(next(keys), cout, cin, k)
        params[name + "_w"], params[name + "_b"] = w, b

    def add_in(name, c):
        params[name + "_g"] = jnp.ones((c,), jnp.float32)
        params[name + "_b"] = jnp.zeros((c,), jnp.float32)

    add_conv("c1", 16, 1, 9);  add_in("in1", 16)
    add_conv("c2", 32, 16, 3); add_in("in2", 32)
    add_conv("c3", 64, 32, 3); add_in("in3", 64)
    for r in ("r1", "r2", "r3"):
        add_conv(r + "_c1", 64, 64, 3); add_in(r + "_in1", 64)
        add_conv(r + "_c2", 64, 64, 3); add_in(r + "_in2", 64)
    return params


def _pack_w(w):
    # [Cout, Cin, k, k] -> [k*k*Cin, Cout] bf16, K index = (ki*k + kj)*Cin + ci.
    cout, cin, k, _ = w.shape
    return jnp.transpose(w, (2, 3, 1, 0)).reshape(k * k * cin, cout).astype(jnp.bfloat16)


def pack_params(p):
    pp = {"w1": _pack_w(p["c1_w"]),
          "v1": jnp.stack([p["c1_b"], p["in1_g"], p["in1_b"]], axis=0),
          "w2": _pack_w(p["c2_w"]),
          "v2": jnp.stack([p["c2_b"], p["in2_g"], p["in2_b"]], axis=0),
          "w3": _pack_w(p["c3_w"]),
          "v3": jnp.stack([p["c3_b"], p["in3_g"], p["in3_b"]], axis=0)}
    wr, vr = [], []
    for r in ("r1", "r2", "r3"):
        for c, i in (("c1", "in1"), ("c2", "in2")):
            wr.append(_pack_w(p[f"{r}_{c}_w"]))
            vr.append(jnp.stack([p[f"{r}_{c}_b"], p[f"{r}_{i}_g"], p[f"{r}_{i}_b"]],
                                axis=0))
    pp["wr"] = jnp.stack(wr, axis=0)
    pp["vr"] = jnp.stack(vr, axis=0)
    return pp


# --------------------------- pure-JAX reference check ------------------------ #

def _ref_conv(x, w, b, stride, pad):
    xp = jnp.pad(x, ((0, 0), (0, 0), (pad, pad), (pad, pad)), mode="reflect")
    y = jax.lax.conv_general_dilated(
        xp, w, (stride, stride), "VALID",
        dimension_numbers=("NCHW", "OIHW", "NCHW"),
        precision=jax.lax.Precision.HIGHEST)
    return y + b[None, :, None, None]


def _ref_in(x, g, b):
    m = jnp.mean(x, axis=(2, 3), keepdims=True)
    v = jnp.mean((x - m) ** 2, axis=(2, 3), keepdims=True)
    return (x - m) * jax.lax.rsqrt(v + EPS) * g[None, :, None, None] \
        + b[None, :, None, None]


def l_block_reference(p, x):
    y = jax.nn.relu(_ref_in(_ref_conv(x, p["c1_w"], p["c1_b"], 1, 4),
                            p["in1_g"], p["in1_b"]))
    y = jax.nn.relu(_ref_in(_ref_conv(y, p["c2_w"], p["c2_b"], 2, 1),
                            p["in2_g"], p["in2_b"]))
    y = jax.nn.relu(_ref_in(_ref_conv(y, p["c3_w"], p["c3_b"], 2, 1),
                            p["in3_g"], p["in3_b"]))
    for r in ("r1", "r2", "r3"):
        res = y
        y = jax.nn.relu(_ref_in(_ref_conv(y, p[f"{r}_c1_w"], p[f"{r}_c1_b"], 1, 1),
                                p[f"{r}_in1_g"], p[f"{r}_in1_b"]))
        y = _ref_in(_ref_conv(y, p[f"{r}_c2_w"], p[f"{r}_c2_b"], 1, 1),
                    p[f"{r}_in2_g"], p[f"{r}_in2_b"]) + res
    return y


# ---------------------------------- main ------------------------------------- #

if __name__ == "__main__":
    key = jax.random.PRNGKey(0)
    k_params, k_x = jax.random.split(key)
    params = init_params(k_params)
    packed = pack_params(params)
    x = jax.random.normal(k_x, (2, 1, 16, 16), jnp.float32)     # NCHW, L channel

    fwd = jax.jit(l_block_forward)
    out = jax.block_until_ready(fwd(packed, x))

    assert out.shape == (2, 64, 4, 4), out.shape
    assert bool(jnp.all(jnp.isfinite(out)))

    # Loose tolerance: kernels feed the MXU bf16 while the reference runs f32.
    ref = l_block_reference(params, x)
    max_err = float(jnp.max(jnp.abs(out - ref)))
    assert max_err < 0.3, f"max abs error vs reference too large: {max_err}"

    print("KERNEL_OK")
</pallas_src>

<mosaic_0001>
module attributes {stable_mosaic.version = 11 : i64} {
  func.func @_conv1_kernel(%arg0: i32, %arg1: memref<1x256x81xbf16, #tpu.memory_space<vmem>>, %arg2: memref<81x16xbf16, #tpu.memory_space<vmem>>, %arg3: memref<3x16xf32, #tpu.memory_space<vmem>>, %arg4: memref<1x256x16xbf16, #tpu.memory_space<vmem>>) attributes {dimension_semantics = [#tpu.dimension_semantics<parallel>], iteration_bounds = array<i64: 2>, scalar_prefetch = 0 : i64, scratch_operands = 0 : i64, tpu.core_type = #tpu.core_type<tc>, window_params = [{transform_indices = @transform_0, window_bounds = array<i64: 1, 256, 81>}, {pipeline_mode = #tpu.pipeline_mode<synchronous>, transform_indices = @transform_1, window_bounds = array<i64: 81, 16>}, {pipeline_mode = #tpu.pipeline_mode<synchronous>, transform_indices = @transform_2, window_bounds = array<i64: 3, 16>}, {transform_indices = @transform_3, window_bounds = array<i64: 1, 256, 16>}]} {
    %c0 = arith.constant 0 : index
    %c0_0 = arith.constant 0 : index
    %c0_1 = arith.constant 0 : index
    %0 = vector.load %arg1[%c0, %c0_0, %c0_1] : memref<1x256x81xbf16, #tpu.memory_space<vmem>>, vector<1x256x81xbf16>
    %1 = vector.shape_cast %0 : vector<1x256x81xbf16> to vector<256x81xbf16>
    %c0_2 = arith.constant 0 : index
    %c0_3 = arith.constant 0 : index
    %2 = vector.load %arg2[%c0_2, %c0_3] : memref<81x16xbf16, #tpu.memory_space<vmem>>, vector<81x16xbf16>
    %cst = arith.constant dense<0.000000e+00> : vector<256x16xf32>
    %3 = tpu.matmul %1, %2, %cst {dimension_numbers = #tpu.dot_dimension_numbers<[1], [0], [0], [1], [0, 0, 1, 1], [], []>} : vector<256x81xbf16>, vector<81x16xbf16>, vector<256x16xf32> -> vector<256x16xf32>
    %c0_4 = arith.constant 0 : index
    %c0_5 = arith.constant 0 : index
    %4 = vector.load %arg3[%c0_4, %c0_5] : memref<3x16xf32, #tpu.memory_space<vmem>>, vector<1x16xf32>
    %5 = vector.broadcast %4 : vector<1x16xf32> to vector<256x16xf32>
    %6 = arith.addf %3, %5 : vector<256x16xf32>
    %c1 = arith.constant 1 : index
    %c0_6 = arith.constant 0 : index
    %7 = vector.load %arg3[%c1, %c0_6] : memref<3x16xf32, #tpu.memory_space<vmem>>, vector<1x16xf32>
    %c2 = arith.constant 2 : index
    %c0_7 = arith.constant 0 : index
    %8 = vector.load %arg3[%c2, %c0_7] : memref<3x16xf32, #tpu.memory_space<vmem>>, vector<1x16xf32>
    %cst_8 = arith.constant dense<0.000000e+00> : vector<16xf32>
    %9 = vector.multi_reduction <add>, %6, %cst_8 [0] : vector<256x16xf32> to vector<16xf32>
    %10 = vector.shape_cast %9 : vector<16xf32> to vector<1x16xf32>
    %cst_9 = arith.constant 2.560000e+02 : f32
    %11 = vector.broadcast %cst_9 : f32 to vector<1x16xf32>
    %12 = arith.divf %10, %11 : vector<1x16xf32>
    %13 = vector.broadcast %12 : vector<1x16xf32> to vector<256x16xf32>
    %14 = arith.subf %6, %13 : vector<256x16xf32>
    %15 = arith.mulf %14, %14 : vector<256x16xf32>
    %cst_10 = arith.constant dense<0.000000e+00> : vector<16xf32>
    %16 = vector.multi_reduction <add>, %15, %cst_10 [0] : vector<256x16xf32> to vector<16xf32>
    %17 = vector.shape_cast %16 : vector<16xf32> to vector<1x16xf32>
    %cst_11 = arith.constant 2.560000e+02 : f32
    %18 = vector.broadcast %cst_11 : f32 to vector<1x16xf32>
    %19 = arith.divf %17, %18 : vector<1x16xf32>
    %20 = vector.broadcast %12 : vector<1x16xf32> to vector<256x16xf32>
    %21 = arith.subf %6, %20 : vector<256x16xf32>
    %cst_12 = arith.constant 9.99999974E-6 : f32
    %22 = vector.broadcast %cst_12 : f32 to vector<1x16xf32>
    %23 = arith.addf %19, %22 : vector<1x16xf32>
    %24 = math.rsqrt %23 : vector<1x16xf32>
    %25 = vector.broadcast %24 : vector<1x16xf32> to vector<256x16xf32>
    %26 = arith.mulf %21, %25 : vector<256x16xf32>
    %27 = vector.broadcast %7 : vector<1x16xf32> to vector<256x16xf32>
    %28 = arith.mulf %26, %27 : vector<256x16xf32>
    %29 = vector.broadcast %8 : vector<1x16xf32> to vector<256x16xf32>
    %30 = arith.addf %28, %29 : vector<256x16xf32>
    %cst_13 = arith.constant 0.000000e+00 : f32
    %31 = vector.broadcast %cst_13 : f32 to vector<256x16xf32>
    %32 = arith.maximumf %30, %31 : vector<256x16xf32>
    %33 = arith.truncf %32 : vector<256x16xf32> to vector<256x16xbf16>
    %c0_14 = arith.constant 0 : index
    %c0_15 = arith.constant 0 : index
    %c0_16 = arith.constant 0 : index
    %34 = vector.load %arg4[%c0_14, %c0_15, %c0_16] : memref<1x256x16xbf16, #tpu.memory_space<vmem>>, vector<1x256x16xbf16>
    %35 = vector.shape_cast %34 : vector<1x256x16xbf16> to vector<256x16xbf16>
    %36 = vector.shape_cast %33 : vector<256x16xbf16> to vector<1x256x16xbf16>
    tpu.vector_store %arg4[%c0_14, %c0_15, %c0_16], %36 {strides = array<i32>} : memref<1x256x16xbf16, #tpu.memory_space<vmem>>, vector<1x256x16xbf16>,
    return
  }
  func.func @transform_0(%arg0: i32) -> (i32, i32, i32) {
    %c0_i32 = arith.constant 0 : i32
    %c0_i32_0 = arith.constant 0 : i32
    %c0_i32_1 = arith.constant 0 : i32
    return %arg0, %c0_i32, %c0_i32_0 : i32, i32, i32
  }
  func.func @transform_1(%arg0: i32) -> (i32, i32) {
    %c0_i32 = arith.constant 0 : i32
    %c0_i32_0 = arith.constant 0 : i32
    %c0_i32_1 = arith.constant 0 : i32
    return %c0_i32, %c0_i32_0 : i32, i32
  }
  func.func @transform_2(%arg0: i32) -> (i32, i32) {
    %c0_i32 = arith.constant 0 : i32
    %c0_i32_0 = arith.constant 0 : i32
    %c0_i32_1 = arith.constant 0 : i32
    return %c0_i32, %c0_i32_0 : i32, i32
  }
  func.func @transform_3(%arg0: i32) -> (i32, i32, i32) {
    %c0_i32 = arith.constant 0 : i32
    %c0_i32_0 = arith.constant 0 : i32
    %c0_i32_1 = arith.constant 0 : i32
    return %arg0, %c0_i32, %c0_i32_0 : i32, i32, i32
  }
}

module attributes {stable_mosaic.version = 11 : i64} {
  func.func @_stack_kernel(%arg0: i32, %arg1: memref<1x64x144xbf16, #tpu.memory_space<vmem>>, %arg2: memref<144x32xbf16, #tpu.memory_space<vmem>>, %arg3: memref<3x32xf32, #tpu.memory_space<vmem>>, %arg4: memref<288x64xbf16, #tpu.memory_space<vmem>>, %arg5: memref<3x64xf32, #tpu.memory_space<vmem>>, %arg6: memref<6x576x64xbf16, #tpu.memory_space<vmem>>, %arg7: memref<6x3x64xf32, #tpu.memory_space<vmem>>, %arg8: memref<1x16x64xf32, #tpu.memory_space<vmem>>) attributes {dimension_semantics = [#tpu.dimension_semantics<parallel>], iteration_bounds = array<i64: 2>, scalar_prefetch = 0 : i64, scratch_operands = 0 : i64, tpu.core_type = #tpu.core_type<tc>, window_params = [{transform_indices = @transform_0, window_bounds = array<i64: 1, 64, 144>}, {pipeline_mode = #tpu.pipeline_mode<synchronous>, transform_indices = @transform_1, window_bounds = array<i64: 144, 32>}, {pipeline_mode = #tpu.pipeline_mode<synchronous>, transform_indices = @transform_2, window_bounds = array<i64: 3, 32>}, {pipeline_mode = #tpu.pipeline_mode<synchronous>, transform_indices = @transform_3, window_bounds = array<i64: 288, 64>}, {pipeline_mode = #tpu.pipeline_mode<synchronous>, transform_indices = @transform_4, window_bounds = array<i64: 3, 64>}, {pipeline_mode = #tpu.pipeline_mode<synchronous>, transform_indices = @transform_5, window_bounds = array<i64: 6, 576, 64>}, {pipeline_mode = #tpu.pipeline_mode<synchronous>, transform_indices = @transform_6, window_bounds = array<i64: 6, 3, 64>}, {transform_indices = @transform_7, window_bounds = array<i64: 1, 16, 64>}]} {
    %c0 = arith.constant 0 : index
    %c0_0 = arith.constant 0 : index
    %c0_1 = arith.constant 0 : index
    %0 = vector.load %arg1[%c0, %c0_0, %c0_1] : memref<1x64x144xbf16, #tpu.memory_space<vmem>>, vector<1x64x144xbf16>
    %1 = vector.shape_cast %0 : vector<1x64x144xbf16> to vector<64x144xbf16>
    %c0_2 = arith.constant 0 : index
    %c0_3 = arith.constant 0 : index
    %2 = vector.load %arg2[%c0_2, %c0_3] : memref<144x32xbf16, #tpu.memory_space<vmem>>, vector<144x32xbf16>
    %cst = arith.constant dense<0.000000e+00> : vector<64x32xf32>
    %3 = tpu.matmul %1, %2, %cst {dimension_numbers = #tpu.dot_dimension_numbers<[1], [0], [0], [1], [0, 0, 1, 1], [], []>} : vector<64x144xbf16>, vector<144x32xbf16>, vector<64x32xf32> -> vector<64x32xf32>
    %c0_4 = arith.constant 0 : index
    %c0_5 = arith.constant 0 : index
    %4 = vector.load %arg3[%c0_4, %c0_5] : memref<3x32xf32, #tpu.memory_space<vmem>>, vector<1x32xf32>
    %5 = vector.broadcast %4 : vector<1x32xf32> to vector<64x32xf32>
    %6 = arith.addf %3, %5 : vector<64x32xf32>
    %c1 = arith.constant 1 : index
    %c0_6 = arith.constant 0 : index
    %7 = vector.load %arg3[%c1, %c0_6] : memref<3x32xf32, #tpu.memory_space<vmem>>, vector<1x32xf32>
    %c2 = arith.constant 2 : index
    %c0_7 = arith.constant 0 : index
    %8 = vector.load %arg3[%c2, %c0_7] : memref<3x32xf32, #tpu.memory_space<vmem>>, vector<1x32xf32>
    %cst_8 = arith.constant dense<0.000000e+00> : vector<32xf32>
    %9 = vector.multi_reduction <add>, %6, %cst_8 [0] : vector<64x32xf32> to vector<32xf32>
    %10 = vector.shape_cast %9 : vector<32xf32> to vector<1x32xf32>
    %cst_9 = arith.constant 6.400000e+01 : f32
    %11 = vector.broadcast %cst_9 : f32 to vector<1x32xf32>
    %12 = arith.divf %10, %11 : vector<1x32xf32>
    %13 = vector.broadcast %12 : vector<1x32xf32> to vector<64x32xf32>
    %14 = arith.subf %6, %13 : vector<64x32xf32>
    %15 = arith.mulf %14, %14 : vector<64x32xf32>
    %cst_10 = arith.constant dense<0.000000e+00> : vector<32xf32>
    %16 = vector.multi_reduction <add>, %15, %cst_10 [0] : vector<64x32xf32> to vector<32xf32>
    %17 = vector.shape_cast %16 : vector<32xf32> to vector<1x32xf32>
    %cst_11 = arith.constant 6.400000e+01 : f32
    %18 = vector.broadcast %cst_11 : f32 to vector<1x32xf32>
    %19 = arith.divf %17, %18 : vector<1x32xf32>
    %20 = vector.broadcast %12 : vector<1x32xf32> to vector<64x32xf32>
    %21 = arith.subf %6, %20 : vector<64x32xf32>
    %cst_12 = arith.constant 9.99999974E-6 : f32
    %22 = vector.broadcast %cst_12 : f32 to vector<1x32xf32>
    %23 = arith.addf %19, %22 : vector<1x32xf32>
    %24 = math.rsqrt %23 : vector<1x32xf32>
    %25 = vector.broadcast %24 : vector<1x32xf32> to vector<64x32xf32>
    %26 = arith.mulf %21, %25 : vector<64x32xf32>
    %27 = vector.broadcast %7 : vector<1x32xf32> to vector<64x32xf32>
    %28 = arith.mulf %26, %27 : vector<64x32xf32>
    %29 = vector.broadcast %8 : vector<1x32xf32> to vector<64x32xf32>
    %30 = arith.addf %28, %29 : vector<64x32xf32>
    %cst_13 = arith.constant 0.000000e+00 : f32
    %31 = vector.broadcast %cst_13 : f32 to vector<64x32xf32>
    %32 = arith.maximumf %30, %31 : vector<64x32xf32>
    %33 = arith.truncf %32 : vector<64x32xf32> to vector<64x32xbf16>
    %34 = vector.extract_strided_slice %33 {offsets = [0, 0], sizes = [16, 32], strides = [1, 1]} : vector<64x32xbf16> to vector<16x32xbf16>
    %35 = vector.extract_strided_slice %34 {offsets = [0, 0], sizes = [4, 32], strides = [1, 1]} : vector<16x32xbf16> to vector<4x32xbf16>
    %36 = vector.extract_strided_slice %34 {offsets = [4, 0], sizes = [4, 32], strides = [1, 1]} : vector<16x32xbf16> to vector<4x32xbf16>
    %37 = vector.extract_strided_slice %34 {offsets = [8, 0], sizes = [4, 32], strides = [1, 1]} : vector<16x32xbf16> to vector<4x32xbf16>
    %38 = vector.extract_strided_slice %34 {offsets = [12, 0], sizes = [4, 32], strides = [1, 1]} : vector<16x32xbf16> to vector<4x32xbf16>
    %39 = vector.shape_cast %35 : vector<4x32xbf16> to vector<1x4x32xbf16>
    %40 = vector.shape_cast %36 : vector<4x32xbf16> to vector<1x4x32xbf16>
    %41 = vector.shape_cast %37 : vector<4x32xbf16> to vector<1x4x32xbf16>
    %42 = vector.shape_cast %38 : vector<4x32xbf16> to vector<1x4x32xbf16>
    %43 = tpu.concatenate %39, %40, %41, %42 in 0 : vector<1x4x32xbf16>, vector<1x4x32xbf16>, vector<1x4x32xbf16>, vector<1x4x32xbf16> -> vector<4x4x32xbf16>
    %44 = vector.extract_strided_slice %33 {offsets = [16, 0], sizes = [16, 32], strides = [1, 1]} : vector<64x32xbf16> to vector<16x32xbf16>
    %45 = vector.extract_strided_slice %44 {offsets = [0, 0], sizes = [4, 32], strides = [1, 1]} : vector<16x32xbf16> to vector<4x32xbf16>
    %46 = vector.extract_strided_slice %44 {offsets = [4, 0], sizes = [4, 32], strides = [1, 1]} : vector<16x32xbf16> to vector<4x32xbf16>
    %47 = vector.extract_strided_slice %44 {offsets = [8, 0], sizes = [4, 32], strides = [1, 1]} : vector<16x32xbf16> to vector<4x32xbf16>
    %48 = vector.extract_strided_slice %44 {offsets = [12, 0], sizes = [4, 32], strides = [1, 1]} : vector<16x32xbf16> to vector<4x32xbf16>
    %49 = vector.shape_cast %45 : vector<4x32xbf16> to vector<1x4x32xbf16>
    %50 = vector.shape_cast %46 : vector<4x32xbf16> to vector<1x4x32xbf16>
    %51 = vector.shape_cast %47 : vector<4x32xbf16> to vector<1x4x32xbf16>
    %52 = vector.shape_cast %48 : vector<4x32xbf16> to vector<1x4x32xbf16>
    %53 = tpu.concatenate %49, %50, %51, %52 in 0 : vector<1x4x32xbf16>, vector<1x4x32xbf16>, vector<1x4x32xbf16>, vector<1x4x32xbf16> -> vector<4x4x32xbf16>
    %54 = vector.extract_strided_slice %33 {offsets = [32, 0], sizes = [16, 32], strides = [1, 1]} : vector<64x32xbf16> to vector<16x32xbf16>
    %55 = vector.extract_strided_slice %54 {offsets = [0, 0], sizes = [4, 32], strides = [1, 1]} : vector<16x32xbf16> to vector<4x32xbf16>
    %56 = vector.extract_strided_slice %54 {offsets = [4, 0], sizes = [4, 32], strides = [1, 1]} : vector<16x32xbf16> to vector<4x32xbf16>
    %57 = vector.extract_strided_slice %54 {offsets = [8, 0], sizes = [4, 32], strides = [1, 1]} : vector<16x32xbf16> to vector<4x32xbf16>
    %58 = vector.extract_strided_slice %54 {offsets = [12, 0], sizes = [4, 32], strides = [1, 1]} : vector<16x32xbf16> to vector<4x32xbf16>
    %59 = vector.shape_cast %55 : vector<4x32xbf16> to vector<1x4x32xbf16>
    %60 = vector.shape_cast %56 : vector<4x32xbf16> to vector<1x4x32xbf16>
    %61 = vector.shape_cast %57 : vector<4x32xbf16> to vector<1x4x32xbf16>
    %62 = vector.shape_cast %58 : vector<4x32xbf16> to vector<1x4x32xbf16>
    %63 = tpu.concatenate %59, %60, %61, %62 in 0 : vector<1x4x32xbf16>, vector<1x4x32xbf16>, vector<1x4x32xbf16>, vector<1x4x32xbf16> -> vector<4x4x32xbf16>
    %64 = vector.extract_strided_slice %33 {offsets = [48, 0], sizes = [16, 32], strides = [1, 1]} : vector<64x32xbf16> to vector<16x32xbf16>
    %65 = vector.extract_strided_slice %64 {offsets = [0, 0], sizes = [4, 32], strides = [1, 1]} : vector<16x32xbf16> to vector<4x32xbf16>
    %66 = vector.extract_strided_slice %64 {offsets = [4, 0], sizes = [4, 32], strides = [1, 1]} : vector<16x32xbf16> to vector<4x32xbf16>
    %67 = vector.extract_strided_slice %64 {offsets = [8, 0], sizes = [4, 32], strides = [1, 1]} : vector<16x32xbf16> to vector<4x32xbf16>
    %68 = vector.extract_strided_slice %64 {offsets = [12, 0], sizes = [4, 32], strides = [1, 1]} : vector<16x32xbf16> to vector<4x32xbf16>
    %69 = vector.shape_cast %65 : vector<4x32xbf16> to vector<1x4x32xbf16>
    %70 = vector.shape_cast %66 : vector<4x32xbf16> to vector<1x4x32xbf16>
    %71 = vector.shape_cast %67 : vector<4x32xbf16> to vector<1x4x32xbf16>
    %72 = vector.shape_cast %68 : vector<4x32xbf16> to vector<1x4x32xbf16>
    %73 = tpu.concatenate %69, %70, %71, %72 in 0 : vector<1x4x32xbf16>, vector<1x4x32xbf16>, vector<1x4x32xbf16>, vector<1x4x32xbf16> -> vector<4x4x32xbf16>
    %74 = vector.extract_strided_slice %73 {offsets = [0, 0, 0], sizes = [1, 4, 32], strides = [1, 1, 1]} : vector<4x4x32xbf16> to vector<1x4x32xbf16>
    %75 = tpu.concatenate %74, %73 in 0 : vector<1x4x32xbf16>, vector<4x4x32xbf16> -> vector<5x4x32xbf16>
    %76 = vector.extract_strided_slice %75 {offsets = [0, 0, 0], sizes = [5, 1, 32], strides = [1, 1, 1]} : vector<5x4x32xbf16> to vector<5x1x32xbf16>
    %77 = tpu.concatenate %76, %75 in 1 : vector<5x1x32xbf16>, vector<5x4x32xbf16> -> vector<5x5x32xbf16>
    %78 = vector.extract_strided_slice %63 {offsets = [0, 0, 0], sizes = [1, 4, 32], strides = [1, 1, 1]} : vector<4x4x32xbf16> to vector<1x4x32xbf16>
    %79 = tpu.concatenate %78, %63 in 0 : vector<1x4x32xbf16>, vector<4x4x32xbf16> -> vector<5x4x32xbf16>
    %80 = vector.extract_strided_slice %79 {offsets = [0, 3, 0], sizes = [5, 1, 32], strides = [1, 1, 1]} : vector<5x4x32xbf16> to vector<5x1x32xbf16>
    %81 = tpu.concatenate %79, %80 in 1 : vector<5x4x32xbf16>, vector<5x1x32xbf16> -> vector<5x5x32xbf16>
    %82 = vector.extract_strided_slice %53 {offsets = [3, 0, 0], sizes = [1, 4, 32], strides = [1, 1, 1]} : vector<4x4x32xbf16> to vector<1x4x32xbf16>
    %83 = tpu.concatenate %53, %82 in 0 : vector<4x4x32xbf16>, vector<1x4x32xbf16> -> vector<5x4x32xbf16>
    %84 = vector.extract_strided_slice %83 {offsets = [0, 0, 0], sizes = [5, 1, 32], strides = [1, 1, 1]} : vector<5x4x32xbf16> to vector<5x1x32xbf16>
    %85 = tpu.concatenate %84, %83 in 1 : vector<5x1x32xbf16>, vector<5x4x32xbf16> -> vector<5x5x32xbf16>
    %86 = vector.extract_strided_slice %43 {offsets = [3, 0, 0], sizes = [1, 4, 32], strides = [1, 1, 1]} : vector<4x4x32xbf16> to vector<1x4x32xbf16>
    %87 = tpu.concatenate %43, %86 in 0 : vector<4x4x32xbf16>, vector<1x4x32xbf16> -> vector<5x4x32xbf16>
    %88 = vector.extract_strided_slice %87 {offsets = [0, 3, 0], sizes = [5, 1, 32], strides = [1, 1, 1]} : vector<5x4x32xbf16> to vector<5x1x32xbf16>
    %89 = tpu.concatenate %87, %88 in 1 : vector<5x4x32xbf16>, vector<5x1x32xbf16> -> vector<5x5x32xbf16>
    %90 = vector.extract_strided_slice %77 {offsets = [0, 0, 0], sizes = [1, 4, 32], strides = [1, 1, 1]} : vector<5x5x32xbf16> to vector<1x4x32xbf16>
    %91 = vector.shape_cast %90 : vector<1x4x32xbf16> to vector<4x32xbf16>
    %92 = vector.extract_strided_slice %81 {offsets = [0, 0, 0], sizes = [1, 4, 32], strides = [1, 1, 1]} : vector<5x5x32xbf16> to vector<1x4x32xbf16>
    %93 = vector.shape_cast %92 : vector<1x4x32xbf16> to vector<4x32xbf16>
    %94 = vector.extract_strided_slice %77 {offsets = [0, 1, 0], sizes = [1, 4, 32], strides = [1, 1, 1]} : vector<5x5x32xbf16> to vector<1x4x32xbf16>
    %95 = vector.shape_cast %94 : vector<1x4x32xbf16> to vector<4x32xbf16>
    %96 = vector.extract_strided_slice %85 {offsets = [0, 0, 0], sizes = [1, 4, 32], strides = [1, 1, 1]} : vector<5x5x32xbf16> to vector<1x4x32xbf16>
    %97 = vector.shape_cast %96 : vector<1x4x32xbf16> to vector<4x32xbf16>
    %98 = vector.extract_strided_slice %89 {offsets = [0, 0, 0], sizes = [1, 4, 32], strides = [1, 1, 1]} : vector<5x5x32xbf16> to vector<1x4x32xbf16>
    %99 = vector.shape_cast %98 : vector<1x4x32xbf16> to vector<4x32xbf16>
    %100 = vector.extract_strided_slice %85 {offsets = [0, 1, 0], sizes = [1, 4, 32], strides = [1, 1, 1]} : vector<5x5x32xbf16> to vector<1x4x32xbf16>
    %101 = vector.shape_cast %100 : vector<1x4x32xbf16> to vector<4x32xbf16>
    %102 = vector.extract_strided_slice %77 {offsets = [1, 0, 0], sizes = [1, 4, 32], strides = [1, 1, 1]} : vector<5x5x32xbf16> to vector<1x4x32xbf16>
    %103 = vector.shape_cast %102 : vector<1x4x32xbf16> to vector<4x32xbf16>
    %104 = vector.extract_strided_slice %81 {offsets = [1, 0, 0], sizes = [1, 4, 32], strides = [1, 1, 1]} : vector<5x5x32xbf16> to vector<1x4x32xbf16>
    %105 = vector.shape_cast %104 : vector<1x4x32xbf16> to vector<4x32xbf16>
    %106 = vector.extract_strided_slice %77 {offsets = [1, 1, 0], sizes = [1, 4, 32], strides = [1, 1, 1]} : vector<5x5x32xbf16> to vector<1x4x32xbf16>
    %107 = vector.shape_cast %106 : vector<1x4x32xbf16> to vector<4x32xbf16>
    %108 = tpu.concatenate %91, %93, %95, %97, %99, %101, %103, %105, %107 in 1 : vector<4x32xbf16>, vector<4x32xbf16>, vector<4x32xbf16>, vector<4x32xbf16>, vector<4x32xbf16>, vector<4x32xbf16>, vector<4x32xbf16>, vector<4x32xbf16>, vector<4x32xbf16> -> vector<4x288xbf16>
    %109 = vector.extract_strided_slice %77 {offsets = [1, 0, 0], sizes = [1, 4, 32], strides = [1, 1, 1]} : vector<5x5x32xbf16> to vector<1x4x32xbf16>
    %110 = vector.shape_cast %109 : vector<1x4x32xbf16> to vector<4x32xbf16>
    %111 = vector.extract_strided_slice %81 {offsets = [1, 0, 0], sizes = [1, 4, 32], strides = [1, 1, 1]} : vector<5x5x32xbf16> to vector<1x4x32xbf16>
    %112 = vector.shape_cast %111 : vector<1x4x32xbf16> to vector<4x32xbf16>
    %113 = vector.extract_strided_slice %77 {offsets = [1, 1, 0], sizes = [1, 4, 32], strides = [1, 1, 1]} : vector<5x5x32xbf16> to vector<1x4x32xbf16>
    %114 = vector.shape_cast %113 : vector<1x4x32xbf16> to vector<4x32xbf16>
    %115 = vector.extract_strided_slice %85 {offsets = [1, 0, 0], sizes = [1, 4, 32], strides = [1, 1, 1]} : vector<5x5x32xbf16> to vector<1x4x32xbf16>
    %116 = vector.shape_cast %115 : vector<1x4x32xbf16> to vector<4x32xbf16>
    %117 = vector.extract_strided_slice %89 {offsets = [1, 0, 0], sizes = [1, 4, 32], strides = [1, 1, 1]} : vector<5x5x32xbf16> to vector<1x4x32xbf16>
    %118 = vector.shape_cast %117 : vector<1x4x32xbf16> to vector<4x32xbf16>
    %119 = vector.extract_strided_slice %85 {offsets = [1, 1, 0], sizes = [1, 4, 32], strides = [1, 1, 1]} : vector<5x5x32xbf16> to vector<1x4x32xbf16>
    %120 = vector.shape_cast %119 : vector<1x4x32xbf16> to vector<4x32xbf16>
    %121 = vector.extract_strided_slice %77 {offsets = [2, 0, 0], sizes = [1, 4, 32], strides = [1, 1, 1]} : vector<5x5x32xbf16> to vector<1x4x32xbf16>
    %122 = vector.shape_cast %121 : vector<1x4x32xbf16> to vector<4x32xbf16>
    %123 = vector.extract_strided_slice %81 {offsets = [2, 0, 0], sizes = [1, 4, 32], strides = [1, 1, 1]} : vector<5x5x32xbf16> to vector<1x4x32xbf16>
    %124 = vector.shape_cast %123 : vector<1x4x32xbf16> to vector<4x32xbf16>
    %125 = vector.extract_strided_slice %77 {offsets = [2, 1, 0], sizes = [1, 4, 32], strides = [1, 1, 1]} : vector<5x5x32xbf16> to vector<1x4x32xbf16>
    %126 = vector.shape_cast %125 : vector<1x4x32xbf16> to vector<4x32xbf16>
    %127 = tpu.concatenate %110, %112, %114, %116, %118, %120, %122, %124, %126 in 1 : vector<4x32xbf16>, vector<4x32xbf16>, vector<4x32xbf16>, vector<4x32xbf16>, vector<4x32xbf16>, vector<4x32xbf16>, vector<4x32xbf16>, vector<4x32xbf16>, vector<4x32xbf16> -> vector<4x288xbf16>
    %128 = vector.extract_strided_slice %77 {offsets = [2, 0, 0], sizes = [1, 4, 32], strides = [1, 1, 1]} : vector<5x5x32xbf16> to vector<1x4x32xbf16>
    %129 = vector.shape_cast %128 : vector<1x4x32xbf16> to vector<4x32xbf16>
    %130 = vector.extract_strided_slice %81 {offsets = [2, 0, 0], sizes = [1, 4, 32], strides = [1, 1, 1]} : vector<5x5x32xbf16> to vector<1x4x32xbf16>
    %131 = vector.shape_cast %130 : vector<1x4x32xbf16> to vector<4x32xbf16>
    %132 = vector.extract_strided_slice %77 {offsets = [2, 1, 0], sizes = [1, 4, 32], strides = [1, 1, 1]} : vector<5x5x32xbf16> to vector<1x4x32xbf16>
    %133 = vector.shape_cast %132 : vector<1x4x32xbf16> to vector<4x32xbf16>
    %134 = vector.extract_strided_slice %85 {offsets = [2, 0, 0], sizes = [1, 4, 32], strides = [1, 1, 1]} : vector<5x5x32xbf16> to vector<1x4x32xbf16>
    %135 = vector.shape_cast %134 : vector<1x4x32xbf16> to vector<4x32xbf16>
    %136 = vector.extract_strided_slice %89 {offsets = [2, 0, 0], sizes = [1, 4, 32], strides = [1, 1, 1]} : vector<5x5x32xbf16> to vector<1x4x32xbf16>
    %137 = vector.shape_cast %136 : vector<1x4x32xbf16> to vector<4x32xbf16>
    %138 = vector.extract_strided_slice %85 {offsets = [2, 1, 0], sizes = [1, 4, 32], strides = [1, 1, 1]} : vector<5x5x32xbf16> to vector<1x4x32xbf16>
    %139 = vector.shape_cast %138 : vector<1x4x32xbf16> to vector<4x32xbf16>
    %140 = vector.extract_strided_slice %77 {offsets = [3, 0, 0], sizes = [1, 4, 32], strides = [1, 1, 1]} : vector<5x5x32xbf16> to vector<1x4x32xbf16>
    %141 = vector.shape_cast %140 : vector<1x4x32xbf16> to vector<4x32xbf16>
    %142 = vector.extract_strided_slice %81 {offsets = [3, 0, 0], sizes = [1, 4, 32], strides = [1, 1, 1]} : vector<5x5x32xbf16> to vector<1x4x32xbf16>
    %143 = vector.shape_cast %142 : vector<1x4x32xbf16> to vector<4x32xbf16>
    %144 = vector.extract_strided_slice %77 {offsets = [3, 1, 0], sizes = [1, 4, 32], strides = [1, 1, 1]} : vector<5x5x32xbf16> to vector<1x4x32xbf16>
    %145 = vector.shape_cast %144 : vector<1x4x32xbf16> to vector<4x32xbf16>
    %146 = tpu.concatenate %129, %131, %133, %135, %137, %139, %141, %143, %145 in 1 : vector<4x32xbf16>, vector<4x32xbf16>, vector<4x32xbf16>, vector<4x32xbf16>, vector<4x32xbf16>, vector<4x32xbf16>, vector<4x32xbf16>, vector<4x32xbf16>, vector<4x32xbf16> -> vector<4x288xbf16>
    %147 = vector.extract_strided_slice %77 {offsets = [3, 0, 0], sizes = [1, 4, 32], strides = [1, 1, 1]} : vector<5x5x32xbf16> to vector<1x4x32xbf16>
    %148 = vector.shape_cast %147 : vector<1x4x32xbf16> to vector<4x32xbf16>
    %149 = vector.extract_strided_slice %81 {offsets = [3, 0, 0], sizes = [1, 4, 32], strides = [1, 1, 1]} : vector<5x5x32xbf16> to vector<1x4x32xbf16>
    %150 = vector.shape_cast %149 : vector<1x4x32xbf16> to vector<4x32xbf16>
    %151 = vector.extract_strided_slice %77 {offsets = [3, 1, 0], sizes = [1, 4, 32], strides = [1, 1, 1]} : vector<5x5x32xbf16> to vector<1x4x32xbf16>
    %152 = vector.shape_cast %151 : vector<1x4x32xbf16> to vector<4x32xbf16>
    %153 = vector.extract_strided_slice %85 {offsets = [3, 0, 0], sizes = [1, 4, 32], strides = [1, 1, 1]} : vector<5x5x32xbf16> to vector<1x4x32xbf16>
    %154 = vector.shape_cast %153 : vector<1x4x32xbf16> to vector<4x32xbf16>
    %155 = vector.extract_strided_slice %89 {offsets = [3, 0, 0], sizes = [1, 4, 32], strides = [1, 1, 1]} : vector<5x5x32xbf16> to vector<1x4x32xbf16>
    %156 = vector.shape_cast %155 : vector<1x4x32xbf16> to vector<4x32xbf16>
    %157 = vector.extract_strided_slice %85 {offsets = [3, 1, 0], sizes = [1, 4, 32], strides = [1, 1, 1]} : vector<5x5x32xbf16> to vector<1x4x32xbf16>
    %158 = vector.shape_cast %157 : vector<1x4x32xbf16> to vector<4x32xbf16>
    %159 = vector.extract_strided_slice %77 {offsets = [4, 0, 0], sizes = [1, 4, 32], strides = [1, 1, 1]} : vector<5x5x32xbf16> to vector<1x4x32xbf16>
    %160 = vector.shape_cast %159 : vector<1x4x32xbf16> to vector<4x32xbf16>
    %161 = vector.extract_strided_slice %81 {offsets = [4, 0, 0], sizes = [1, 4, 32], strides = [1, 1, 1]} : vector<5x5x32xbf16> to vector<1x4x32xbf16>
    %162 = vector.shape_cast %161 : vector<1x4x32xbf16> to vector<4x32xbf16>
    %163 = vector.extract_strided_slice %77 {offsets = [4, 1, 0], sizes = [1, 4, 32], strides = [1, 1, 1]} : vector<5x5x32xbf16> to vector<1x4x32xbf16>
    %164 = vector.shape_cast %163 : vector<1x4x32xbf16> to vector<4x32xbf16>
    %165 = tpu.concatenate %148, %150, %152, %154, %156, %158, %160, %162, %164 in 1 : vector<4x32xbf16>, vector<4x32xbf16>, vector<4x32xbf16>, vector<4x32xbf16>, vector<4x32xbf16>, vector<4x32xbf16>, vector<4x32xbf16>, vector<4x32xbf16>, vector<4x32xbf16> -> vector<4x288xbf16>
    %166 = tpu.concatenate %108, %127, %146, %165 in 0 : vector<4x288xbf16>, vector<4x288xbf16>, vector<4x288xbf16>, vector<4x288xbf16> -> vector<16x288xbf16>
    %c0_14 = arith.constant 0 : index
    %c0_15 = arith.constant 0 : index
    %167 = vector.load %arg4[%c0_14, %c0_15] : memref<288x64xbf16, #tpu.memory_space<vmem>>, vector<288x64xbf16>
    %cst_16 = arith.constant dense<0.000000e+00> : vector<16x64xf32>
    %168 = tpu.matmul %166, %167, %cst_16 {dimension_numbers = #tpu.dot_dimension_numbers<[1], [0], [0], [1], [0, 0, 1, 1], [], []>} : vector<16x288xbf16>, vector<288x64xbf16>, vector<16x64xf32> -> vector<16x64xf32>
    %c0_17 = arith.constant 0 : index
    %c0_18 = arith.constant 0 : index
    %169 = vector.load %arg5[%c0_17, %c0_18] : memref<3x64xf32, #tpu.memory_space<vmem>>, vector<1x64xf32>
    %170 = vector.broadcast %169 : vector<1x64xf32> to vector<16x64xf32>
    %171 = arith.addf %168, %170 : vector<16x64xf32>
    %c1_19 = arith.constant 1 : index
    %c0_20 = arith.constant 0 : index
    %172 = vector.load %arg5[%c1_19, %c0_20] : memref<3x64xf32, #tpu.memory_space<vmem>>, vector<1x64xf32>
    %c2_21 = arith.constant 2 : index
    %c0_22 = arith.constant 0 : index
    %173 = vector.load %arg5[%c2_21, %c0_22] : memref<3x64xf32, #tpu.memory_space<vmem>>, vector<1x64xf32>
    %cst_23 = arith.constant dense<0.000000e+00> : vector<64xf32>
    %174 = vector.multi_reduction <add>, %171, %cst_23 [0] : vector<16x64xf32> to vector<64xf32>
    %175 = vector.shape_cast %174 : vector<64xf32> to vector<1x64xf32>
    %cst_24 = arith.constant 1.600000e+01 : f32
    %176 = vector.broadcast %cst_24 : f32 to vector<1x64xf32>
    %177 = arith.divf %175, %176 : vector<1x64xf32>
    %178 = vector.broadcast %177 : vector<1x64xf32> to vector<16x64xf32>
    %179 = arith.subf %171, %178 : vector<16x64xf32>
    %180 = arith.mulf %179, %179 : vector<16x64xf32>
    %cst_25 = arith.constant dense<0.000000e+00> : vector<64xf32>
    %181 = vector.multi_reduction <add>, %180, %cst_25 [0] : vector<16x64xf32> to vector<64xf32>
    %182 = vector.shape_cast %181 : vector<64xf32> to vector<1x64xf32>
    %cst_26 = arith.constant 1.600000e+01 : f32
    %183 = vector.broadcast %cst_26 : f32 to vector<1x64xf32>
    %184 = arith.divf %182, %183 : vector<1x64xf32>
    %185 = vector.broadcast %177 : vector<1x64xf32> to vector<16x64xf32>
    %186 = arith.subf %171, %185 : vector<16x64xf32>
    %cst_27 = arith.constant 9.99999974E-6 : f32
    %187 = vector.broadcast %cst_27 : f32 to vector<1x64xf32>
    %188 = arith.addf %184, %187 : vector<1x64xf32>
    %189 = math.rsqrt %188 : vector<1x64xf32>
    %190 = vector.broadcast %189 : vector<1x64xf32> to vector<16x64xf32>
    %191 = arith.mulf %186, %190 : vector<16x64xf32>
    %192 = vector.broadcast %172 : vector<1x64xf32> to vector<16x64xf32>
    %193 = arith.mulf %191, %192 : vector<16x64xf32>
    %194 = vector.broadcast %173 : vector<1x64xf32> to vector<16x64xf32>
    %195 = arith.addf %193, %194 : vector<16x64xf32>
    %cst_28 = arith.constant 0.000000e+00 : f32
    %196 = vector.broadcast %cst_28 : f32 to vector<16x64xf32>
    %197 = arith.maximumf %195, %196 : vector<16x64xf32>
    %c0_29 = arith.constant 0 : index
    %c0_30 = arith.constant 0 : index
    %c0_31 = arith.constant 0 : index
    %198 = vector.load %arg6[%c0_29, %c0_30, %c0_31] : memref<6x576x64xbf16, #tpu.memory_space<vmem>>, vector<1x576x64xbf16>
    %199 = vector.shape_cast %198 : vector<1x576x64xbf16> to vector<576x64xbf16>
    %c0_32 = arith.constant 0 : index
    %c0_33 = arith.constant 0 : index
    %c0_34 = arith.constant 0 : index
    %200 = vector.load %arg7[%c0_32, %c0_33, %c0_34] : memref<6x3x64xf32, #tpu.memory_space<vmem>>, vector<1x3x64xf32>
    %201 = vector.shape_cast %200 : vector<1x3x64xf32> to vector<3x64xf32>
    %202 = arith.truncf %197 : vector<16x64xf32> to vector<16x64xbf16>
    %203 = vector.extract_strided_slice %202 {offsets = [0, 0], sizes = [4, 64], strides = [1, 1]} : vector<16x64xbf16> to vector<4x64xbf16>
    %204 = vector.extract_strided_slice %202 {offsets = [4, 0], sizes = [4, 64], strides = [1, 1]} : vector<16x64xbf16> to vector<4x64xbf16>
    %205 = vector.extract_strided_slice %202 {offsets = [8, 0], sizes = [4, 64], strides = [1, 1]} : vector<16x64xbf16> to vector<4x64xbf16>
    %206 = vector.extract_strided_slice %202 {offsets = [12, 0], sizes = [4, 64], strides = [1, 1]} : vector<16x64xbf16> to vector<4x64xbf16>
    %207 = vector.extract_strided_slice %203 {offsets = [1, 0], sizes = [1, 64], strides = [1, 1]} : vector<4x64xbf16> to vector<1x64xbf16>
    %208 = vector.extract_strided_slice %203 {offsets = [2, 0], sizes = [1, 64], strides = [1, 1]} : vector<4x64xbf16> to vector<1x64xbf16>
    %209 = tpu.concatenate %207, %203, %208 in 0 : vector<1x64xbf16>, vector<4x64xbf16>, vector<1x64xbf16> -> vector<6x64xbf16>
    %210 = vector.extract_strided_slice %204 {offsets = [1, 0], sizes = [1, 64], strides = [1, 1]} : vector<4x64xbf16> to vector<1x64xbf16>
    %211 = vector.extract_strided_slice %204 {offsets = [2, 0], sizes = [1, 64], strides = [1, 1]} : vector<4x64xbf16> to vector<1x64xbf16>
    %212 = tpu.concatenate %210, %204, %211 in 0 : vector<1x64xbf16>, vector<4x64xbf16>, vector<1x64xbf16> -> vector<6x64xbf16>
    %213 = vector.extract_strided_slice %205 {offsets = [1, 0], sizes = [1, 64], strides = [1, 1]} : vector<4x64xbf16> to vector<1x64xbf16>
    %214 = vector.extract_strided_slice %205 {offsets = [2, 0], sizes = [1, 64], strides = [1, 1]} : vector<4x64xbf16> to vector<1x64xbf16>
    %215 = tpu.concatenate %213, %205, %214 in 0 : vector<1x64xbf16>, vector<4x64xbf16>, vector<1x64xbf16> -> vector<6x64xbf16>
    %216 = vector.extract_strided_slice %206 {offsets = [1, 0], sizes = [1, 64], strides = [1, 1]} : vector<4x64xbf16> to vector<1x64xbf16>
    %217 = vector.extract_strided_slice %206 {offsets = [2, 0], sizes = [1, 64], strides = [1, 1]} : vector<4x64xbf16> to vector<1x64xbf16>
    %218 = tpu.concatenate %216, %206, %217 in 0 : vector<1x64xbf16>, vector<4x64xbf16>, vector<1x64xbf16> -> vector<6x64xbf16>
    %219 = vector.extract_strided_slice %212 {offsets = [0, 0], sizes = [4, 64], strides = [1, 1]} : vector<6x64xbf16> to vector<4x64xbf16>
    %220 = vector.extract_strided_slice %212 {offsets = [1, 0], sizes = [4, 64], strides = [1, 1]} : vector<6x64xbf16> to vector<4x64xbf16>
    %221 = vector.extract_strided_slice %212 {offsets = [2, 0], sizes = [4, 64], strides = [1, 1]} : vector<6x64xbf16> to vector<4x64xbf16>
    %222 = tpu.concatenate %219, %220, %221 in 1 : vector<4x64xbf16>, vector<4x64xbf16>, vector<4x64xbf16> -> vector<4x192xbf16>
    %223 = vector.extract_strided_slice %209 {offsets = [0, 0], sizes = [4, 64], strides = [1, 1]} : vector<6x64xbf16> to vector<4x64xbf16>
    %224 = vector.extract_strided_slice %209 {offsets = [1, 0], sizes = [4, 64], strides = [1, 1]} : vector<6x64xbf16> to vector<4x64xbf16>
    %225 = vector.extract_strided_slice %209 {offsets = [2, 0], sizes = [4, 64], strides = [1, 1]} : vector<6x64xbf16> to vector<4x64xbf16>
    %226 = tpu.concatenate %223, %224, %225 in 1 : vector<4x64xbf16>, vector<4x64xbf16>, vector<4x64xbf16> -> vector<4x192xbf16>
    %227 = vector.extract_strided_slice %212 {offsets = [0, 0], sizes = [4, 64], strides = [1, 1]} : vector<6x64xbf16> to vector<4x64xbf16>
    %228 = vector.extract_strided_slice %212 {offsets = [1, 0], sizes = [4, 64], strides = [1, 1]} : vector<6x64xbf16> to vector<4x64xbf16>
    %229 = vector.extract_strided_slice %212 {offsets = [2, 0], sizes = [4, 64], strides = [1, 1]} : vector<6x64xbf16> to vector<4x64xbf16>
    %230 = tpu.concatenate %227, %228, %229 in 1 : vector<4x64xbf16>, vector<4x64xbf16>, vector<4x64xbf16> -> vector<4x192xbf16>
    %231 = vector.extract_strided_slice %215 {offsets = [0, 0], sizes = [4, 64], strides = [1, 1]} : vector<6x64xbf16> to vector<4x64xbf16>
    %232 = vector.extract_strided_slice %215 {offsets = [1, 0], sizes = [4, 64], strides = [1, 1]} : vector<6x64xbf16> to vector<4x64xbf16>
    %233 = vector.extract_strided_slice %215 {offsets = [2, 0], sizes = [4, 64], strides = [1, 1]} : vector<6x64xbf16> to vector<4x64xbf16>
    %234 = tpu.concatenate %231, %232, %233 in 1 : vector<4x64xbf16>, vector<4x64xbf16>, vector<4x64xbf16> -> vector<4x192xbf16>
    %235 = vector.extract_strided_slice %218 {offsets = [0, 0], sizes = [4, 64], strides = [1, 1]} : vector<6x64xbf16> to vector<4x64xbf16>
    %236 = vector.extract_strided_slice %218 {offsets = [1, 0], sizes = [4, 64], strides = [1, 1]} : vector<6x64xbf16> to vector<4x64xbf16>
    %237 = vector.extract_strided_slice %218 {offsets = [2, 0], sizes = [4, 64], strides = [1, 1]} : vector<6x64xbf16> to vector<4x64xbf16>
    %238 = tpu.concatenate %235, %236, %237 in 1 : vector<4x64xbf16>, vector<4x64xbf16>, vector<4x64xbf16> -> vector<4x192xbf16>
    %239 = vector.extract_strided_slice %215 {offsets = [0, 0], sizes = [4, 64], strides = [1, 1]} : vector<6x64xbf16> to vector<4x64xbf16>
    %240 = vector.extract_strided_slice %215 {offsets = [1, 0], sizes = [4, 64], strides = [1, 1]} : vector<6x64xbf16> to vector<4x64xbf16>
    %241 = vector.extract_strided_slice %215 {offsets = [2, 0], sizes = [4, 64], strides = [1, 1]} : vector<6x64xbf16> to vector<4x64xbf16>
    %242 = tpu.concatenate %239, %240, %241 in 1 : vector<4x64xbf16>, vector<4x64xbf16>, vector<4x64xbf16> -> vector<4x192xbf16>
    %243 = tpu.concatenate %222, %226, %230 in 1 : vector<4x192xbf16>, vector<4x192xbf16>, vector<4x192xbf16> -> vector<4x576xbf16>
    %244 = tpu.concatenate %226, %230, %234 in 1 : vector<4x192xbf16>, vector<4x192xbf16>, vector<4x192xbf16> -> vector<4x576xbf16>
    %245 = tpu.concatenate %230, %234, %238 in 1 : vector<4x192xbf16>, vector<4x192xbf16>, vector<4x192xbf16> -> vector<4x576xbf16>
    %246 = tpu.concatenate %234, %238, %242 in 1 : vector<4x192xbf16>, vector<4x192xbf16>, vector<4x192xbf16> -> vector<4x576xbf16>
    %247 = tpu.concatenate %243, %244, %245, %246 in 0 : vector<4x576xbf16>, vector<4x576xbf16>, vector<4x576xbf16>, vector<4x576xbf16> -> vector<16x576xbf16>
    %cst_35 = arith.constant dense<0.000000e+00> : vector<16x64xf32>
    %248 = tpu.matmul %247, %199, %cst_35 {dimension_numbers = #tpu.dot_dimension_numbers<[1], [0], [0], [1], [0, 0, 1, 1], [], []>} : vector<16x576xbf16>, vector<576x64xbf16>, vector<16x64xf32> -> vector<16x64xf32>
    %249 = vector.extract_strided_slice %201 {offsets = [0, 0], sizes = [1, 64], strides = [1, 1]} : vector<3x64xf32> to vector<1x64xf32>
    %250 = vector.broadcast %249 : vector<1x64xf32> to vector<16x64xf32>
    %251 = arith.addf %248, %250 : vector<16x64xf32>
    %252 = vector.extract_strided_slice %201 {offsets = [1, 0], sizes = [1, 64], strides = [1, 1]} : vector<3x64xf32> to vector<1x64xf32>
    %253 = vector.extract_strided_slice %201 {offsets = [2, 0], sizes = [1, 64], strides = [1, 1]} : vector<3x64xf32> to vector<1x64xf32>
    %cst_36 = arith.constant dense<0.000000e+00> : vector<64xf32>
    %254 = vector.multi_reduction <add>, %251, %cst_36 [0] : vector<16x64xf32> to vector<64xf32>
    %255 = vector.shape_cast %254 : vector<64xf32> to vector<1x64xf32>
    %cst_37 = arith.constant 1.600000e+01 : f32
    %256 = vector.broadcast %cst_37 : f32 to vector<1x64xf32>
    %257 = arith.divf %255, %256 : vector<1x64xf32>
    %258 = vector.broadcast %257 : vector<1x64xf32> to vector<16x64xf32>
    %259 = arith.subf %251, %258 : vector<16x64xf32>
    %260 = arith.mulf %259, %259 : vector<16x64xf32>
    %cst_38 = arith.constant dense<0.000000e+00> : vector<64xf32>
    %261 = vector.multi_reduction <add>, %260, %cst_38 [0] : vector<16x64xf32> to vector<64xf32>
    %262 = vector.shape_cast %261 : vector<64xf32> to vector<1x64xf32>
    %cst_39 = arith.constant 1.600000e+01 : f32
    %263 = vector.broadcast %cst_39 : f32 to vector<1x64xf32>
    %264 = arith.divf %262, %263 : vector<1x64xf32>
    %265 = vector.broadcast %257 : vector<1x64xf32> to vector<16x64xf32>
    %266 = arith.subf %251, %265 : vector<16x64xf32>
    %cst_40 = arith.constant 9.99999974E-6 : f32
    %267 = vector.broadcast %cst_40 : f32 to vector<1x64xf32>
    %268 = arith.addf %264, %267 : vector<1x64xf32>
    %269 = math.rsqrt %268 : vector<1x64xf32>
    %270 = vector.broadcast %269 : vector<1x64xf32> to vector<16x64xf32>
    %271 = arith.mulf %266, %270 : vector<16x64xf32>
    %272 = vector.broadcast %252 : vector<1x64xf32> to vector<16x64xf32>
    %273 = arith.mulf %271, %272 : vector<16x64xf32>
    %274 = vector.broadcast %253 : vector<1x64xf32> to vector<16x64xf32>
    %275 = arith.addf %273, %274 : vector<16x64xf32>
    %cst_41 = arith.constant 0.000000e+00 : f32
    %276 = vector.broadcast %cst_41 : f32 to vector<16x64xf32>
    %277 = arith.maximumf %275, %276 : vector<16x64xf32>
    %c1_42 = arith.constant 1 : index
    %c0_43 = arith.constant 0 : index
    %c0_44 = arith.constant 0 : index
    %278 = vector.load %arg6[%c1_42, %c0_43, %c0_44] : memref<6x576x64xbf16, #tpu.memory_space<vmem>>, vector<1x576x64xbf16>
    %279 = vector.shape_cast %278 : vector<1x576x64xbf16> to vector<576x64xbf16>
    %c1_45 = arith.constant 1 : index
    %c0_46 = arith.constant 0 : index
    %c0_47 = arith.constant 0 : index
    %280 = vector.load %arg7[%c1_45, %c0_46, %c0_47] : memref<6x3x64xf32, #tpu.memory_space<vmem>>, vector<1x3x64xf32>
    %281 = vector.shape_cast %280 : vector<1x3x64xf32> to vector<3x64xf32>
    %282 = arith.truncf %277 : vector<16x64xf32> to vector<16x64xbf16>
    %283 = vector.extract_strided_slice %282 {offsets = [0, 0], sizes = [4, 64], strides = [1, 1]} : vector<16x64xbf16> to vector<4x64xbf16>
    %284 = vector.extract_strided_slice %282 {offsets = [4, 0], sizes = [4, 64], strides = [1, 1]} : vector<16x64xbf16> to vector<4x64xbf16>
    %285 = vector.extract_strided_slice %282 {offsets = [8, 0], sizes = [4, 64], strides = [1, 1]} : vector<16x64xbf16> to vector<4x64xbf16>
    %286 = vector.extract_strided_slice %282 {offsets = [12, 0], sizes = [4, 64], strides = [1, 1]} : vector<16x64xbf16> to vector<4x64xbf16>
    %287 = vector.extract_strided_slice %283 {offsets = [1, 0], sizes = [1, 64], strides = [1, 1]} : vector<4x64xbf16> to vector<1x64xbf16>
    %288 = vector.extract_strided_slice %283 {offsets = [2, 0], sizes = [1, 64], strides = [1, 1]} : vector<4x64xbf16> to vector<1x64xbf16>
    %289 = tpu.concatenate %287, %283, %288 in 0 : vector<1x64xbf16>, vector<4x64xbf16>, vector<1x64xbf16> -> vector<6x64xbf16>
    %290 = vector.extract_strided_slice %284 {offsets = [1, 0], sizes = [1, 64], strides = [1, 1]} : vector<4x64xbf16> to vector<1x64xbf16>
    %291 = vector.extract_strided_slice %284 {offsets = [2, 0], sizes = [1, 64], strides = [1, 1]} : vector<4x64xbf16> to vector<1x64xbf16>
    %292 = tpu.concatenate %290, %284, %291 in 0 : vector<1x64xbf16>, vector<4x64xbf16>, vector<1x64xbf16> -> vector<6x64xbf16>
    %293 = vector.extract_strided_slice %285 {offsets = [1, 0], sizes = [1, 64], strides = [1, 1]} : vector<4x64xbf16> to vector<1x64xbf16>
    %294 = vector.extract_strided_slice %285 {offsets = [2, 0], sizes = [1, 64], strides = [1, 1]} : vector<4x64xbf16> to vector<1x64xbf16>
    %295 = tpu.concatenate %293, %285, %294 in 0 : vector<1x64xbf16>, vector<4x64xbf16>, vector<1x64xbf16> -> vector<6x64xbf16>
    %296 = vector.extract_strided_slice %286 {offsets = [1, 0], sizes = [1, 64], strides = [1, 1]} : vector<4x64xbf16> to vector<1x64xbf16>
    %297 = vector.extract_strided_slice %286 {offsets = [2, 0], sizes = [1, 64], strides = [1, 1]} : vector<4x64xbf16> to vector<1x64xbf16>
    %298 = tpu.concatenate %296, %286, %297 in 0 : vector<1x64xbf16>, vector<4x64xbf16>, vector<1x64xbf16> -> vector<6x64xbf16>
    %299 = vector.extract_strided_slice %292 {offsets = [0, 0], sizes = [4, 64], strides = [1, 1]} : vector<6x64xbf16> to vector<4x64xbf16>
    %300 = vector.extract_strided_slice %292 {offsets = [1, 0], sizes = [4, 64], strides = [1, 1]} : vector<6x64xbf16> to vector<4x64xbf16>
    %301 = vector.extract_strided_slice %292 {offsets = [2, 0], sizes = [4, 64], strides = [1, 1]} : vector<6x64xbf16> to vector<4x64xbf16>
    %302 = tpu.concatenate %299, %300, %301 in 1 : vector<4x64xbf16>, vector<4x64xbf16>, vector<4x64xbf16> -> vector<4x192xbf16>
    %303 = vector.extract_strided_slice %289 {offsets = [0, 0], sizes = [4, 64], strides = [1, 1]} : vector<6x64xbf16> to vector<4x64xbf16>
    %304 = vector.extract_strided_slice %289 {offsets = [1, 0], sizes = [4, 64], strides = [1, 1]} : vector<6x64xbf16> to vector<4x64xbf16>
    %305 = vector.extract_strided_slice %289 {offsets = [2, 0], sizes = [4, 64], strides = [1, 1]} : vector<6x64xbf16> to vector<4x64xbf16>
    %306 = tpu.concatenate %303, %304, %305 in 1 : vector<4x64xbf16>, vector<4x64xbf16>, vector<4x64xbf16> -> vector<4x192xbf16>
    %307 = vector.extract_strided_slice %292 {offsets = [0, 0], sizes = [4, 64], strides = [1, 1]} : vector<6x64xbf16> to vector<4x64xbf16>
    %308 = vector.extract_strided_slice %292 {offsets = [1, 0], sizes = [4, 64], strides = [1, 1]} : vector<6x64xbf16> to vector<4x64xbf16>
    %309 = vector.extract_strided_slice %292 {offsets = [2, 0], sizes = [4, 64], strides = [1, 1]} : vector<6x64xbf16> to vector<4x64xbf16>
    %310 = tpu.concatenate %307, %308, %309 in 1 : vector<4x64xbf16>, vector<4x64xbf16>, vector<4x64xbf16> -> vector<4x192xbf16>
    %311 = vector.extract_strided_slice %295 {offsets = [0, 0], sizes = [4, 64], strides = [1, 1]} : vector<6x64xbf16> to vector<4x64xbf16>
    %312 = vector.extract_strided_slice %295 {offsets = [1, 0], sizes = [4, 64], strides = [1, 1]} : vector<6x64xbf16> to vector<4x64xbf16>
    %313 = vector.extract_strided_slice %295 {offsets = [2, 0], sizes = [4, 64], strides = [1, 1]} : vector<6x64xbf16> to vector<4x64xbf16>
    %314 = tpu.concatenate %311, %312, %313 in 1 : vector<4x64xbf16>, vector<4x64xbf16>, vector<4x64xbf16> -> vector<4x192xbf16>
    %315 = vector.extract_strided_slice %298 {offsets = [0, 0], sizes = [4, 64], strides = [1, 1]} : vector<6x64xbf16> to vector<4x64xbf16>
    %316 = vector.extract_strided_slice %298 {offsets = [1, 0], sizes = [4, 64], strides = [1, 1]} : vector<6x64xbf16> to vector<4x64xbf16>
    %317 = vector.extract_strided_slice %298 {offsets = [2, 0], sizes = [4, 64], strides = [1, 1]} : vector<6x64xbf16> to vector<4x64xbf16>
    %318 = tpu.concatenate %315, %316, %317 in 1 : vector<4x64xbf16>, vector<4x64xbf16>, vector<4x64xbf16> -> vector<4x192xbf16>
    %319 = vector.extract_strided_slice %295 {offsets = [0, 0], sizes = [4, 64], strides = [1, 1]} : vector<6x64xbf16> to vector<4x64xbf16>
    %320 = vector.extract_strided_slice %295 {offsets = [1, 0], sizes = [4, 64], strides = [1, 1]} : vector<6x64xbf16> to vector<4x64xbf16>
    %321 = vector.extract_strided_slice %295 {offsets = [2, 0], sizes = [4, 64], strides = [1, 1]} : vector<6x64xbf16> to vector<4x64xbf16>
    %322 = tpu.concatenate %319, %320, %321 in 1 : vector<4x64xbf16>, vector<4x64xbf16>, vector<4x64xbf16> -> vector<4x192xbf16>
    %323 = tpu.concatenate %302, %306, %310 in 1 : vector<4x192xbf16>, vector<4x192xbf16>, vector<4x192xbf16> -> vector<4x576xbf16>
    %324 = tpu.concatenate %306, %310, %314 in 1 : vector<4x192xbf16>, vector<4x192xbf16>, vector<4x192xbf16> -> vector<4x576xbf16>
    %325 = tpu.concatenate %310, %314, %318 in 1 : vector<4x192xbf16>, vector<4x192xbf16>, vector<4x192xbf16> -> vector<4x576xbf16>
    %326 = tpu.concatenate %314, %318, %322 in 1 : vector<4x192xbf16>, vector<4x192xbf16>, vector<4x192xbf16> -> vector<4x576xbf16>
    %327 = tpu.concatenate %323, %324, %325, %326 in 0 : vector<4x576xbf16>, vector<4x576xbf16>, vector<4x576xbf16>, vector<4x576xbf16> -> vector<16x576xbf16>
    %cst_48 = arith.constant dense<0.000000e+00> : vector<16x64xf32>
    %328 = tpu.matmul %327, %279, %cst_48 {dimension_numbers = #tpu.dot_dimension_numbers<[1], [0], [0], [1], [0, 0, 1, 1], [], []>} : vector<16x576xbf16>, vector<576x64xbf16>, vector<16x64xf32> -> vector<16x64xf32>
    %329 = vector.extract_strided_slice %281 {offsets = [0, 0], sizes = [1, 64], strides = [1, 1]} : vector<3x64xf32> to vector<1x64xf32>
    %330 = vector.broadcast %329 : vector<1x64xf32> to vector<16x64xf32>
    %331 = arith.addf %328, %330 : vector<16x64xf32>
    %332 = vector.extract_strided_slice %281 {offsets = [1, 0], sizes = [1, 64], strides = [1, 1]} : vector<3x64xf32> to vector<1x64xf32>
    %333 = vector.extract_strided_slice %281 {offsets = [2, 0], sizes = [1, 64], strides = [1, 1]} : vector<3x64xf32> to vector<1x64xf32>
    %cst_49 = arith.constant dense<0.000000e+00> : vector<64xf32>
    %334 = vector.multi_reduction <add>, %331, %cst_49 [0] : vector<16x64xf32> to vector<64xf32>
    %335 = vector.shape_cast %334 : vector<64xf32> to vector<1x64xf32>
    %cst_50 = arith.constant 1.600000e+01 : f32
    %336 = vector.broadcast %cst_50 : f32 to vector<1x64xf32>
    %337 = arith.divf %335, %336 : vector<1x64xf32>
    %338 = vector.broadcast %337 : vector<1x64xf32> to vector<16x64xf32>
    %339 = arith.subf %331, %338 : vector<16x64xf32>
    %340 = arith.mulf %339, %339 : vector<16x64xf32>
    %cst_51 = arith.constant dense<0.000000e+00> : vector<64xf32>
    %341 = vector.multi_reduction <add>, %340, %cst_51 [0] : vector<16x64xf32> to vector<64xf32>
    %342 = vector.shape_cast %341 : vector<64xf32> to vector<1x64xf32>
    %cst_52 = arith.constant 1.600000e+01 : f32
    %343 = vector.broadcast %cst_52 : f32 to vector<1x64xf32>
    %344 = arith.divf %342, %343 : vector<1x64xf32>
    %345 = vector.broadcast %337 : vector<1x64xf32> to vector<16x64xf32>
    %346 = arith.subf %331, %345 : vector<16x64xf32>
    %cst_53 = arith.constant 9.99999974E-6 : f32
    %347 = vector.broadcast %cst_53 : f32 to vector<1x64xf32>
    %348 = arith.addf %344, %347 : vector<1x64xf32>
    %349 = math.rsqrt %348 : vector<1x64xf32>
    %350 = vector.broadcast %349 : vector<1x64xf32> to vector<16x64xf32>
    %351 = arith.mulf %346, %350 : vector<16x64xf32>
    %352 = vector.broadcast %332 : vector<1x64xf32> to vector<16x64xf32>
    %353 = arith.mulf %351, %352 : vector<16x64xf32>
    %354 = vector.broadcast %333 : vector<1x64xf32> to vector<16x64xf32>
    %355 = arith.addf %353, %354 : vector<16x64xf32>
    %356 = arith.addf %355, %197 : vector<16x64xf32>
    %c2_54 = arith.constant 2 : index
    %c0_55 = arith.constant 0 : index
    %c0_56 = arith.constant 0 : index
    %357 = vector.load %arg6[%c2_54, %c0_55, %c0_56] : memref<6x576x64xbf16, #tpu.memory_space<vmem>>, vector<1x576x64xbf16>
    %358 = vector.shape_cast %357 : vector<1x576x64xbf16> to vector<576x64xbf16>
    %c2_57 = arith.constant 2 : index
    %c0_58 = arith.constant 0 : index
    %c0_59 = arith.constant 0 : index
    %359 = vector.load %arg7[%c2_57, %c0_58, %c0_59] : memref<6x3x64xf32, #tpu.memory_space<vmem>>, vector<1x3x64xf32>
    %360 = vector.shape_cast %359 : vector<1x3x64xf32> to vector<3x64xf32>
    %361 = arith.truncf %356 : vector<16x64xf32> to vector<16x64xbf16>
    %362 = vector.extract_strided_slice %361 {offsets = [0, 0], sizes = [4, 64], strides = [1, 1]} : vector<16x64xbf16> to vector<4x64xbf16>
    %363 = vector.extract_strided_slice %361 {offsets = [4, 0], sizes = [4, 64], strides = [1, 1]} : vector<16x64xbf16> to vector<4x64xbf16>
    %364 = vector.extract_strided_slice %361 {offsets = [8, 0], sizes = [4, 64], strides = [1, 1]} : vector<16x64xbf16> to vector<4x64xbf16>
    %365 = vector.extract_strided_slice %361 {offsets = [12, 0], sizes = [4, 64], strides = [1, 1]} : vector<16x64xbf16> to vector<4x64xbf16>
    %366 = vector.extract_strided_slice %362 {offsets = [1, 0], sizes = [1, 64], strides = [1, 1]} : vector<4x64xbf16> to vector<1x64xbf16>
    %367 = vector.extract_strided_slice %362 {offsets = [2, 0], sizes = [1, 64], strides = [1, 1]} : vector<4x64xbf16> to vector<1x64xbf16>
    %368 = tpu.concatenate %366, %362, %367 in 0 : vector<1x64xbf16>, vector<4x64xbf16>, vector<1x64xbf16> -> vector<6x64xbf16>
    %369 = vector.extract_strided_slice %363 {offsets = [1, 0], sizes = [1, 64], strides = [1, 1]} : vector<4x64xbf16> to vector<1x64xbf16>
    %370 = vector.extract_strided_slice %363 {offsets = [2, 0], sizes = [1, 64], strides = [1, 1]} : vector<4x64xbf16> to vector<1x64xbf16>
    %371 = tpu.concatenate %369, %363, %370 in 0 : vector<1x64xbf16>, vector<4x64xbf16>, vector<1x64xbf16> -> vector<6x64xbf16>
    %372 = vector.extract_strided_slice %364 {offsets = [1, 0], sizes = [1, 64], strides = [1, 1]} : vector<4x64xbf16> to vector<1x64xbf16>
    %373 = vector.extract_strided_slice %364 {offsets = [2, 0], sizes = [1, 64], strides = [1, 1]} : vector<4x64xbf16> to vector<1x64xbf16>
    %374 = tpu.concatenate %372, %364, %373 in 0 : vector<1x64xbf16>, vector<4x64xbf16>, vector<1x64xbf16> -> vector<6x64xbf16>
    %375 = vector.extract_strided_slice %365 {offsets = [1, 0], sizes = [1, 64], strides = [1, 1]} : vector<4x64xbf16> to vector<1x64xbf16>
    %376 = vector.extract_strided_slice %365 {offsets = [2, 0], sizes = [1, 64], strides = [1, 1]} : vector<4x64xbf16> to vector<1x64xbf16>
    %377 = tpu.concatenate %375, %365, %376 in 0 : vector<1x64xbf16>, vector<4x64xbf16>, vector<1x64xbf16> -> vector<6x64xbf16>
    %378 = vector.extract_strided_slice %371 {offsets = [0, 0], sizes = [4, 64], strides = [1, 1]} : vector<6x64xbf16> to vector<4x64xbf16>
    %379 = vector.extract_strided_slice %371 {offsets = [1, 0], sizes = [4, 64], strides = [1, 1]} : vector<6x64xbf16> to vector<4x64xbf16>
    %380 = vector.extract_strided_slice %371 {offsets = [2, 0], sizes = [4, 64], strides = [1, 1]} : vector<6x64xbf16> to vector<4x64xbf16>
    %381 = tpu.concatenate %378, %379, %380 in 1 : vector<4x64xbf16>, vector<4x64xbf16>, vector<4x64xbf16> -> vector<4x192xbf16>
    %382 = vector.extract_strided_slice %368 {offsets = [0, 0], sizes = [4, 64], strides = [1, 1]} : vector<6x64xbf16> to vector<4x64xbf16>
    %383 = vector.extract_strided_slice %368 {offsets = [1, 0], sizes = [4, 64], strides = [1, 1]} : vector<6x64xbf16> to vector<4x64xbf16>
    %384 = vector.extract_strided_slice %368 {offsets = [2, 0], sizes = [4, 64], strides = [1, 1]} : vector<6x64xbf16> to vector<4x64xbf16>
    %385 = tpu.concatenate %382, %383, %384 in 1 : vector<4x64xbf16>, vector<4x64xbf16>, vector<4x64xbf16> -> vector<4x192xbf16>
    %386 = vector.extract_strided_slice %371 {offsets = [0, 0], sizes = [4, 64], strides = [1, 1]} : vector<6x64xbf16> to vector<4x64xbf16>
    %387 = vector.extract_strided_slice %371 {offsets = [1, 0], sizes = [4, 64], strides = [1, 1]} : vector<6x64xbf16> to vector<4x64xbf16>
    %388 = vector.extract_strided_slice %371 {offsets = [2, 0], sizes = [4, 64], strides = [1, 1]} : vector<6x64xbf16> to vector<4x64xbf16>
    %389 = tpu.concatenate %386, %387, %388 in 1 : vector<4x64xbf16>, vector<4x64xbf16>, vector<4x64xbf16> -> vector<4x192xbf16>
    %390 = vector.extract_strided_slice %374 {offsets = [0, 0], sizes = [4, 64], strides = [1, 1]} : vector<6x64xbf16> to vector<4x64xbf16>
    %391 = vector.extract_strided_slice %374 {offsets = [1, 0], sizes = [4, 64], strides = [1, 1]} : vector<6x64xbf16> to vector<4x64xbf16>
    %392 = vector.extract_strided_slice %374 {offsets = [2, 0], sizes = [4, 64], strides = [1, 1]} : vector<6x64xbf16> to vector<4x64xbf16>
    %393 = tpu.concatenate %390, %391, %392 in 1 : vector<4x64xbf16>, vector<4x64xbf16>, vector<4x64xbf16> -> vector<4x192xbf16>
    %394 = vector.extract_strided_slice %377 {offsets = [0, 0], sizes = [4, 64], strides = [1, 1]} : vector<6x64xbf16> to vector<4x64xbf16>
    %395 = vector.extract_strided_slice %377 {offsets = [1, 0], sizes = [4, 64], strides = [1, 1]} : vector<6x64xbf16> to vector<4x64xbf16>
    %396 = vector.extract_strided_slice %377 {offsets = [2, 0], sizes = [4, 64], strides = [1, 1]} : vector<6x64xbf16> to vector<4x64xbf16>
    %397 = tpu.concatenate %394, %395, %396 in 1 : vector<4x64xbf16>, vector<4x64xbf16>, vector<4x64xbf16> -> vector<4x192xbf16>
    %398 = vector.extract_strided_slice %374 {offsets = [0, 0], sizes = [4, 64], strides = [1, 1]} : vector<6x64xbf16> to vector<4x64xbf16>
    %399 = vector.extract_strided_slice %374 {offsets = [1, 0], sizes = [4, 64], strides = [1, 1]} : vector<6x64xbf16> to vector<4x64xbf16>
    %400 = vector.extract_strided_slice %374 {offsets = [2, 0], sizes = [4, 64], strides = [1, 1]} : vector<6x64xbf16> to vector<4x64xbf16>
    %401 = tpu.concatenate %398, %399, %400 in 1 : vector<4x64xbf16>, vector<4x64xbf16>, vector<4x64xbf16> -> vector<4x192xbf16>
    %402 = tpu.concatenate %381, %385, %389 in 1 : vector<4x192xbf16>, vector<4x192xbf16>, vector<4x192xbf16> -> vector<4x576xbf16>
    %403 = tpu.concatenate %385, %389, %393 in 1 : vector<4x192xbf16>, vector<4x192xbf16>, vector<4x192xbf16> -> vector<4x576xbf16>
    %404 = tpu.concatenate %389, %393, %397 in 1 : vector<4x192xbf16>, vector<4x192xbf16>, vector<4x192xbf16> -> vector<4x576xbf16>
    %405 = tpu.concatenate %393, %397, %401 in 1 : vector<4x192xbf16>, vector<4x192xbf16>, vector<4x192xbf16> -> vector<4x576xbf16>
    %406 = tpu.concatenate %402, %403, %404, %405 in 0 : vector<4x576xbf16>, vector<4x576xbf16>, vector<4x576xbf16>, vector<4x576xbf16> -> vector<16x576xbf16>
    %cst_60 = arith.constant dense<0.000000e+00> : vector<16x64xf32>
    %407 = tpu.matmul %406, %358, %cst_60 {dimension_numbers = #tpu.dot_dimension_numbers<[1], [0], [0], [1], [0, 0, 1, 1], [], []>} : vector<16x576xbf16>, vector<576x64xbf16>, vector<16x64xf32> -> vector<16x64xf32>
    %408 = vector.extract_strided_slice %360 {offsets = [0, 0], sizes = [1, 64], strides = [1, 1]} : vector<3x64xf32> to vector<1x64xf32>
    %409 = vector.broadcast %408 : vector<1x64xf32> to vector<16x64xf32>
    %410 = arith.addf %407, %409 : vector<16x64xf32>
    %411 = vector.extract_strided_slice %360 {offsets = [1, 0], sizes = [1, 64], strides = [1, 1]} : vector<3x64xf32> to vector<1x64xf32>
    %412 = vector.extract_strided_slice %360 {offsets = [2, 0], sizes = [1, 64], strides = [1, 1]} : vector<3x64xf32> to vector<1x64xf32>
    %cst_61 = arith.constant dense<0.000000e+00> : vector<64xf32>
    %413 = vector.multi_reduction <add>, %410, %cst_61 [0] : vector<16x64xf32> to vector<64xf32>
    %414 = vector.shape_cast %413 : vector<64xf32> to vector<1x64xf32>
    %cst_62 = arith.constant 1.600000e+01 : f32
    %415 = vector.broadcast %cst_62 : f32 to vector<1x64xf32>
    %416 = arith.divf %414, %415 : vector<1x64xf32>
    %417 = vector.broadcast %416 : vector<1x64xf32> to vector<16x64xf32>
    %418 = arith.subf %410, %417 : vector<16x64xf32>
    %419 = arith.mulf %418, %418 : vector<16x64xf32>
    %cst_63 = arith.constant dense<0.000000e+00> : vector<64xf32>
    %420 = vector.multi_reduction <add>, %419, %cst_63 [0] : vector<16x64xf32> to vector<64xf32>
    %421 = vector.shape_cast %420 : vector<64xf32> to vector<1x64xf32>
    %cst_64 = arith.constant 1.600000e+01 : f32
    %422 = vector.broadcast %cst_64 : f32 to vector<1x64xf32>
    %423 = arith.divf %421, %422 : vector<1x64xf32>
    %424 = vector.broadcast %416 : vector<1x64xf32> to vector<16x64xf32>
    %425 = arith.subf %410, %424 : vector<16x64xf32>
    %cst_65 = arith.constant 9.99999974E-6 : f32
    %426 = vector.broadcast %cst_65 : f32 to vector<1x64xf32>
    %427 = arith.addf %423, %426 : vector<1x64xf32>
    %428 = math.rsqrt %427 : vector<1x64xf32>
    %429 = vector.broadcast %428 : vector<1x64xf32> to vector<16x64xf32>
    %430 = arith.mulf %425, %429 : vector<16x64xf32>
    %431 = vector.broadcast %411 : vector<1x64xf32> to vector<16x64xf32>
    %432 = arith.mulf %430, %431 : vector<16x64xf32>
    %433 = vector.broadcast %412 : vector<1x64xf32> to vector<16x64xf32>
    %434 = arith.addf %432, %433 : vector<16x64xf32>
    %cst_66 = arith.constant 0.000000e+00 : f32
    %435 = vector.broadcast %cst_66 : f32 to vector<16x64xf32>
    %436 = arith.maximumf %434, %435 : vector<16x64xf32>
    %c3 = arith.constant 3 : index
    %c0_67 = arith.constant 0 : index
    %c0_68 = arith.constant 0 : index
    %437 = vector.load %arg6[%c3, %c0_67, %c0_68] : memref<6x576x64xbf16, #tpu.memory_space<vmem>>, vector<1x576x64xbf16>
    %438 = vector.shape_cast %437 : vector<1x576x64xbf16> to vector<576x64xbf16>
    %c3_69 = arith.constant 3 : index
    %c0_70 = arith.constant 0 : index
    %c0_71 = arith.constant 0 : index
    %439 = vector.load %arg7[%c3_69, %c0_70, %c0_71] : memref<6x3x64xf32, #tpu.memory_space<vmem>>, vector<1x3x64xf32>
    %440 = vector.shape_cast %439 : vector<1x3x64xf32> to vector<3x64xf32>
    %441 = arith.truncf %436 : vector<16x64xf32> to vector<16x64xbf16>
    %442 = vector.extract_strided_slice %441 {offsets = [0, 0], sizes = [4, 64], strides = [1, 1]} : vector<16x64xbf16> to vector<4x64xbf16>
    %443 = vector.extract_strided_slice %441 {offsets = [4, 0], sizes = [4, 64], strides = [1, 1]} : vector<16x64xbf16> to vector<4x64xbf16>
    %444 = vector.extract_strided_slice %441 {offsets = [8, 0], sizes = [4, 64], strides = [1, 1]} : vector<16x64xbf16> to vector<4x64xbf16>
    %445 = vector.extract_strided_slice %441 {offsets = [12, 0], sizes = [4, 64], strides = [1, 1]} : vector<16x64xbf16> to vector<4x64xbf16>
    %446 = vector.extract_strided_slice %442 {offsets = [1, 0], sizes = [1, 64], strides = [1, 1]} : vector<4x64xbf16> to vector<1x64xbf16>
    %447 = vector.extract_strided_slice %442 {offsets = [2, 0], sizes = [1, 64], strides = [1, 1]} : vector<4x64xbf16> to vector<1x64xbf16>
    %448 = tpu.concatenate %446, %442, %447 in 0 : vector<1x64xbf16>, vector<4x64xbf16>, vector<1x64xbf16> -> vector<6x64xbf16>
    %449 = vector.extract_strided_slice %443 {offsets = [1, 0], sizes = [1, 64], strides = [1, 1]} : vector<4x64xbf16> to vector<1x64xbf16>
    %450 = vector.extract_strided_slice %443 {offsets = [2, 0], sizes = [1, 64], strides = [1, 1]} : vector<4x64xbf16> to vector<1x64xbf16>
    %451 = tpu.concatenate %449, %443, %450 in 0 : vector<1x64xbf16>, vector<4x64xbf16>, vector<1x64xbf16> -> vector<6x64xbf16>
    %452 = vector.extract_strided_slice %444 {offsets = [1, 0], sizes = [1, 64], strides = [1, 1]} : vector<4x64xbf16> to vector<1x64xbf16>
    %453 = vector.extract_strided_slice %444 {offsets = [2, 0], sizes = [1, 64], strides = [1, 1]} : vector<4x64xbf16> to vector<1x64xbf16>
    %454 = tpu.concatenate %452, %444, %453 in 0 : vector<1x64xbf16>, vector<4x64xbf16>, vector<1x64xbf16> -> vector<6x64xbf16>
    %455 = vector.extract_strided_slice %445 {offsets = [1, 0], sizes = [1, 64], strides = [1, 1]} : vector<4x64xbf16> to vector<1x64xbf16>
    %456 = vector.extract_strided_slice %445 {offsets = [2, 0], sizes = [1, 64], strides = [1, 1]} : vector<4x64xbf16> to vector<1x64xbf16>
    %457 = tpu.concatenate %455, %445, %456 in 0 : vector<1x64xbf16>, vector<4x64xbf16>, vector<1x64xbf16> -> vector<6x64xbf16>
    %458 = vector.extract_strided_slice %451 {offsets = [0, 0], sizes = [4, 64], strides = [1, 1]} : vector<6x64xbf16> to vector<4x64xbf16>
    %459 = vector.extract_strided_slice %451 {offsets = [1, 0], sizes = [4, 64], strides = [1, 1]} : vector<6x64xbf16> to vector<4x64xbf16>
    %460 = vector.extract_strided_slice %451 {offsets = [2, 0], sizes = [4, 64], strides = [1, 1]} : vector<6x64xbf16> to vector<4x64xbf16>
    %461 = tpu.concatenate %458, %459, %460 in 1 : vector<4x64xbf16>, vector<4x64xbf16>, vector<4x64xbf16> -> vector<4x192xbf16>
    %462 = vector.extract_strided_slice %448 {offsets = [0, 0], sizes = [4, 64], strides = [1, 1]} : vector<6x64xbf16> to vector<4x64xbf16>
    %463 = vector.extract_strided_slice %448 {offsets = [1, 0], sizes = [4, 64], strides = [1, 1]} : vector<6x64xbf16> to vector<4x64xbf16>
    %464 = vector.extract_strided_slice %448 {offsets = [2, 0], sizes = [4, 64], strides = [1, 1]} : vector<6x64xbf16> to vector<4x64xbf16>
    %465 = tpu.concatenate %462, %463, %464 in 1 : vector<4x64xbf16>, vector<4x64xbf16>, vector<4x64xbf16> -> vector<4x192xbf16>
    %466 = vector.extract_strided_slice %451 {offsets = [0, 0], sizes = [4, 64], strides = [1, 1]} : vector<6x64xbf16> to vector<4x64xbf16>
    %467 = vector.extract_strided_slice %451 {offsets = [1, 0], sizes = [4, 64], strides = [1, 1]} : vector<6x64xbf16> to vector<4x64xbf16>
    %468 = vector.extract_strided_slice %451 {offsets = [2, 0], sizes = [4, 64], strides = [1, 1]} : vector<6x64xbf16> to vector<4x64xbf16>
    %469 = tpu.concatenate %466, %467, %468 in 1 : vector<4x64xbf16>, vector<4x64xbf16>, vector<4x64xbf16> -> vector<4x192xbf16>
    %470 = vector.extract_strided_slice %454 {offsets = [0, 0], sizes = [4, 64], strides = [1, 1]} : vector<6x64xbf16> to vector<4x64xbf16>
    %471 = vector.extract_strided_slice %454 {offsets = [1, 0], sizes = [4, 64], strides = [1, 1]} : vector<6x64xbf16> to vector<4x64xbf16>
    %472 = vector.extract_strided_slice %454 {offsets = [2, 0], sizes = [4, 64], strides = [1, 1]} : vector<6x64xbf16> to vector<4x64xbf16>
    %473 = tpu.concatenate %470, %471, %472 in 1 : vector<4x64xbf16>, vector<4x64xbf16>, vector<4x64xbf16> -> vector<4x192xbf16>
    %474 = vector.extract_strided_slice %457 {offsets = [0, 0], sizes = [4, 64], strides = [1, 1]} : vector<6x64xbf16> to vector<4x64xbf16>
    %475 = vector.extract_strided_slice %457 {offsets = [1, 0], sizes = [4, 64], strides = [1, 1]} : vector<6x64xbf16> to vector<4x64xbf16>
    %476 = vector.extract_strided_slice %457 {offsets = [2, 0], sizes = [4, 64], strides = [1, 1]} : vector<6x64xbf16> to vector<4x64xbf16>
    %477 = tpu.concatenate %474, %475, %476 in 1 : vector<4x64xbf16>, vector<4x64xbf16>, vector<4x64xbf16> -> vector<4x192xbf16>
    %478 = vector.extract_strided_slice %454 {offsets = [0, 0], sizes = [4, 64], strides = [1, 1]} : vector<6x64xbf16> to vector<4x64xbf16>
    %479 = vector.extract_strided_slice %454 {offsets = [1, 0], sizes = [4, 64], strides = [1, 1]} : vector<6x64xbf16> to vector<4x64xbf16>
    %480 = vector.extract_strided_slice %454 {offsets = [2, 0], sizes = [4, 64], strides = [1, 1]} : vector<6x64xbf16> to vector<4x64xbf16>
    %481 = tpu.concatenate %478, %479, %480 in 1 : vector<4x64xbf16>, vector<4x64xbf16>, vector<4x64xbf16> -> vector<4x192xbf16>
    %482 = tpu.concatenate %461, %465, %469 in 1 : vector<4x192xbf16>, vector<4x192xbf16>, vector<4x192xbf16> -> vector<4x576xbf16>
    %483 = tpu.concatenate %465, %469, %473 in 1 : vector<4x192xbf16>, vector<4x192xbf16>, vector<4x192xbf16> -> vector<4x576xbf16>
    %484 = tpu.concatenate %469, %473, %477 in 1 : vector<4x192xbf16>, vector<4x192xbf16>, vector<4x192xbf16> -> vector<4x576xbf16>
    %485 = tpu.concatenate %473, %477, %481 in 1 : vector<4x192xbf16>, vector<4x192xbf16>, vector<4x192xbf16> -> vector<4x576xbf16>
    %486 = tpu.concatenate %482, %483, %484, %485 in 0 : vector<4x576xbf16>, vector<4x576xbf16>, vector<4x576xbf16>, vector<4x576xbf16> -> vector<16x576xbf16>
    %cst_72 = arith.constant dense<0.000000e+00> : vector<16x64xf32>
    %487 = tpu.matmul %486, %438, %cst_72 {dimension_numbers = #tpu.dot_dimension_numbers<[1], [0], [0], [1], [0, 0, 1, 1], [], []>} : vector<16x576xbf16>, vector<576x64xbf16>, vector<16x64xf32> -> vector<16x64xf32>
    %488 = vector.extract_strided_slice %440 {offsets = [0, 0], sizes = [1, 64], strides = [1, 1]} : vector<3x64xf32> to vector<1x64xf32>
    %489 = vector.broadcast %488 : vector<1x64xf32> to vector<16x64xf32>
    %490 = arith.addf %487, %489 : vector<16x64xf32>
    %491 = vector.extract_strided_slice %440 {offsets = [1, 0], sizes = [1, 64], strides = [1, 1]} : vector<3x64xf32> to vector<1x64xf32>
    %492 = vector.extract_strided_slice %440 {offsets = [2, 0], sizes = [1, 64], strides = [1, 1]} : vector<3x64xf32> to vector<1x64xf32>
    %cst_73 = arith.constant dense<0.000000e+00> : vector<64xf32>
    %493 = vector.multi_reduction <add>, %490, %cst_73 [0] : vector<16x64xf32> to vector<64xf32>
    %494 = vector.shape_cast %493 : vector<64xf32> to vector<1x64xf32>
    %cst_74 = arith.constant 1.600000e+01 : f32
    %495 = vector.broadcast %cst_74 : f32 to vector<1x64xf32>
    %496 = arith.divf %494, %495 : vector<1x64xf32>
    %497 = vector.broadcast %496 : vector<1x64xf32> to vector<16x64xf32>
    %498 = arith.subf %490, %497 : vector<16x64xf32>
    %499 = arith.mulf %498, %498 : vector<16x64xf32>
    %cst_75 = arith.constant dense<0.000000e+00> : vector<64xf32>
    %500 = vector.multi_reduction <add>, %499, %cst_75 [0] : vector<16x64xf32> to vector<64xf32>
    %501 = vector.shape_cast %500 : vector<64xf32> to vector<1x64xf32>
    %cst_76 = arith.constant 1.600000e+01 : f32
    %502 = vector.broadcast %cst_76 : f32 to vector<1x64xf32>
    %503 = arith.divf %501, %502 : vector<1x64xf32>
    %504 = vector.broadcast %496 : vector<1x64xf32> to vector<16x64xf32>
    %505 = arith.subf %490, %504 : vector<16x64xf32>
    %cst_77 = arith.constant 9.99999974E-6 : f32
    %506 = vector.broadcast %cst_77 : f32 to vector<1x64xf32>
    %507 = arith.addf %503, %506 : vector<1x64xf32>
    %508 = math.rsqrt %507 : vector<1x64xf32>
    %509 = vector.broadcast %508 : vector<1x64xf32> to vector<16x64xf32>
    %510 = arith.mulf %505, %509 : vector<16x64xf32>
    %511 = vector.broadcast %491 : vector<1x64xf32> to vector<16x64xf32>
    %512 = arith.mulf %510, %511 : vector<16x64xf32>
    %513 = vector.broadcast %492 : vector<1x64xf32> to vector<16x64xf32>
    %514 = arith.addf %512, %513 : vector<16x64xf32>
    %515 = arith.addf %514, %356 : vector<16x64xf32>
    %c4 = arith.constant 4 : index
    %c0_78 = arith.constant 0 : index
    %c0_79 = arith.constant 0 : index
    %516 = vector.load %arg6[%c4, %c0_78, %c0_79] : memref<6x576x64xbf16, #tpu.memory_space<vmem>>, vector<1x576x64xbf16>
    %517 = vector.shape_cast %516 : vector<1x576x64xbf16> to vector<576x64xbf16>
    %c4_80 = arith.constant 4 : index
    %c0_81 = arith.constant 0 : index
    %c0_82 = arith.constant 0 : index
    %518 = vector.load %arg7[%c4_80, %c0_81, %c0_82] : memref<6x3x64xf32, #tpu.memory_space<vmem>>, vector<1x3x64xf32>
    %519 = vector.shape_cast %518 : vector<1x3x64xf32> to vector<3x64xf32>
    %520 = arith.truncf %515 : vector<16x64xf32> to vector<16x64xbf16>
    %521 = vector.extract_strided_slice %520 {offsets = [0, 0], sizes = [4, 64], strides = [1, 1]} : vector<16x64xbf16> to vector<4x64xbf16>
    %522 = vector.extract_strided_slice %520 {offsets = [4, 0], sizes = [4, 64], strides = [1, 1]} : vector<16x64xbf16> to vector<4x64xbf16>
    %523 = vector.extract_strided_slice %520 {offsets = [8, 0], sizes = [4, 64], strides = [1, 1]} : vector<16x64xbf16> to vector<4x64xbf16>
    %524 = vector.extract_strided_slice %520 {offsets = [12, 0], sizes = [4, 64], strides = [1, 1]} : vector<16x64xbf16> to vector<4x64xbf16>
    %525 = vector.extract_strided_slice %521 {offsets = [1, 0], sizes = [1, 64], strides = [1, 1]} : vector<4x64xbf16> to vector<1x64xbf16>
    %526 = vector.extract_strided_slice %521 {offsets = [2, 0], sizes = [1, 64], strides = [1, 1]} : vector<4x64xbf16> to vector<1x64xbf16>
    %527 = tpu.concatenate %525, %521, %526 in 0 : vector<1x64xbf16>, vector<4x64xbf16>, vector<1x64xbf16> -> vector<6x64xbf16>
    %528 = vector.extract_strided_slice %522 {offsets = [1, 0], sizes = [1, 64], strides = [1, 1]} : vector<4x64xbf16> to vector<1x64xbf16>
    %529 = vector.extract_strided_slice %522 {offsets = [2, 0], sizes = [1, 64], strides = [1, 1]} : vector<4x64xbf16> to vector<1x64xbf16>
    %530 = tpu.concatenate %528, %522, %529 in 0 : vector<1x64xbf16>, vector<4x64xbf16>, vector<1x64xbf16> -> vector<6x64xbf16>
    %531 = vector.extract_strided_slice %523 {offsets = [1, 0], sizes = [1, 64], strides = [1, 1]} : vector<4x64xbf16> to vector<1x64xbf16>
    %532 = vector.extract_strided_slice %523 {offsets = [2, 0], sizes = [1, 64], strides = [1, 1]} : vector<4x64xbf16> to vector<1x64xbf16>
    %533 = tpu.concatenate %531, %523, %532 in 0 : vector<1x64xbf16>, vector<4x64xbf16>, vector<1x64xbf16> -> vector<6x64xbf16>
    %534 = vector.extract_strided_slice %524 {offsets = [1, 0], sizes = [1, 64], strides = [1, 1]} : vector<4x64xbf16> to vector<1x64xbf16>
    %535 = vector.extract_strided_slice %524 {offsets = [2, 0], sizes = [1, 64], strides = [1, 1]} : vector<4x64xbf16> to vector<1x64xbf16>
    %536 = tpu.concatenate %534, %524, %535 in 0 : vector<1x64xbf16>, vector<4x64xbf16>, vector<1x64xbf16> -> vector<6x64xbf16>
    %537 = vector.extract_strided_slice %530 {offsets = [0, 0], sizes = [4, 64], strides = [1, 1]} : vector<6x64xbf16> to vector<4x64xbf16>
    %538 = vector.extract_strided_slice %530 {offsets = [1, 0], sizes = [4, 64], strides = [1, 1]} : vector<6x64xbf16> to vector<4x64xbf16>
    %539 = vector.extract_strided_slice %530 {offsets = [2, 0], sizes = [4, 64], strides = [1, 1]} : vector<6x64xbf16> to vector<4x64xbf16>
    %540 = tpu.concatenate %537, %538, %539 in 1 : vector<4x64xbf16>, vector<4x64xbf16>, vector<4x64xbf16> -> vector<4x192xbf16>
    %541 = vector.extract_strided_slice %527 {offsets = [0, 0], sizes = [4, 64], strides = [1, 1]} : vector<6x64xbf16> to vector<4x64xbf16>
    %542 = vector.extract_strided_slice %527 {offsets = [1, 0], sizes = [4, 64], strides = [1, 1]} : vector<6x64xbf16> to vector<4x64xbf16>
    %543 = vector.extract_strided_slice %527 {offsets = [2, 0], sizes = [4, 64], strides = [1, 1]} : vector<6x64xbf16> to vector<4x64xbf16>
    %544 = tpu.concatenate %541, %542, %543 in 1 : vector<4x64xbf16>, vector<4x64xbf16>, vector<4x64xbf16> -> vector<4x192xbf16>
    %545 = vector.extract_strided_slice %530 {offsets = [0, 0], sizes = [4, 64], strides = [1, 1]} : vector<6x64xbf16> to vector<4x64xbf16>
    %546 = vector.extract_strided_slice %530 {offsets = [1, 0], sizes = [4, 64], strides = [1, 1]} : vector<6x64xbf16> to vector<4x64xbf16>
    %547 = vector.extract_strided_slice %530 {offsets = [2, 0], sizes = [4, 64], strides = [1, 1]} : vector<6x64xbf16> to vector<4x64xbf16>
    %548 = tpu.concatenate %545, %546, %547 in 1 : vector<4x64xbf16>, vector<4x64xbf16>, vector<4x64xbf16> -> vector<4x192xbf16>
    %549 = vector.extract_strided_slice %533 {offsets = [0, 0], sizes = [4, 64], strides = [1, 1]} : vector<6x64xbf16> to vector<4x64xbf16>
    %550 = vector.extract_strided_slice %533 {offsets = [1, 0], sizes = [4, 64], strides = [1, 1]} : vector<6x64xbf16> to vector<4x64xbf16>
    %551 = vector.extract_strided_slice %533 {offsets = [2, 0], sizes = [4, 64], strides = [1, 1]} : vector<6x64xbf16> to vector<4x64xbf16>
    %552 = tpu.concatenate %549, %550, %551 in 1 : vector<4x64xbf16>, vector<4x64xbf16>, vector<4x64xbf16> -> vector<4x192xbf16>
    %553 = vector.extract_strided_slice %536 {offsets = [0, 0], sizes = [4, 64], strides = [1, 1]} : vector<6x64xbf16> to vector<4x64xbf16>
    %554 = vector.extract_strided_slice %536 {offsets = [1, 0], sizes = [4, 64], strides = [1, 1]} : vector<6x64xbf16> to vector<4x64xbf16>
    %555 = vector.extract_strided_slice %536 {offsets = [2, 0], sizes = [4, 64], strides = [1, 1]} : vector<6x64xbf16> to vector<4x64xbf16>
    %556 = tpu.concatenate %553, %554, %555 in 1 : vector<4x64xbf16>, vector<4x64xbf16>, vector<4x64xbf16> -> vector<4x192xbf16>
    %557 = vector.extract_strided_slice %533 {offsets = [0, 0], sizes = [4, 64], strides = [1, 1]} : vector<6x64xbf16> to vector<4x64xbf16>
    %558 = vector.extract_strided_slice %533 {offsets = [1, 0], sizes = [4, 64], strides = [1, 1]} : vector<6x64xbf16> to vector<4x64xbf16>
    %559 = vector.extract_strided_slice %533 {offsets = [2, 0], sizes = [4, 64], strides = [1, 1]} : vector<6x64xbf16> to vector<4x64xbf16>
    %560 = tpu.concatenate %557, %558, %559 in 1 : vector<4x64xbf16>, vector<4x64xbf16>, vector<4x64xbf16> -> vector<4x192xbf16>
    %561 = tpu.concatenate %540, %544, %548 in 1 : vector<4x192xbf16>, vector<4x192xbf16>, vector<4x192xbf16> -> vector<4x576xbf16>
    %562 = tpu.concatenate %544, %548, %552 in 1 : vector<4x192xbf16>, vector<4x192xbf16>, vector<4x192xbf16> -> vector<4x576xbf16>
    %563 = tpu.concatenate %548, %552, %556 in 1 : vector<4x192xbf16>, vector<4x192xbf16>, vector<4x192xbf16> -> vector<4x576xbf16>
    %564 = tpu.concatenate %552, %556, %560 in 1 : vector<4x192xbf16>, vector<4x192xbf16>, vector<4x192xbf16> -> vector<4x576xbf16>
    %565 = tpu.concatenate %561, %562, %563, %564 in 0 : vector<4x576xbf16>, vector<4x576xbf16>, vector<4x576xbf16>, vector<4x576xbf16> -> vector<16x576xbf16>
    %cst_83 = arith.constant dense<0.000000e+00> : vector<16x64xf32>
    %566 = tpu.matmul %565, %517, %cst_83 {dimension_numbers = #tpu.dot_dimension_numbers<[1], [0], [0], [1], [0, 0, 1, 1], [], []>} : vector<16x576xbf16>, vector<576x64xbf16>, vector<16x64xf32> -> vector<16x64xf32>
    %567 = vector.extract_strided_slice %519 {offsets = [0, 0], sizes = [1, 64], strides = [1, 1]} : vector<3x64xf32> to vector<1x64xf32>
    %568 = vector.broadcast %567 : vector<1x64xf32> to vector<16x64xf32>
    %569 = arith.addf %566, %568 : vector<16x64xf32>
    %570 = vector.extract_strided_slice %519 {offsets = [1, 0], sizes = [1, 64], strides = [1, 1]} : vector<3x64xf32> to vector<1x64xf32>
    %571 = vector.extract_strided_slice %519 {offsets = [2, 0], sizes = [1, 64], strides = [1, 1]} : vector<3x64xf32> to vector<1x64xf32>
    %cst_84 = arith.constant dense<0.000000e+00> : vector<64xf32>
    %572 = vector.multi_reduction <add>, %569, %cst_84 [0] : vector<16x64xf32> to vector<64xf32>
    %573 = vector.shape_cast %572 : vector<64xf32> to vector<1x64xf32>
    %cst_85 = arith.constant 1.600000e+01 : f32
    %574 = vector.broadcast %cst_85 : f32 to vector<1x64xf32>
    %575 = arith.divf %573, %574 : vector<1x64xf32>
    %576 = vector.broadcast %575 : vector<1x64xf32> to vector<16x64xf32>
    %577 = arith.subf %569, %576 : vector<16x64xf32>
    %578 = arith.mulf %577, %577 : vector<16x64xf32>
    %cst_86 = arith.constant dense<0.000000e+00> : vector<64xf32>
    %579 = vector.multi_reduction <add>, %578, %cst_86 [0] : vector<16x64xf32> to vector<64xf32>
    %580 = vector.shape_cast %579 : vector<64xf32> to vector<1x64xf32>
    %cst_87 = arith.constant 1.600000e+01 : f32
    %581 = vector.broadcast %cst_87 : f32 to vector<1x64xf32>
    %582 = arith.divf %580, %581 : vector<1x64xf32>
    %583 = vector.broadcast %575 : vector<1x64xf32> to vector<16x64xf32>
    %584 = arith.subf %569, %583 : vector<16x64xf32>
    %cst_88 = arith.constant 9.99999974E-6 : f32
    %585 = vector.broadcast %cst_88 : f32 to vector<1x64xf32>
    %586 = arith.addf %582, %585 : vector<1x64xf32>
    %587 = math.rsqrt %586 : vector<1x64xf32>
    %588 = vector.broadcast %587 : vector<1x64xf32> to vector<16x64xf32>
    %589 = arith.mulf %584, %588 : vector<16x64xf32>
    %590 = vector.broadcast %570 : vector<1x64xf32> to vector<16x64xf32>
    %591 = arith.mulf %589, %590 : vector<16x64xf32>
    %592 = vector.broadcast %571 : vector<1x64xf32> to vector<16x64xf32>
    %593 = arith.addf %591, %592 : vector<16x64xf32>
    %cst_89 = arith.constant 0.000000e+00 : f32
    %594 = vector.broadcast %cst_89 : f32 to vector<16x64xf32>
    %595 = arith.maximumf %593, %594 : vector<16x64xf32>
    %c5 = arith.constant 5 : index
    %c0_90 = arith.constant 0 : index
    %c0_91 = arith.constant 0 : index
    %596 = vector.load %arg6[%c5, %c0_90, %c0_91] : memref<6x576x64xbf16, #tpu.memory_space<vmem>>, vector<1x576x64xbf16>
    %597 = vector.shape_cast %596 : vector<1x576x64xbf16> to vector<576x64xbf16>
    %c5_92 = arith.constant 5 : index
    %c0_93 = arith.constant 0 : index
    %c0_94 = arith.constant 0 : index
    %598 = vector.load %arg7[%c5_92, %c0_93, %c0_94] : memref<6x3x64xf32, #tpu.memory_space<vmem>>, vector<1x3x64xf32>
    %599 = vector.shape_cast %598 : vector<1x3x64xf32> to vector<3x64xf32>
    %600 = arith.truncf %595 : vector<16x64xf32> to vector<16x64xbf16>
    %601 = vector.extract_strided_slice %600 {offsets = [0, 0], sizes = [4, 64], strides = [1, 1]} : vector<16x64xbf16> to vector<4x64xbf16>
    %602 = vector.extract_strided_slice %600 {offsets = [4, 0], sizes = [4, 64], strides = [1, 1]} : vector<16x64xbf16> to vector<4x64xbf16>
    %603 = vector.extract_strided_slice %600 {offsets = [8, 0], sizes = [4, 64], strides = [1, 1]} : vector<16x64xbf16> to vector<4x64xbf16>
    %604 = vector.extract_strided_slice %600 {offsets = [12, 0], sizes = [4, 64], strides = [1, 1]} : vector<16x64xbf16> to vector<4x64xbf16>
    %605 = vector.extract_strided_slice %601 {offsets = [1, 0], sizes = [1, 64], strides = [1, 1]} : vector<4x64xbf16> to vector<1x64xbf16>
    %606 = vector.extract_strided_slice %601 {offsets = [2, 0], sizes = [1, 64], strides = [1, 1]} : vector<4x64xbf16> to vector<1x64xbf16>
    %607 = tpu.concatenate %605, %601, %606 in 0 : vector<1x64xbf16>, vector<4x64xbf16>, vector<1x64xbf16> -> vector<6x64xbf16>
    %608 = vector.extract_strided_slice %602 {offsets = [1, 0], sizes = [1, 64], strides = [1, 1]} : vector<4x64xbf16> to vector<1x64xbf16>
    %609 = vector.extract_strided_slice %602 {offsets = [2, 0], sizes = [1, 64], strides = [1, 1]} : vector<4x64xbf16> to vector<1x64xbf16>
    %610 = tpu.concatenate %608, %602, %609 in 0 : vector<1x64xbf16>, vector<4x64xbf16>, vector<1x64xbf16> -> vector<6x64xbf16>
    %611 = vector.extract_strided_slice %603 {offsets = [1, 0], sizes = [1, 64], strides = [1, 1]} : vector<4x64xbf16> to vector<1x64xbf16>
    %612 = vector.extract_strided_slice %603 {offsets = [2, 0], sizes = [1, 64], strides = [1, 1]} : vector<4x64xbf16> to vector<1x64xbf16>
    %613 = tpu.concatenate %611, %603, %612 in 0 : vector<1x64xbf16>, vector<4x64xbf16>, vector<1x64xbf16> -> vector<6x64xbf16>
    %614 = vector.extract_strided_slice %604 {offsets = [1, 0], sizes = [1, 64], strides = [1, 1]} : vector<4x64xbf16> to vector<1x64xbf16>
    %615 = vector.extract_strided_slice %604 {offsets = [2, 0], sizes = [1, 64], strides = [1, 1]} : vector<4x64xbf16> to vector<1x64xbf16>
    %616 = tpu.concatenate %614, %604, %615 in 0 : vector<1x64xbf16>, vector<4x64xbf16>, vector<1x64xbf16> -> vector<6x64xbf16>
    %617 = vector.extract_strided_slice %610 {offsets = [0, 0], sizes = [4, 64], strides = [1, 1]} : vector<6x64xbf16> to vector<4x64xbf16>
    %618 = vector.extract_strided_slice %610 {offsets = [1, 0], sizes = [4, 64], strides = [1, 1]} : vector<6x64xbf16> to vector<4x64xbf16>
    %619 = vector.extract_strided_slice %610 {offsets = [2, 0], sizes = [4, 64], strides = [1, 1]} : vector<6x64xbf16> to vector<4x64xbf16>
    %620 = tpu.concatenate %617, %618, %619 in 1 : vector<4x64xbf16>, vector<4x64xbf16>, vector<4x64xbf16> -> vector<4x192xbf16>
    %621 = vector.extract_strided_slice %607 {offsets = [0, 0], sizes = [4, 64], strides = [1, 1]} : vector<6x64xbf16> to vector<4x64xbf16>
    %622 = vector.extract_strided_slice %607 {offsets = [1, 0], sizes = [4, 64], strides = [1, 1]} : vector<6x64xbf16> to vector<4x64xbf16>
    %623 = vector.extract_strided_slice %607 {offsets = [2, 0], sizes = [4, 64], strides = [1, 1]} : vector<6x64xbf16> to vector<4x64xbf16>
    %624 = tpu.concatenate %621, %622, %623 in 1 : vector<4x64xbf16>, vector<4x64xbf16>, vector<4x64xbf16> -> vector<4x192xbf16>
    %625 = vector.extract_strided_slice %610 {offsets = [0, 0], sizes = [4, 64], strides = [1, 1]} : vector<6x64xbf16> to vector<4x64xbf16>
    %626 = vector.extract_strided_slice %610 {offsets = [1, 0], sizes = [4, 64], strides = [1, 1]} : vector<6x64xbf16> to vector<4x64xbf16>
    %627 = vector.extract_strided_slice %610 {offsets = [2, 0], sizes = [4, 64], strides = [1, 1]} : vector<6x64xbf16> to vector<4x64xbf16>
    %628 = tpu.concatenate %625, %626, %627 in 1 : vector<4x64xbf16>, vector<4x64xbf16>, vector<4x64xbf16> -> vector<4x192xbf16>
    %629 = vector.extract_strided_slice %613 {offsets = [0, 0], sizes = [4, 64], strides = [1, 1]} : vector<6x64xbf16> to vector<4x64xbf16>
    %630 = vector.extract_strided_slice %613 {offsets = [1, 0], sizes = [4, 64], strides = [1, 1]} : vector<6x64xbf16> to vector<4x64xbf16>
    %631 = vector.extract_strided_slice %613 {offsets = [2, 0], sizes = [4, 64], strides = [1, 1]} : vector<6x64xbf16> to vector<4x64xbf16>
    %632 = tpu.concatenate %629, %630, %631 in 1 : vector<4x64xbf16>, vector<4x64xbf16>, vector<4x64xbf16> -> vector<4x192xbf16>
    %633 = vector.extract_strided_slice %616 {offsets = [0, 0], sizes = [4, 64], strides = [1, 1]} : vector<6x64xbf16> to vector<4x64xbf16>
    %634 = vector.extract_strided_slice %616 {offsets = [1, 0], sizes = [4, 64], strides = [1, 1]} : vector<6x64xbf16> to vector<4x64xbf16>
    %635 = vector.extract_strided_slice %616 {offsets = [2, 0], sizes = [4, 64], strides = [1, 1]} : vector<6x64xbf16> to vector<4x64xbf16>
    %636 = tpu.concatenate %633, %634, %635 in 1 : vector<4x64xbf16>, vector<4x64xbf16>, vector<4x64xbf16> -> vector<4x192xbf16>
    %637 = vector.extract_strided_slice %613 {offsets = [0, 0], sizes = [4, 64], strides = [1, 1]} : vector<6x64xbf16> to vector<4x64xbf16>
    %638 = vector.extract_strided_slice %613 {offsets = [1, 0], sizes = [4, 64], strides = [1, 1]} : vector<6x64xbf16> to vector<4x64xbf16>
    %639 = vector.extract_strided_slice %613 {offsets = [2, 0], sizes = [4, 64], strides = [1, 1]} : vector<6x64xbf16> to vector<4x64xbf16>
    %640 = tpu.concatenate %637, %638, %639 in 1 : vector<4x64xbf16>, vector<4x64xbf16>, vector<4x64xbf16> -> vector<4x192xbf16>
    %641 = tpu.concatenate %620, %624, %628 in 1 : vector<4x192xbf16>, vector<4x192xbf16>, vector<4x192xbf16> -> vector<4x576xbf16>
    %642 = tpu.concatenate %624, %628, %632 in 1 : vector<4x192xbf16>, vector<4x192xbf16>, vector<4x192xbf16> -> vector<4x576xbf16>
    %643 = tpu.concatenate %628, %632, %636 in 1 : vector<4x192xbf16>, vector<4x192xbf16>, vector<4x192xbf16> -> vector<4x576xbf16>
    %644 = tpu.concatenate %632, %636, %640 in 1 : vector<4x192xbf16>, vector<4x192xbf16>, vector<4x192xbf16> -> vector<4x576xbf16>
    %645 = tpu.concatenate %641, %642, %643, %644 in 0 : vector<4x576xbf16>, vector<4x576xbf16>, vector<4x576xbf16>, vector<4x576xbf16> -> vector<16x576xbf16>
    %cst_95 = arith.constant dense<0.000000e+00> : vector<16x64xf32>
    %646 = tpu.matmul %645, %597, %cst_95 {dimension_numbers = #tpu.dot_dimension_numbers<[1], [0], [0], [1], [0, 0, 1, 1], [], []>} : vector<16x576xbf16>, vector<576x64xbf16>, vector<16x64xf32> -> vector<16x64xf32>
    %647 = vector.extract_strided_slice %599 {offsets = [0, 0], sizes = [1, 64], strides = [1, 1]} : vector<3x64xf32> to vector<1x64xf32>
    %648 = vector.broadcast %647 : vector<1x64xf32> to vector<16x64xf32>
    %649 = arith.addf %646, %648 : vector<16x64xf32>
    %650 = vector.extract_strided_slice %599 {offsets = [1, 0], sizes = [1, 64], strides = [1, 1]} : vector<3x64xf32> to vector<1x64xf32>
    %651 = vector.extract_strided_slice %599 {offsets = [2, 0], sizes = [1, 64], strides = [1, 1]} : vector<3x64xf32> to vector<1x64xf32>
    %cst_96 = arith.constant dense<0.000000e+00> : vector<64xf32>
    %652 = vector.multi_reduction <add>, %649, %cst_96 [0] : vector<16x64xf32> to vector<64xf32>
    %653 = vector.shape_cast %652 : vector<64xf32> to vector<1x64xf32>
    %cst_97 = arith.constant 1.600000e+01 : f32
    %654 = vector.broadcast %cst_97 : f32 to vector<1x64xf32>
    %655 = arith.divf %653, %654 : vector<1x64xf32>
    %656 = vector.broadcast %655 : vector<1x64xf32> to vector<16x64xf32>
    %657 = arith.subf %649, %656 : vector<16x64xf32>
    %658 = arith.mulf %657, %657 : vector<16x64xf32>
    %cst_98 = arith.constant dense<0.000000e+00> : vector<64xf32>
    %659 = vector.multi_reduction <add>, %658, %cst_98 [0] : vector<16x64xf32> to vector<64xf32>
    %660 = vector.shape_cast %659 : vector<64xf32> to vector<1x64xf32>
    %cst_99 = arith.constant 1.600000e+01 : f32
    %661 = vector.broadcast %cst_99 : f32 to vector<1x64xf32>
    %662 = arith.divf %660, %661 : vector<1x64xf32>
    %663 = vector.broadcast %655 : vector<1x64xf32> to vector<16x64xf32>
    %664 = arith.subf %649, %663 : vector<16x64xf32>
    %cst_100 = arith.constant 9.99999974E-6 : f32
    %665 = vector.broadcast %cst_100 : f32 to vector<1x64xf32>
    %666 = arith.addf %662, %665 : vector<1x64xf32>
    %667 = math.rsqrt %666 : vector<1x64xf32>
    %668 = vector.broadcast %667 : vector<1x64xf32> to vector<16x64xf32>
    %669 = arith.mulf %664, %668 : vector<16x64xf32>
    %670 = vector.broadcast %650 : vector<1x64xf32> to vector<16x64xf32>
    %671 = arith.mulf %669, %670 : vector<16x64xf32>
    %672 = vector.broadcast %651 : vector<1x64xf32> to vector<16x64xf32>
    %673 = arith.addf %671, %672 : vector<16x64xf32>
    %674 = arith.addf %673, %515 : vector<16x64xf32>
    %c0_101 = arith.constant 0 : index
    %c0_102 = arith.constant 0 : index
    %c0_103 = arith.constant 0 : index
    %675 = vector.load %arg8[%c0_101, %c0_102, %c0_103] : memref<1x16x64xf32, #tpu.memory_space<vmem>>, vector<1x16x64xf32>
    %676 = vector.shape_cast %675 : vector<1x16x64xf32> to vector<16x64xf32>
    %677 = vector.shape_cast %674 : vector<16x64xf32> to vector<1x16x64xf32>
    tpu.vector_store %arg8[%c0_101, %c0_102, %c0_103], %677 {strides = array<i32>} : memref<1x16x64xf32, #tpu.memory_space<vmem>>, vector<1x16x64xf32>,
    return
  }
  func.func @transform_0(%arg0: i32) -> (i32, i32, i32) {
    %c0_i32 = arith.constant 0 : i32
    %c0_i32_0 = arith.constant 0 : i32
    %c0_i32_1 = arith.constant 0 : i32
    return %arg0, %c0_i32, %c0_i32_0 : i32, i32, i32
  }
  func.func @transform_1(%arg0: i32) -> (i32, i32) {
    %c0_i32 = arith.constant 0 : i32
    %c0_i32_0 = arith.constant 0 : i32
    %c0_i32_1 = arith.constant 0 : i32
    return %c0_i32, %c0_i32_0 : i32, i32
  }
  func.func @transform_2(%arg0: i32) -> (i32, i32) {
    %c0_i32 = arith.constant 0 : i32
    %c0_i32_0 = arith.constant 0 : i32
    %c0_i32_1 = arith.constant 0 : i32
    return %c0_i32, %c0_i32_0 : i32, i32
  }
  func.func @transform_3(%arg0: i32) -> (i32, i32) {
    %c0_i32 = arith.constant 0 : i32
    %c0_i32_0 = arith.constant 0 : i32
    %c0_i32_1 = arith.constant 0 : i32
    return %c0_i32, %c0_i32_0 : i32, i32
  }
  func.func @transform_4(%arg0: i32) -> (i32, i32) {
    %c0_i32 = arith.constant 0 : i32
    %c0_i32_0 = arith.constant 0 : i32
    %c0_i32_1 = arith.constant 0 : i32
    return %c0_i32, %c0_i32_0 : i32, i32
  }
  func.func @transform_5(%arg0: i32) -> (i32, i32, i32) {
    %c0_i32 = arith.constant 0 : i32
    %c0_i32_0 = arith.constant 0 : i32
    %c0_i32_1 = arith.constant 0 : i32
    %c0_i32_2 = arith.constant 0 : i32
    return %c0_i32, %c0_i32_0, %c0_i32_1 : i32, i32, i32
  }
  func.func @transform_6(%arg0: i32) -> (i32, i32, i32) {
    %c0_i32 = arith.constant 0 : i32
    %c0_i32_0 = arith.constant 0 : i32
    %c0_i32_1 = arith.constant 0 : i32
    %c0_i32_2 = arith.constant 0 : i32
    return %c0_i32, %c0_i32_0, %c0_i32_1 : i32, i32, i32
  }
  func.func @transform_7(%arg0: i32) -> (i32, i32, i32) {
    %c0_i32 = arith.constant 0 : i32
    %c0_i32_0 = arith.constant 0 : i32
    %c0_i32_1 = arith.constant 0 : i32
    return %arg0, %c0_i32, %c0_i32_0 : i32, i32, i32
  }
}

</mosaic_0001>

<llo_original>
// kernel: l_block_forward.2
$region0: #{l_block_forward.2}
  #allocation0 [shape = 'u32[]', space=smem, size = 0x4, offset = 0x4, fixed_abs, tag = 'smem constant byte address 0x4 - core index']
  #allocation1 [shape = 'u32[72,128]{1,0:T(1,128)}', space=vmem, size = 0x9000, scoped, tag = 'internal scratch']
  %s0 = inlined_call_operand.vmem [shape: bf16[2,256,81], index: 0, kind: input, shape index: {}]
  %s1 = inlined_call_operand.vmem [shape: bf16[81,16], index: 1, kind: input, shape index: {}]
  %s2 = inlined_call_operand.vmem [shape: f32[3,16], index: 2, kind: input, shape index: {}]
  %s3 = inlined_call_operand.vmem [shape: bf16[2,256,16], index: 3, kind: output, shape index: {}]
  %s4 = sld [smem:[#allocation0]]
  $region45: #{l_block_forward.2} parent=0
    _
  %s6 = ssub.s32 1, %s4
  %s7 = scalar_select 0, %s6, %s4
  loop: start=0, step=1, limit=4
  $region2: #{l_block_forward.2} parent=0 // loop_pre_header
    _
  $region3: #{l_block_forward.2} parent=0 // loop_header
    %s9 = sphi 0, %s13
    %p10 = scmp.ge.s32.totalorder %s9, 4
    %s19 = sphi 0, %s21
    %s22 = sphi 0, %s19
    %s23 = sphi 0, %s22
    %s39 = sphi 0, %s23
    %s43 = sphi 0, %s43
    %s45 = sphi 0, %s43
    %s46 = sphi 0, %s45
    %s60 = sphi 0, %s46
    %s64 = sphi 0, %s64
    %s66 = sphi 0, %s64
    %s67 = sphi 0, %s66
    %s81 = sphi 0, %s67
    %s87 = sphi 0, %s89
    %s90 = sphi 0, %s87
    %s91 = sphi 0, %s90
    %s107 = sphi 0, %s91
  $region4: #{l_block_forward.2} parent=0 // loop_header_branch
    %12 = sbr.rel (%p10) target = $region8
  $region5: #{l_block_forward.2} parent=0 // loop_body
    %s14 = ssub.s32 %s9, 1
    %s15 = ssub.s32 %s9, 2
    %s16 = sadd.s32 %s9, 1
    %s17 = ssub.s32 %s9, %s16
    %p18 = scmp.eq.s32.totalorder %s17, 0
    %s20 = sadd.s32 %s19, 1
    %s21 = scalar_select %p18, %s19, %s20
    %p24 = pneg %p18
    %p25 = scmp.eq.s32.totalorder %s9, 1
    %p26 = por %p24, %p25
    %p27 = scmp.ne.s32.totalorder %s19, %s22
    %p28 = scmp.eq.s32.totalorder %s9, 0
    %p29 = por %p27, %p28
    %p30 = scmp.ne.s32.totalorder %s19, %s22
    %p31 = scmp.eq.s32.totalorder %s14, 1
    %p32 = por %p30, %p31
    %p33 = scmp.ne.s32.totalorder %s22, %s23
    %p34 = scmp.eq.s32.totalorder %s14, 0
    %p35 = por %p33, %p34
    %p36 = scmp.ne.s32.totalorder %s22, %s23
    %p37 = scmp.eq.s32.totalorder %s15, 1
    %p38 = por %p36, %p37
    %p40 = scmp.ne.s32.totalorder %s23, %s39
    %p41 = scmp.eq.s32.totalorder %s15, 0
    %p42 = por %p40, %p41
    %s44 = sadd.s32 %s43, 1
    %p47 = scmp.eq.s32.totalorder %s9, 1
    %p48 = scmp.ne.s32.totalorder %s43, %s45
    %p49 = scmp.eq.s32.totalorder %s9, 0
    %p50 = por %p48, %p49
    %p51 = scmp.ne.s32.totalorder %s43, %s45
    %p52 = scmp.eq.s32.totalorder %s14, 1
    %p53 = por %p51, %p52
    %p54 = scmp.ne.s32.totalorder %s45, %s46
    %p55 = scmp.eq.s32.totalorder %s14, 0
    %p56 = por %p54, %p55
    %p57 = scmp.ne.s32.totalorder %s45, %s46
    %p58 = scmp.eq.s32.totalorder %s15, 1
    %p59 = por %p57, %p58
    %p61 = scmp.ne.s32.totalorder %s46, %s60
    %p62 = scmp.eq.s32.totalorder %s15, 0
    %p63 = por %p61, %p62
    %s65 = sadd.s32 %s64, 1
    %p68 = scmp.eq.s32.totalorder %s9, 1
    %p69 = scmp.ne.s32.totalorder %s64, %s66
    %p70 = scmp.eq.s32.totalorder %s9, 0
    %p71 = por %p69, %p70
    %p72 = scmp.ne.s32.totalorder %s64, %s66
    %p73 = scmp.eq.s32.totalorder %s14, 1
    %p74 = por %p72, %p73
    %p75 = scmp.ne.s32.totalorder %s66, %s67
    %p76 = scmp.eq.s32.totalorder %s14, 0
    %p77 = por %p75, %p76
    %p78 = scmp.ne.s32.totalorder %s66, %s67
    %p79 = scmp.eq.s32.totalorder %s15, 1
    %p80 = por %p78, %p79
    %p82 = scmp.ne.s32.totalorder %s67, %s81
    %p83 = scmp.eq.s32.totalorder %s15, 0
    %p84 = por %p82, %p83
    %s85 = ssub.s32 %s9, %s16
    %p86 = scmp.eq.s32.totalorder %s85, 0
    %s88 = sadd.s32 %s87, 1
    %s89 = scalar_select %p86, %s87, %s88
    %p92 = pneg %p86
    %p93 = scmp.eq.s32.totalorder %s9, 1
    %p94 = por %p92, %p93
    %p95 = scmp.ne.s32.totalorder %s87, %s90
    %p96 = scmp.eq.s32.totalorder %s9, 0
    %p97 = por %p95, %p96
    %p98 = scmp.ne.s32.totalorder %s87, %s90
    %p99 = scmp.eq.s32.totalorder %s14, 1
    %p100 = por %p98, %p99
    %p101 = scmp.ne.s32.totalorder %s90, %s91
    %p102 = scmp.eq.s32.totalorder %s14, 0
    %p103 = por %p101, %p102
    %p104 = scmp.ne.s32.totalorder %s90, %s91
    %p105 = scmp.eq.s32.totalorder %s15, 1
    %p106 = por %p104, %p105
    %p108 = scmp.ne.s32.totalorder %s91, %s107
    %p109 = scmp.eq.s32.totalorder %s15, 0
    %p110 = por %p108, %p109
    %p111 = scmp.le.s32.totalorder 1, %s9
    %p112 = scmp.lt.s32.totalorder %s9, 3
    %p113 = pnand %p111, %p112
    %p114 = pneg %p113
    // Predicated region
    $region9: #{l_block_forward.2} parent=5 // pred_check
      _
    $region10: #{l_block_forward.2} parent=5 // pred_check_branch
      %116 = sbr.rel (%p113) target = $region12
    $region11: #{l_block_forward.2} parent=5 // pred_region
      %s117 = ssub.s32 %s9, 1
      // Predicated region
      $region13: #{l_block_forward.2} parent=11 // pred_check
        %p118 = pneg %p56
      $region14: #{l_block_forward.2} parent=11 // pred_check_branch
        %120 = sbr.rel (%p118) target = $region16
      $region15: #{l_block_forward.2} parent=11 // pred_region
        _
      $region16: #{l_block_forward.2} parent=11 // pred_fallthru
        _
      // Predicated region
      $region17: #{l_block_forward.2} parent=11 // pred_check
        %p121 = pneg %p77
      $region18: #{l_block_forward.2} parent=11 // pred_check_branch
        %123 = sbr.rel (%p121) target = $region20
      $region19: #{l_block_forward.2} parent=11 // pred_region
        _
      $region20: #{l_block_forward.2} parent=11 // pred_fallthru
        _
    $region12: #{l_block_forward.2} parent=5 // pred_fallthru
      _
    %p124 = scmp.lt.s32.totalorder %s9, 2
    // Predicated region
    $region21: #{l_block_forward.2} parent=5 // pred_check
      %p125 = pneg %p124
    $region22: #{l_block_forward.2} parent=5 // pred_check_branch
      %127 = sbr.rel (%p125) target = $region24
    $region23: #{l_block_forward.2} parent=5 // pred_region
      // Predicated region
      $region25: #{l_block_forward.2} parent=23 // pred_check
        %p128 = pneg %p29
      $region26: #{l_block_forward.2} parent=23 // pred_check_branch
        %130 = sbr.rel (%p128) target = $region28
      $region27: #{l_block_forward.2} parent=23 // pred_region
        %p131 = scmp.lt.s32.totalorder %s9, 1
        %s132 = scalar_select %p131, %s9, 1
        %s133 = smul.addr %s132, 32
        %s134 = smul.addr %s133, 4
        %s135 = scalar_lea.vmem %s0, %s134
      $region28: #{l_block_forward.2} parent=23 // pred_fallthru
        _
    $region24: #{l_block_forward.2} parent=5 // pred_fallthru
      _
    %p136 = scmp.le.s32.totalorder 1, %s9
    %p137 = scmp.lt.s32.totalorder %s9, 3
    %p138 = pnand %p136, %p137
    %p139 = pneg %p138
    // Predicated region
    $region29: #{l_block_forward.2} parent=5 // pred_check
      _
    $region30: #{l_block_forward.2} parent=5 // pred_check_branch
      %141 = sbr.rel (%p138) target = $region32
    $region31: #{l_block_forward.2} parent=5 // pred_region
      %s142 = ssub.s32 %s9, 1
      %p143 = scmp.lt.s32.totalorder %s14, 1
      %s144 = scalar_select %p143, %s14, 1
      %s145 = smul.addr %s144, 32
      %s146 = smul.addr %s145, 4
      %s147 = scalar_lea.vmem %s0, %s146
      %p148 = pneg %p35
      %p149 = pneg %p32
      %p150 = pneg %p56
      %p151 = pneg %p53
      %p152 = pneg %p77
      %p153 = pneg %p74
      %p154 = pneg %p103
      %p155 = pneg %p100
      %p156 = scmp.lt.s32.totalorder %s14, 1
      %s157 = scalar_select %p156, %s14, 1
      %s158 = smul.addr %s157, 32
      %s159 = smul.addr %s158, 4
      %s160 = scalar_lea.vmem %s3, %s159
      %p161 = scmp.lt.s32.totalorder %s14, 1
      %s162 = scalar_select %p161, %s14, 1
      %s163 = smul.addr %s162, 32
      %s164 = smul.addr %s163, 4
      %s165 = scalar_lea.vmem %s0, %s164
      %p166 = scmp.lt.s32.totalorder %s14, 1
      %s167 = scalar_select %p166, %s14, 1
      %s168 = smul.addr %s167, 32
      %s169 = smul.addr %s168, 4
      %s170 = scalar_lea.vmem %s3, %s169
      %v172 = vld [vmem:[%s165] sm:$0xf]
      %v173 = vld [vmem:[%s165 + $0x4] sm:$0xf]
      %v174 = vld [vmem:[%s165 + $0x8] sm:$0xf]
      %v175 = vld [vmem:[%s165 + $0xc] sm:$0xf]
      %v176 = vld [vmem:[%s165 + $0x10] sm:$0xf]
      %v177 = vld [vmem:[%s165 + $0x14] sm:$0xf]
      %v178 = vld [vmem:[%s165 + $0x18] sm:$0xf]
      %v179 = vld [vmem:[%s165 + $0x1c] sm:$0xf]
      %v180 = vld [vmem:[%s165 + $0x20] sm:$0xf]
      %v181 = vld [vmem:[%s165 + $0x24] sm:$0xf]
      %v182 = vld [vmem:[%s165 + $0x28] sm:$0xf]
      %v183 = vld [vmem:[%s165 + $0x2c] sm:$0xf]
      %v184 = vld [vmem:[%s165 + $0x30] sm:$0xf]
      %v185 = vld [vmem:[%s165 + $0x34] sm:$0xf]
      %v186 = vld [vmem:[%s165 + $0x38] sm:$0xf]
      %v187 = vld [vmem:[%s165 + $0x3c] sm:$0xf]
      %v188 = vld [vmem:[%s165 + $0x40] sm:$0xf]
      %v189 = vld [vmem:[%s165 + $0x44] sm:$0xf]
      %v190 = vld [vmem:[%s165 + $0x48] sm:$0xf]
      %v191 = vld [vmem:[%s165 + $0x4c] sm:$0xf]
      %v192 = vld [vmem:[%s165 + $0x50] sm:$0xf]
      %v193 = vld [vmem:[%s165 + $0x54] sm:$0xf]
      %v194 = vld [vmem:[%s165 + $0x58] sm:$0xf]
      %v195 = vld [vmem:[%s165 + $0x5c] sm:$0xf]
      %v196 = vld [vmem:[%s165 + $0x60] sm:$0xf]
      %v197 = vld [vmem:[%s165 + $0x64] sm:$0xf]
      %v198 = vld [vmem:[%s165 + $0x68] sm:$0xf]
      %v199 = vld [vmem:[%s165 + $0x6c] sm:$0xf]
      %v200 = vld [vmem:[%s165 + $0x70] sm:$0xf]
      %v201 = vld [vmem:[%s165 + $0x74] sm:$0xf]
      %v202 = vld [vmem:[%s165 + $0x78] sm:$0xf]
      %v203 = vld [vmem:[%s165 + $0x7c] sm:$0xf]
      %v204 = vld [vmem:[%s1] sm:$0xf]
      %v205 = vld [vmem:[%s1 + $0x4] sm:$0xf]
      %v206 = vld [vmem:[%s1 + $0x8] sm:$0xf]
      %v207 = vld [vmem:[%s1 + $0xc] sm:$0xf]
      %v208 = vld [vmem:[%s1 + $0x10] sm:$0xf]
      %v209 = vld [vmem:[%s1 + $0x14] sm:$0xf]
      %v210 = vld [vmem:[%s1 + $0x18] sm:$0xf]
      %v211 = vld [vmem:[%s1 + $0x1c] sm:$0xf]
      %v212 = vld [vmem:[%s1 + $0x20] sm:$0xf]
      %v213 = vld [vmem:[%s1 + $0x24] sm:$0xf]
      %v214 = vld [vmem:[%s1 + $0x28] sm:$0x1]
      %v215 = vld [vmem:[%s2] sm:$0x1]
      %v216 = vperm.slane %v215, 0
      %v249 = vunpack.c.l.b16 %v172
      %v250 = vunpack.c.l.b16 %v173
      %v251 = vunpack.c.l.b16 %v174
      %v252 = vunpack.c.l.b16 %v175
      %v253 = vunpack.c.l.b16 %v176
      %v254 = vunpack.c.l.b16 %v177
      %v255 = vunpack.c.l.b16 %v178
      %v256 = vunpack.c.l.b16 %v179
      %v257 = vunpack.c.l.b16 %v180
      %v258 = vunpack.c.l.b16 %v181
      %v259 = vunpack.c.l.b16 %v182
      %v260 = vunpack.c.l.b16 %v183
      %v261 = vunpack.c.l.b16 %v184
      %v262 = vunpack.c.l.b16 %v185
      %v263 = vunpack.c.l.b16 %v186
      %v264 = vunpack.c.l.b16 %v187
      %v265 = vunpack.c.l.b16 %v188
      %v266 = vunpack.c.l.b16 %v189
      %v267 = vunpack.c.l.b16 %v190
      %v268 = vunpack.c.l.b16 %v191
      %v269 = vunpack.c.l.b16 %v192
      %v270 = vunpack.c.l.b16 %v193
      %v271 = vunpack.c.l.b16 %v194
      %v272 = vunpack.c.l.b16 %v195
      %v273 = vunpack.c.l.b16 %v196
      %v274 = vunpack.c.l.b16 %v197
      %v275 = vunpack.c.l.b16 %v198
      %v276 = vunpack.c.l.b16 %v199
      %v277 = vunpack.c.l.b16 %v200
      %v278 = vunpack.c.l.b16 %v201
      %v279 = vunpack.c.l.b16 %v202
      %v280 = vunpack.c.l.b16 %v203
      %v281 = vpack.c.b16 %v250, %v249
      %v282 = vpack.c.b16 %v252, %v251
      %v283 = vpack.c.b16 %v254, %v253
      %v284 = vpack.c.b16 %v256, %v255
      %v285 = vpack.c.b16 %v258, %v257
      %v286 = vpack.c.b16 %v260, %v259
      %v287 = vpack.c.b16 %v262, %v261
      %v288 = vpack.c.b16 %v264, %v263
      %v289 = vpack.c.b16 %v266, %v265
      %v290 = vpack.c.b16 %v268, %v267
      %v291 = vpack.c.b16 %v270, %v269
      %v292 = vpack.c.b16 %v272, %v271
      %v293 = vpack.c.b16 %v274, %v273
      %v294 = vpack.c.b16 %v276, %v275
      %v295 = vpack.c.b16 %v278, %v277
      %v296 = vpack.c.b16 %v280, %v279
      %v308 = vunpack.c.l.b16 %v204
      %v309 = vunpack.c.l.b16 %v205
      %v310 = vunpack.c.l.b16 %v206
      %v311 = vunpack.c.l.b16 %v207
      %v312 = vunpack.c.l.b16 %v208
      %v313 = vunpack.c.l.b16 %v209
      %v314 = vunpack.c.l.b16 %v210
      %v315 = vunpack.c.l.b16 %v211
      %v316 = vunpack.c.l.b16 %v212
      %v317 = vunpack.c.l.b16 %v213
      %v318 = vunpack.c.l.b16 %v214
      %v319 = vpack.c.b16 %v309, %v308
      %v320 = vpack.c.b16 %v311, %v310
      %v321 = vpack.c.b16 %v313, %v312
      %v322 = vpack.c.b16 %v315, %v314
      %v323 = vpack.c.b16 %v317, %v316
      %v324 = vpack.c.b16 %v318, %v318
      %vm330 = vcmask 662528
      %v332 = vsel %vm330, %v281, 0
      %v335 = vsel %vm330, %v282, 0
      %v338 = vsel %vm330, %v283, 0
      %v341 = vsel %vm330, %v284, 0
      %v344 = vsel %vm330, %v285, 0
      %v347 = vsel %vm330, %v286, 0
      %v350 = vsel %vm330, %v287, 0
      %v353 = vsel %vm330, %v288, 0
      %v356 = vsel %vm330, %v289, 0
      %v359 = vsel %vm330, %v290, 0
      %v362 = vsel %vm330, %v291, 0
      %v365 = vsel %vm330, %v292, 0
      %v368 = vsel %vm330, %v293, 0
      %v371 = vsel %vm330, %v294, 0
      %v374 = vsel %vm330, %v295, 0
      %v377 = vsel %vm330, %v296, 0
      %vm379 = vcmask 1040384
      %v380 = vsel 0, 4294967295, 65535
      %v381 = vsel %vm379, %v380, 0
      %v383 = vand.u32 %v324, %v381
      %385 = vmatpush.bf16.msra.mxu0 0
      %386 = vmatpush.bf16.msra.mxu0 0
      %387 = vmatpush.bf16.msra.mxu0 %v383
      %388 = vmatpush.bf16.msra.mxu0 %v323
      %389 = vmatpush.bf16.msra.mxu0 %v322
      %390 = vmatpush.bf16.msra.mxu0 %v321
      %391 = vmatpush.bf16.msra.mxu0 %v320
      %392 = vmatpush.bf16.msra.mxu0 %v319
      %393 = vmatmul.bf16.gmra.mxu0 %v332
      %v394 = vpop.f32.mrf.mxu0
      %v395 = vadd.f32 %v216, %v394
      %v396 = vpop.f32.mrf.mxu0
      %v397 = vadd.f32 %v216, %v396
      %398 = vmatmul.bf16.gmra.mxu0 %v335
      %v399 = vpop.f32.mrf.mxu0
      %v400 = vadd.f32 %v216, %v399
      %v401 = vpop.f32.mrf.mxu0
      %v402 = vadd.f32 %v216, %v401
      %403 = vmatmul.bf16.gmra.mxu0 %v338
      %v404 = vpop.f32.mrf.mxu0
      %v405 = vadd.f32 %v216, %v404
      %v406 = vpop.f32.mrf.mxu0
      %v407 = vadd.f32 %v216, %v406
      %408 = vmatmul.bf16.gmra.mxu0 %v341
      %v409 = vpop.f32.mrf.mxu0
      %v410 = vadd.f32 %v216, %v409
      %v411 = vpop.f32.mrf.mxu0
      %v412 = vadd.f32 %v216, %v411
      %413 = vmatmul.bf16.gmra.mxu0 %v344
      %v414 = vpop.f32.mrf.mxu0
      %v415 = vadd.f32 %v216, %v414
      %v416 = vpop.f32.mrf.mxu0
      %v417 = vadd.f32 %v216, %v416
      %418 = vmatmul.bf16.gmra.mxu0 %v347
      %v419 = vpop.f32.mrf.mxu0
      %v420 = vadd.f32 %v216, %v419
      %v421 = vpop.f32.mrf.mxu0
      %v422 = vadd.f32 %v216, %v421
      %423 = vmatmul.bf16.gmra.mxu0 %v350
      %v424 = vpop.f32.mrf.mxu0
      %v425 = vadd.f32 %v216, %v424
      %v426 = vpop.f32.mrf.mxu0
      %v427 = vadd.f32 %v216, %v426
      %428 = vmatmul.bf16.gmra.mxu0 %v353
      %v429 = vpop.f32.mrf.mxu0
      %v430 = vadd.f32 %v216, %v429
      %v431 = vpop.f32.mrf.mxu0
      %v432 = vadd.f32 %v216, %v431
      %433 = vmatmul.bf16.gmra.mxu0 %v356
      %v434 = vpop.f32.mrf.mxu0
      %v435 = vadd.f32 %v216, %v434
      %v436 = vpop.f32.mrf.mxu0
      %v437 = vadd.f32 %v216, %v436
      %438 = vmatmul.bf16.gmra.mxu0 %v359
      %v439 = vpop.f32.mrf.mxu0
      %v440 = vadd.f32 %v216, %v439
      %v441 = vpop.f32.mrf.mxu0
      %v442 = vadd.f32 %v216, %v441
      %443 = vmatmul.bf16.gmra.mxu0 %v362
      %v444 = vpop.f32.mrf.mxu0
      %v445 = vadd.f32 %v216, %v444
      %v446 = vpop.f32.mrf.mxu0
      %v447 = vadd.f32 %v216, %v446
      %448 = vmatmul.bf16.gmra.mxu0 %v365
      %v449 = vpop.f32.mrf.mxu0
      %v450 = vadd.f32 %v216, %v449
      %v451 = vpop.f32.mrf.mxu0
      %v452 = vadd.f32 %v216, %v451
      %453 = vmatmul.bf16.gmra.mxu0 %v368
      %v454 = vpop.f32.mrf.mxu0
      %v455 = vadd.f32 %v216, %v454
      %v456 = vpop.f32.mrf.mxu0
      %v457 = vadd.f32 %v216, %v456
      %458 = vmatmul.bf16.gmra.mxu0 %v371
      %v459 = vpop.f32.mrf.mxu0
      %v460 = vadd.f32 %v216, %v459
      %v461 = vpop.f32.mrf.mxu0
      %v462 = vadd.f32 %v216, %v461
      %463 = vmatmul.bf16.gmra.mxu0 %v374
      %v464 = vpop.f32.mrf.mxu0
      %v465 = vadd.f32 %v216, %v464
      %v466 = vpop.f32.mrf.mxu0
      %v467 = vadd.f32 %v216, %v466
      %468 = vmatmul.bf16.gmra.mxu0 %v377
      %v469 = vpop.f32.mrf.mxu0
      %v470 = vadd.f32 %v216, %v469
      %v471 = vpop.f32.mrf.mxu0
      %v472 = vadd.f32 %v216, %v471
      %473 = vdwg.mxu0
      %v474 = vld [vmem:[%s2 + $0x1] sm:$0x1]
      %v475 = vld [vmem:[%s2 + $0x2] sm:$0x1]
      %vm476 = vcmask 130048
      %v477 = vsel %vm476, %v395, 0.0
      %v478 = vsel %vm476, %v397, 0.0
      %v479 = vadd.f32 %v477, %v478
      %v480 = vsel %vm476, %v400, 0.0
      %v481 = vadd.f32 %v479, %v480
      %v482 = vsel %vm476, %v402, 0.0
      %v483 = vadd.f32 %v481, %v482
      %v484 = vsel %vm476, %v405, 0.0
      %v485 = vadd.f32 %v483, %v484
      %v486 = vsel %vm476, %v407, 0.0
      %v487 = vadd.f32 %v485, %v486
      %v488 = vsel %vm476, %v410, 0.0
      %v489 = vadd.f32 %v487, %v488
      %v490 = vsel %vm476, %v412, 0.0
      %v491 = vadd.f32 %v489, %v490
      %v492 = vsel %vm476, %v415, 0.0
      %v493 = vadd.f32 %v491, %v492
      %v494 = vsel %vm476, %v417, 0.0
      %v495 = vadd.f32 %v493, %v494
      %v496 = vsel %vm476, %v420, 0.0
      %v497 = vadd.f32 %v495, %v496
      %v498 = vsel %vm476, %v422, 0.0
      %v499 = vadd.f32 %v497, %v498
      %v500 = vsel %vm476, %v425, 0.0
      %v501 = vadd.f32 %v499, %v500
      %v502 = vsel %vm476, %v427, 0.0
      %v503 = vadd.f32 %v501, %v502
      %v504 = vsel %vm476, %v430, 0.0
      %v505 = vadd.f32 %v503, %v504
      %v506 = vsel %vm476, %v432, 0.0
      %v507 = vadd.f32 %v505, %v506
      %v508 = vsel %vm476, %v435, 0.0
      %v509 = vadd.f32 %v507, %v508
      %v510 = vsel %vm476, %v437, 0.0
      %v511 = vadd.f32 %v509, %v510
      %v512 = vsel %vm476, %v440, 0.0
      %v513 = vadd.f32 %v511, %v512
      %v514 = vsel %vm476, %v442, 0.0
      %v515 = vadd.f32 %v513, %v514
      %v516 = vsel %vm476, %v445, 0.0
      %v517 = vadd.f32 %v515, %v516
      %v518 = vsel %vm476, %v447, 0.0
      %v519 = vadd.f32 %v517, %v518
      %v520 = vsel %vm476, %v450, 0.0
      %v521 = vadd.f32 %v519, %v520
      %v522 = vsel %vm476, %v452, 0.0
      %v523 = vadd.f32 %v521, %v522
      %v524 = vsel %vm476, %v455, 0.0
      %v525 = vadd.f32 %v523, %v524
      %v526 = vsel %vm476, %v457, 0.0
      %v527 = vadd.f32 %v525, %v526
      %v528 = vsel %vm476, %v460, 0.0
      %v529 = vadd.f32 %v527, %v528
      %v530 = vsel %vm476, %v462, 0.0
      %v531 = vadd.f32 %v529, %v530
      %v532 = vsel %vm476, %v465, 0.0
      %v533 = vadd.f32 %v531, %v532
      %v534 = vsel %vm476, %v467, 0.0
      %v535 = vadd.f32 %v533, %v534
      %v536 = vsel %vm476, %v470, 0.0
      %v537 = vadd.f32 %v535, %v536
      %v538 = vsel %vm476, %v472, 0.0
      %v539 = vadd.f32 %v537, %v538
      %v540 = vrot.slane %v539, 4
      %v541 = vadd.f32 %v539, %v540
      %v542 = vrot.slane %v541, 2
      %v543 = vadd.f32 %v541, %v542
      %v544 = vrot.slane %v543, 1
      %v545 = vadd.f32 %v543, %v544
      %v546 = vrcp.pop 256.0
      %v547 = vmul.f32 256.0, %v546
      %v548 = vsub.f32 1.0, %v547
      %v549 = vmul.f32 %v546, %v548
      %v550 = vadd.f32 %v546, %v549
      %vm551 = vweird.f32 %v546
      %v552 = vsel %vm551, %v546, %v550
      %v553 = vmul.f32 %v545, %v552
      %v554 = vsub.f32 %v395, %v553
      %v555 = vsub.f32 %v397, %v553
      %v556 = vsub.f32 %v400, %v553
      %v557 = vsub.f32 %v402, %v553
      %v558 = vsub.f32 %v405, %v553
      %v559 = vsub.f32 %v407, %v553
      %v560 = vsub.f32 %v410, %v553
      %v561 = vsub.f32 %v412, %v553
      %v562 = vsub.f32 %v415, %v553
      %v563 = vsub.f32 %v417, %v553
      %v564 = vsub.f32 %v420, %v553
      %v565 = vsub.f32 %v422, %v553
      %v566 = vsub.f32 %v425, %v553
      %v567 = vsub.f32 %v427, %v553
      %v568 = vsub.f32 %v430, %v553
      %v569 = vsub.f32 %v432, %v553
      %v570 = vsub.f32 %v435, %v553
      %v571 = vsub.f32 %v437, %v553
      %v572 = vsub.f32 %v440, %v553
      %v573 = vsub.f32 %v442, %v553
      %v574 = vsub.f32 %v445, %v553
      %v575 = vsub.f32 %v447, %v553
      %v576 = vsub.f32 %v450, %v553
      %v577 = vsub.f32 %v452, %v553
      %v578 = vsub.f32 %v455, %v553
      %v579 = vsub.f32 %v457, %v553
      %v580 = vsub.f32 %v460, %v553
      %v581 = vsub.f32 %v462, %v553
      %v582 = vsub.f32 %v465, %v553
      %v583 = vsub.f32 %v467, %v553
      %v584 = vsub.f32 %v470, %v553
      %v585 = vsub.f32 %v472, %v553
      %v586 = vmul.f32 %v554, %v554
      %v587 = vmul.f32 %v555, %v555
      %v588 = vmul.f32 %v556, %v556
      %v589 = vmul.f32 %v557, %v557
      %v590 = vmul.f32 %v558, %v558
      %v591 = vmul.f32 %v559, %v559
      %v592 = vmul.f32 %v560, %v560
      %v593 = vmul.f32 %v561, %v561
      %v594 = vmul.f32 %v562, %v562
      %v595 = vmul.f32 %v563, %v563
      %v596 = vmul.f32 %v564, %v564
      %v597 = vmul.f32 %v565, %v565
      %v598 = vmul.f32 %v566, %v566
      %v599 = vmul.f32 %v567, %v567
      %v600 = vmul.f32 %v568, %v568
      %v601 = vmul.f32 %v569, %v569
      %v602 = vmul.f32 %v570, %v570
      %v603 = vmul.f32 %v571, %v571
      %v604 = vmul.f32 %v572, %v572
      %v605 = vmul.f32 %v573, %v573
      %v606 = vmul.f32 %v574, %v574
      %v607 = vmul.f32 %v575, %v575
      %v608 = vmul.f32 %v576, %v576
      %v609 = vmul.f32 %v577, %v577
      %v610 = vmul.f32 %v578, %v578
      %v611 = vmul.f32 %v579, %v579
      %v612 = vmul.f32 %v580, %v580
      %v613 = vmul.f32 %v581, %v581
      %v614 = vmul.f32 %v582, %v582
      %v615 = vmul.f32 %v583, %v583
      %v616 = vmul.f32 %v584, %v584
      %v617 = vmul.f32 %v585, %v585
      %v618 = vsel %vm476, %v586, 0.0
      %v619 = vsel %vm476, %v587, 0.0
      %v620 = vadd.f32 %v618, %v619
      %v621 = vsel %vm476, %v588, 0.0
      %v622 = vadd.f32 %v620, %v621
      %v623 = vsel %vm476, %v589, 0.0
      %v624 = vadd.f32 %v622, %v623
      %v625 = vsel %vm476, %v590, 0.0
      %v626 = vadd.f32 %v624, %v625
      %v627 = vsel %vm476, %v591, 0.0
      %v628 = vadd.f32 %v626, %v627
      %v629 = vsel %vm476, %v592, 0.0
      %v630 = vadd.f32 %v628, %v629
      %v631 = vsel %vm476, %v593, 0.0
      %v632 = vadd.f32 %v630, %v631
      %v633 = vsel %vm476, %v594, 0.0
      %v634 = vadd.f32 %v632, %v633
      %v635 = vsel %vm476, %v595, 0.0
      %v636 = vadd.f32 %v634, %v635
      %v637 = vsel %vm476, %v596, 0.0
      %v638 = vadd.f32 %v636, %v637
      %v639 = vsel %vm476, %v597, 0.0
      %v640 = vadd.f32 %v638, %v639
      %v641 = vsel %vm476, %v598, 0.0
      %v642 = vadd.f32 %v640, %v641
      %v643 = vsel %vm476, %v599, 0.0
      %v644 = vadd.f32 %v642, %v643
      %v645 = vsel %vm476, %v600, 0.0
      %v646 = vadd.f32 %v644, %v645
      %v647 = vsel %vm476, %v601, 0.0
      %v648 = vadd.f32 %v646, %v647
      %v649 = vsel %vm476, %v602, 0.0
      %v650 = vadd.f32 %v648, %v649
      %v651 = vsel %vm476, %v603, 0.0
      %v652 = vadd.f32 %v650, %v651
      %v653 = vsel %vm476, %v604, 0.0
      %v654 = vadd.f32 %v652, %v653
      %v655 = vsel %vm476, %v605, 0.0
      %v656 = vadd.f32 %v654, %v655
      %v657 = vsel %vm476, %v606, 0.0
      %v658 = vadd.f32 %v656, %v657
      %v659 = vsel %vm476, %v607, 0.0
      %v660 = vadd.f32 %v658, %v659
      %v661 = vsel %vm476, %v608, 0.0
      %v662 = vadd.f32 %v660, %v661
      %v663 = vsel %vm476, %v609, 0.0
      %v664 = vadd.f32 %v662, %v663
      %v665 = vsel %vm476, %v610, 0.0
      %v666 = vadd.f32 %v664, %v665
      %v667 = vsel %vm476, %v611, 0.0
      %v668 = vadd.f32 %v666, %v667
      %v669 = vsel %vm476, %v612, 0.0
      %v670 = vadd.f32 %v668, %v669
      %v671 = vsel %vm476, %v613, 0.0
      %v672 = vadd.f32 %v670, %v671
      %v673 = vsel %vm476, %v614, 0.0
      %v674 = vadd.f32 %v672, %v673
      %v675 = vsel %vm476, %v615, 0.0
      %v676 = vadd.f32 %v674, %v675
      %v677 = vsel %vm476, %v616, 0.0
      %v678 = vadd.f32 %v676, %v677
      %v679 = vsel %vm476, %v617, 0.0
      %v680 = vadd.f32 %v678, %v679
      %v681 = vrot.slane %v680, 4
      %v682 = vadd.f32 %v680, %v681
      %v683 = vrot.slane %v682, 2
      %v684 = vadd.f32 %v682, %v683
      %v685 = vrot.slane %v684, 1
      %v686 = vadd.f32 %v684, %v685
      %v687 = vmul.f32 %v686, %v552
      %v688 = vadd.f32 %v687, 1e-05
      %v689 = vrsqrt.pop %v688
      %v690 = vmul.f32 %v689, %v688
      %v691 = vmul.f32 %v690, %v689
      %v692 = vmul.f32 0.5, %v691
      %v693 = vsub.f32 1.5, %v692
      %v694 = vmul.f32 %v689, %v693
      %vm695 = vweird.f32 %v688
      %vm696 = vweird.f32 %v689
      %vm697 = vmor %vm695, %vm696
      %v698 = vsel %vm697, %v689, %v694
      %v699 = vmul.f32 %v554, %v698
      %v700 = vmul.f32 %v555, %v698
      %v701 = vmul.f32 %v556, %v698
      %v702 = vmul.f32 %v557, %v698
      %v703 = vmul.f32 %v558, %v698
      %v704 = vmul.f32 %v559, %v698
      %v705 = vmul.f32 %v560, %v698
      %v706 = vmul.f32 %v561, %v698
      %v707 = vmul.f32 %v562, %v698
      %v708 = vmul.f32 %v563, %v698
      %v709 = vmul.f32 %v564, %v698
      %v710 = vmul.f32 %v565, %v698
      %v711 = vmul.f32 %v566, %v698
      %v712 = vmul.f32 %v567, %v698
      %v713 = vmul.f32 %v568, %v698
      %v714 = vmul.f32 %v569, %v698
      %v715 = vmul.f32 %v570, %v698
      %v716 = vmul.f32 %v571, %v698
      %v717 = vmul.f32 %v572, %v698
      %v718 = vmul.f32 %v573, %v698
      %v719 = vmul.f32 %v574, %v698
      %v720 = vmul.f32 %v575, %v698
      %v721 = vmul.f32 %v576, %v698
      %v722 = vmul.f32 %v577, %v698
      %v723 = vmul.f32 %v578, %v698
      %v724 = vmul.f32 %v579, %v698
      %v725 = vmul.f32 %v580, %v698
      %v726 = vmul.f32 %v581, %v698
      %v727 = vmul.f32 %v582, %v698
      %v728 = vmul.f32 %v583, %v698
      %v729 = vmul.f32 %v584, %v698
      %v730 = vmul.f32 %v585, %v698
      %v731 = vperm.slane %v474, 0
      %v732 = vmul.f32 %v699, %v731
      %v733 = vmul.f32 %v700, %v731
      %v734 = vmul.f32 %v701, %v731
      %v735 = vmul.f32 %v702, %v731
      %v736 = vmul.f32 %v703, %v731
      %v737 = vmul.f32 %v704, %v731
      %v738 = vmul.f32 %v705, %v731
      %v739 = vmul.f32 %v706, %v731
      %v740 = vmul.f32 %v707, %v731
      %v741 = vmul.f32 %v708, %v731
      %v742 = vmul.f32 %v709, %v731
      %v743 = vmul.f32 %v710, %v731
      %v744 = vmul.f32 %v711, %v731
      %v745 = vmul.f32 %v712, %v731
      %v746 = vmul.f32 %v713, %v731
      %v747 = vmul.f32 %v714, %v731
      %v748 = vmul.f32 %v715, %v731
      %v749 = vmul.f32 %v716, %v731
      %v750 = vmul.f32 %v717, %v731
      %v751 = vmul.f32 %v718, %v731
      %v752 = vmul.f32 %v719, %v731
      %v753 = vmul.f32 %v720, %v731
      %v754 = vmul.f32 %v721, %v731
      %v755 = vmul.f32 %v722, %v731
      %v756 = vmul.f32 %v723, %v731
      %v757 = vmul.f32 %v724, %v731
      %v758 = vmul.f32 %v725, %v731
      %v759 = vmul.f32 %v726, %v731
      %v760 = vmul.f32 %v727, %v731
      %v761 = vmul.f32 %v728, %v731
      %v762 = vmul.f32 %v729, %v731
      %v763 = vmul.f32 %v730, %v731
      %v764 = vperm.slane %v475, 0
      %v765 = vadd.f32 %v732, %v764
      %v766 = vadd.f32 %v733, %v764
      %v767 = vadd.f32 %v734, %v764
      %v768 = vadd.f32 %v735, %v764
      %v769 = vadd.f32 %v736, %v764
      %v770 = vadd.f32 %v737, %v764
      %v771 = vadd.f32 %v738, %v764
      %v772 = vadd.f32 %v739, %v764
      %v773 = vadd.f32 %v740, %v764
      %v774 = vadd.f32 %v741, %v764
      %v775 = vadd.f32 %v742, %v764
      %v776 = vadd.f32 %v743, %v764
      %v777 = vadd.f32 %v744, %v764
      %v778 = vadd.f32 %v745, %v764
      %v779 = vadd.f32 %v746, %v764
      %v780 = vadd.f32 %v747, %v764
      %v781 = vadd.f32 %v748, %v764
      %v782 = vadd.f32 %v749, %v764
      %v783 = vadd.f32 %v750, %v764
      %v784 = vadd.f32 %v751, %v764
      %v785 = vadd.f32 %v752, %v764
      %v786 = vadd.f32 %v753, %v764
      %v787 = vadd.f32 %v754, %v764
      %v788 = vadd.f32 %v755, %v764
      %v789 = vadd.f32 %v756, %v764
      %v790 = vadd.f32 %v757, %v764
      %v791 = vadd.f32 %v758, %v764
      %v792 = vadd.f32 %v759, %v764
      %v793 = vadd.f32 %v760, %v764
      %v794 = vadd.f32 %v761, %v764
      %v795 = vadd.f32 %v762, %v764
      %v796 = vadd.f32 %v763, %v764
      %v797 = vmax.f32 %v765, 0.0
      %v798 = vmax.f32 %v766, 0.0
      %v799 = vmax.f32 %v767, 0.0
      %v800 = vmax.f32 %v768, 0.0
      %v801 = vmax.f32 %v769, 0.0
      %v802 = vmax.f32 %v770, 0.0
      %v803 = vmax.f32 %v771, 0.0
      %v804 = vmax.f32 %v772, 0.0
      %v805 = vmax.f32 %v773, 0.0
      %v806 = vmax.f32 %v774, 0.0
      %v807 = vmax.f32 %v775, 0.0
      %v808 = vmax.f32 %v776, 0.0
      %v809 = vmax.f32 %v777, 0.0
      %v810 = vmax.f32 %v778, 0.0
      %v811 = vmax.f32 %v779, 0.0
      %v812 = vmax.f32 %v780, 0.0
      %v813 = vmax.f32 %v781, 0.0
      %v814 = vmax.f32 %v782, 0.0
      %v815 = vmax.f32 %v783, 0.0
      %v816 = vmax.f32 %v784, 0.0
      %v817 = vmax.f32 %v785, 0.0
      %v818 = vmax.f32 %v786, 0.0
      %v819 = vmax.f32 %v787, 0.0
      %v820 = vmax.f32 %v788, 0.0
      %v821 = vmax.f32 %v789, 0.0
      %v822 = vmax.f32 %v790, 0.0
      %v823 = vmax.f32 %v791, 0.0
      %v824 = vmax.f32 %v792, 0.0
      %v825 = vmax.f32 %v793, 0.0
      %v826 = vmax.f32 %v794, 0.0
      %v827 = vmax.f32 %v795, 0.0
      %v828 = vmax.f32 %v796, 0.0
      %v829 = vpack.c.bf16 %v797, %v797
      %v830 = vpack.c.bf16 %v798, %v798
      %v831 = vpack.c.bf16 %v799, %v799
      %v832 = vpack.c.bf16 %v800, %v800
      %v833 = vpack.c.bf16 %v801, %v801
      %v834 = vpack.c.bf16 %v802, %v802
      %v835 = vpack.c.bf16 %v803, %v803
      %v836 = vpack.c.bf16 %v804, %v804
      %v837 = vpack.c.bf16 %v805, %v805
      %v838 = vpack.c.bf16 %v806, %v806
      %v839 = vpack.c.bf16 %v807, %v807
      %v840 = vpack.c.bf16 %v808, %v808
      %v841 = vpack.c.bf16 %v809, %v809
      %v842 = vpack.c.bf16 %v810, %v810
      %v843 = vpack.c.bf16 %v811, %v811
      %v844 = vpack.c.bf16 %v812, %v812
      %v845 = vpack.c.bf16 %v813, %v813
      %v846 = vpack.c.bf16 %v814, %v814
      %v847 = vpack.c.bf16 %v815, %v815
      %v848 = vpack.c.bf16 %v816, %v816
      %v849 = vpack.c.bf16 %v817, %v817
      %v850 = vpack.c.bf16 %v818, %v818
      %v851 = vpack.c.bf16 %v819, %v819
      %v852 = vpack.c.bf16 %v820, %v820
      %v853 = vpack.c.bf16 %v821, %v821
      %v854 = vpack.c.bf16 %v822, %v822
      %v855 = vpack.c.bf16 %v823, %v823
      %v856 = vpack.c.bf16 %v824, %v824
      %v857 = vpack.c.bf16 %v825, %v825
      %v858 = vpack.c.bf16 %v826, %v826
      %v859 = vpack.c.bf16 %v827, %v827
      %v860 = vpack.c.bf16 %v828, %v828
      %vm861 = vcmask 125952
      %862 = vst.msk [vmem:[%s170] sm:$0xf] %vm861, %v829
      %863 = vst.msk [vmem:[%s170 + $0x4] sm:$0xf] %vm861, %v830
      %864 = vst.msk [vmem:[%s170 + $0x8] sm:$0xf] %vm861, %v831
      %865 = vst.msk [vmem:[%s170 + $0xc] sm:$0xf] %vm861, %v832
      %866 = vst.msk [vmem:[%s170 + $0x10] sm:$0xf] %vm861, %v833
      %867 = vst.msk [vmem:[%s170 + $0x14] sm:$0xf] %vm861, %v834
      %868 = vst.msk [vmem:[%s170 + $0x18] sm:$0xf] %vm861, %v835
      %869 = vst.msk [vmem:[%s170 + $0x1c] sm:$0xf] %vm861, %v836
      %870 = vst.msk [vmem:[%s170 + $0x20] sm:$0xf] %vm861, %v837
      %871 = vst.msk [vmem:[%s170 + $0x24] sm:$0xf] %vm861, %v838
      %872 = vst.msk [vmem:[%s170 + $0x28] sm:$0xf] %vm861, %v839
      %873 = vst.msk [vmem:[%s170 + $0x2c] sm:$0xf] %vm861, %v840
      %874 = vst.msk [vmem:[%s170 + $0x30] sm:$0xf] %vm861, %v841
      %875 = vst.msk [vmem:[%s170 + $0x34] sm:$0xf] %vm861, %v842
      %876 = vst.msk [vmem:[%s170 + $0x38] sm:$0xf] %vm861, %v843
      %877 = vst.msk [vmem:[%s170 + $0x3c] sm:$0xf] %vm861, %v844
      %878 = vst.msk [vmem:[%s170 + $0x40] sm:$0xf] %vm861, %v845
      %879 = vst.msk [vmem:[%s170 + $0x44] sm:$0xf] %vm861, %v846
      %880 = vst.msk [vmem:[%s170 + $0x48] sm:$0xf] %vm861, %v847
      %881 = vst.msk [vmem:[%s170 + $0x4c] sm:$0xf] %vm861, %v848
      %882 = vst.msk [vmem:[%s170 + $0x50] sm:$0xf] %vm861, %v849
      %883 = vst.msk [vmem:[%s170 + $0x54] sm:$0xf] %vm861, %v850
      %884 = vst.msk [vmem:[%s170 + $0x58] sm:$0xf] %vm861, %v851
      %885 = vst.msk [vmem:[%s170 + $0x5c] sm:$0xf] %vm861, %v852
      %886 = vst.msk [vmem:[%s170 + $0x60] sm:$0xf] %vm861, %v853
      %887 = vst.msk [vmem:[%s170 + $0x64] sm:$0xf] %vm861, %v854
      %888 = vst.msk [vmem:[%s170 + $0x68] sm:$0xf] %vm861, %v855
      %889 = vst.msk [vmem:[%s170 + $0x6c] sm:$0xf] %vm861, %v856
      %890 = vst.msk [vmem:[%s170 + $0x70] sm:$0xf] %vm861, %v857
      %891 = vst.msk [vmem:[%s170 + $0x74] sm:$0xf] %vm861, %v858
      %892 = vst.msk [vmem:[%s170 + $0x78] sm:$0xf] %vm861, %v859
      %893 = vst.msk [vmem:[%s170 + $0x7c] sm:$0xf] %vm861, %v860
      %p894 = scmp.lt.s32.totalorder %s14, 1
      %s895 = scalar_select %p894, %s14, 1
      %s896 = smul.addr %s895, 32
      %s897 = smul.addr %s896, 4
      %s898 = scalar_lea.vmem %s3, %s897
      // Predicated region
      $region33: #{l_block_forward.2} parent=31 // pred_check
        %p899 = pneg %p100
      $region34: #{l_block_forward.2} parent=31 // pred_check_branch
        %901 = sbr.rel (%p899) target = $region36
      $region35: #{l_block_forward.2} parent=31 // pred_region
        _
      $region36: #{l_block_forward.2} parent=31 // pred_fallthru
        _
    $region32: #{l_block_forward.2} parent=5 // pred_fallthru
      _
    %p902 = scmp.le.s32.totalorder 2, %s9
    // Predicated region
    $region37: #{l_block_forward.2} parent=5 // pred_check
      %p903 = pneg %p902
    $region38: #{l_block_forward.2} parent=5 // pred_check_branch
      %905 = sbr.rel (%p903) target = $region40
    $region39: #{l_block_forward.2} parent=5 // pred_region
      %s906 = ssub.s32 %s9, 2
      // Predicated region
      $region41: #{l_block_forward.2} parent=39 // pred_check
        %p907 = pneg %p106
      $region42: #{l_block_forward.2} parent=39 // pred_check_branch
        %909 = sbr.rel (%p907) target = $region44
      $region43: #{l_block_forward.2} parent=39 // pred_region
        %p910 = scmp.lt.s32.totalorder %s15, 1
        %s911 = scalar_select %p910, %s15, 1
        %s912 = smul.addr %s911, 32
        %s913 = smul.addr %s912, 4
        %s914 = scalar_lea.vmem %s3, %s913
      $region44: #{l_block_forward.2} parent=39 // pred_fallthru
        _
    $region40: #{l_block_forward.2} parent=5 // pred_fallthru
      _
  $region6: #{l_block_forward.2} parent=0 // loop_footer
    %s13 = sadd.s32 1, %s9
  $region7: #{l_block_forward.2} parent=0 // loop_footer_branch
    %8 = sbr.rel target = $region3
  $region8: #{l_block_forward.2} parent=0 // loop_exit
    _

// kernel: l_block_forward.3
$region0: #{l_block_forward.3}
  #allocation0 [shape = 'u32[]', space=smem, size = 0x4, offset = 0x4, fixed_abs, tag = 'smem constant byte address 0x4 - core index']
  #allocation1 [shape = 'u32[72,128]{1,0:T(1,128)}', space=vmem, size = 0x9000, scoped, tag = 'internal scratch']
  %s0 = inlined_call_operand.vmem [shape: bf16[2,64,144], index: 0, kind: input, shape index: {}]
  %s1 = inlined_call_operand.vmem [shape: bf16[144,32], index: 1, kind: input, shape index: {}]
  %s2 = inlined_call_operand.vmem [shape: f32[3,32], index: 2, kind: input, shape index: {}]
  %s3 = inlined_call_operand.vmem [shape: bf16[288,64], index: 3, kind: input, shape index: {}]
  %s4 = inlined_call_operand.vmem [shape: f32[3,64], index: 4, kind: input, shape index: {}]
  %s5 = inlined_call_operand.vmem [shape: bf16[6,576,64], index: 5, kind: input, shape index: {}]
  %s6 = inlined_call_operand.vmem [shape: f32[6,3,64], index: 6, kind: input, shape index: {}]
  %s7 = inlined_call_operand.hbm [shape: f32[2,16,64], index: 7, kind: output, shape index: {}]
  %s8 = sld [smem:[#allocation0]]
  $region61: #{l_block_forward.3} parent=0
    _
  %s10 = ssub.s32 1, %s8
  %s11 = scalar_select 0, %s10, %s8
  $region1: #{l_block_forward.3} parent=0
    #allocation2 [shape = 'u8[16384]{0}', space=vmem, size = 0x4000, scoped, tag = 'output window, operand 0']
    #allocation3 [shape = 's32[2]{0}', space=sflag, size = 0x8, scoped, tag = 'scoped memory for l_block_forward.3']
    %12 = vsyncpa [#allocation3], 0
    %s13 = scalar_lea.sflag [#allocation3], 1
    %14 = vsyncpa %s13, 0
    loop: start=0, step=1, limit=4
    $region2: #{l_block_forward.3} parent=1 // loop_pre_header
      _
    $region3: #{l_block_forward.3} parent=1 // loop_header
      %s16 = sphi 0, %s20
      %p17 = scmp.ge.s32.totalorder %s16, 4
      %s26 = sphi 0, %s28
      %s29 = sphi 0, %s26
      %s30 = sphi 0, %s29
      %s46 = sphi 0, %s30
      %s50 = sphi 0, %s50
      %s52 = sphi 0, %s50
      %s53 = sphi 0, %s52
      %s67 = sphi 0, %s53
      %s71 = sphi 0, %s71
      %s73 = sphi 0, %s71
      %s74 = sphi 0, %s73
      %s88 = sphi 0, %s74
      %s92 = sphi 0, %s92
      %s94 = sphi 0, %s92
      %s95 = sphi 0, %s94
      %s109 = sphi 0, %s95
      %s113 = sphi 0, %s113
      %s115 = sphi 0, %s113
      %s116 = sphi 0, %s115
      %s130 = sphi 0, %s116
      %s134 = sphi 0, %s134
      %s136 = sphi 0, %s134
      %s137 = sphi 0, %s136
      %s151 = sphi 0, %s137
      %s155 = sphi 0, %s155
      %s157 = sphi 0, %s155
      %s158 = sphi 0, %s157
      %s172 = sphi 0, %s158
      %s178 = sphi 0, %s180
      %s181 = sphi 0, %s178
      %s182 = sphi 0, %s181
      %s198 = sphi 0, %s182
    $region4: #{l_block_forward.3} parent=1 // loop_header_branch
      %19 = sbr.rel (%p17) target = $region8
    $region5: #{l_block_forward.3} parent=1 // loop_body
      %s21 = ssub.s32 %s16, 1
      %s22 = ssub.s32 %s16, 2
      %s23 = sadd.s32 %s16, 1
      %s24 = ssub.s32 %s16, %s23
      %p25 = scmp.eq.s32.totalorder %s24, 0
      %s27 = sadd.s32 %s26, 1
      %s28 = scalar_select %p25, %s26, %s27
      %p31 = pneg %p25
      %p32 = scmp.eq.s32.totalorder %s16, 1
      %p33 = por %p31, %p32
      %p34 = scmp.ne.s32.totalorder %s26, %s29
      %p35 = scmp.eq.s32.totalorder %s16, 0
      %p36 = por %p34, %p35
      %p37 = scmp.ne.s32.totalorder %s26, %s29
      %p38 = scmp.eq.s32.totalorder %s21, 1
      %p39 = por %p37, %p38
      %p40 = scmp.ne.s32.totalorder %s29, %s30
      %p41 = scmp.eq.s32.totalorder %s21, 0
      %p42 = por %p40, %p41
      %p43 = scmp.ne.s32.totalorder %s29, %s30
      %p44 = scmp.eq.s32.totalorder %s22, 1
      %p45 = por %p43, %p44
      %p47 = scmp.ne.s32.totalorder %s30, %s46
      %p48 = scmp.eq.s32.totalorder %s22, 0
      %p49 = por %p47, %p48
      %s51 = sadd.s32 %s50, 1
      %p54 = scmp.eq.s32.totalorder %s16, 1
      %p55 = scmp.ne.s32.totalorder %s50, %s52
      %p56 = scmp.eq.s32.totalorder %s16, 0
      %p57 = por %p55, %p56
      %p58 = scmp.ne.s32.totalorder %s50, %s52
      %p59 = scmp.eq.s32.totalorder %s21, 1
      %p60 = por %p58, %p59
      %p61 = scmp.ne.s32.totalorder %s52, %s53
      %p62 = scmp.eq.s32.totalorder %s21, 0
      %p63 = por %p61, %p62
      %p64 = scmp.ne.s32.totalorder %s52, %s53
      %p65 = scmp.eq.s32.totalorder %s22, 1
      %p66 = por %p64, %p65
      %p68 = scmp.ne.s32.totalorder %s53, %s67
      %p69 = scmp.eq.s32.totalorder %s22, 0
      %p70 = por %p68, %p69
      %s72 = sadd.s32 %s71, 1
      %p75 = scmp.eq.s32.totalorder %s16, 1
      %p76 = scmp.ne.s32.totalorder %s71, %s73
      %p77 = scmp.eq.s32.totalorder %s16, 0
      %p78 = por %p76, %p77
      %p79 = scmp.ne.s32.totalorder %s71, %s73
      %p80 = scmp.eq.s32.totalorder %s21, 1
      %p81 = por %p79, %p80
      %p82 = scmp.ne.s32.totalorder %s73, %s74
      %p83 = scmp.eq.s32.totalorder %s21, 0
      %p84 = por %p82, %p83
      %p85 = scmp.ne.s32.totalorder %s73, %s74
      %p86 = scmp.eq.s32.totalorder %s22, 1
      %p87 = por %p85, %p86
      %p89 = scmp.ne.s32.totalorder %s74, %s88
      %p90 = scmp.eq.s32.totalorder %s22, 0
      %p91 = por %p89, %p90
      %s93 = sadd.s32 %s92, 1
      %p96 = scmp.eq.s32.totalorder %s16, 1
      %p97 = scmp.ne.s32.totalorder %s92, %s94
      %p98 = scmp.eq.s32.totalorder %s16, 0
      %p99 = por %p97, %p98
      %p100 = scmp.ne.s32.totalorder %s92, %s94
      %p101 = scmp.eq.s32.totalorder %s21, 1
      %p102 = por %p100, %p101
      %p103 = scmp.ne.s32.totalorder %s94, %s95
      %p104 = scmp.eq.s32.totalorder %s21, 0
      %p105 = por %p103, %p104
      %p106 = scmp.ne.s32.totalorder %s94, %s95
      %p107 = scmp.eq.s32.totalorder %s22, 1
      %p108 = por %p106, %p107
      %p110 = scmp.ne.s32.totalorder %s95, %s109
      %p111 = scmp.eq.s32.totalorder %s22, 0
      %p112 = por %p110, %p111
      %s114 = sadd.s32 %s113, 1
      %p117 = scmp.eq.s32.totalorder %s16, 1
      %p118 = scmp.ne.s32.totalorder %s113, %s115
      %p119 = scmp.eq.s32.totalorder %s16, 0
      %p120 = por %p118, %p119
      %p121 = scmp.ne.s32.totalorder %s113, %s115
      %p122 = scmp.eq.s32.totalorder %s21, 1
      %p123 = por %p121, %p122
      %p124 = scmp.ne.s32.totalorder %s115, %s116
      %p125 = scmp.eq.s32.totalorder %s21, 0
      %p126 = por %p124, %p125
      %p127 = scmp.ne.s32.totalorder %s115, %s116
      %p128 = scmp.eq.s32.totalorder %s22, 1
      %p129 = por %p127, %p128
      %p131 = scmp.ne.s32.totalorder %s116, %s130
      %p132 = scmp.eq.s32.totalorder %s22, 0
      %p133 = por %p131, %p132
      %s135 = sadd.s32 %s134, 1
      %p138 = scmp.eq.s32.totalorder %s16, 1
      %p139 = scmp.ne.s32.totalorder %s134, %s136
      %p140 = scmp.eq.s32.totalorder %s16, 0
      %p141 = por %p139, %p140
      %p142 = scmp.ne.s32.totalorder %s134, %s136
      %p143 = scmp.eq.s32.totalorder %s21, 1
      %p144 = por %p142, %p143
      %p145 = scmp.ne.s32.totalorder %s136, %s137
      %p146 = scmp.eq.s32.totalorder %s21, 0
      %p147 = por %p145, %p146
      %p148 = scmp.ne.s32.totalorder %s136, %s137
      %p149 = scmp.eq.s32.totalorder %s22, 1
      %p150 = por %p148, %p149
      %p152 = scmp.ne.s32.totalorder %s137, %s151
      %p153 = scmp.eq.s32.totalorder %s22, 0
      %p154 = por %p152, %p153
      %s156 = sadd.s32 %s155, 1
      %p159 = scmp.eq.s32.totalorder %s16, 1
      %p160 = scmp.ne.s32.totalorder %s155, %s157
      %p161 = scmp.eq.s32.totalorder %s16, 0
      %p162 = por %p160, %p161
      %p163 = scmp.ne.s32.totalorder %s155, %s157
      %p164 = scmp.eq.s32.totalorder %s21, 1
      %p165 = por %p163, %p164
      %p166 = scmp.ne.s32.totalorder %s157, %s158
      %p167 = scmp.eq.s32.totalorder %s21, 0
      %p168 = por %p166, %p167
      %p169 = scmp.ne.s32.totalorder %s157, %s158
      %p170 = scmp.eq.s32.totalorder %s22, 1
      %p171 = por %p169, %p170
      %p173 = scmp.ne.s32.totalorder %s158, %s172
      %p174 = scmp.eq.s32.totalorder %s22, 0
      %p175 = por %p173, %p174
      %s176 = ssub.s32 %s16, %s23
      %p177 = scmp.eq.s32.totalorder %s176, 0
      %s179 = sadd.s32 %s178, 1
      %s180 = scalar_select %p177, %s178, %s179
      %p183 = pneg %p177
      %p184 = scmp.eq.s32.totalorder %s16, 1
      %p185 = por %p183, %p184
      %p186 = scmp.ne.s32.totalorder %s178, %s181
      %p187 = scmp.eq.s32.totalorder %s16, 0
      %p188 = por %p186, %p187
      %p189 = scmp.ne.s32.totalorder %s178, %s181
      %p190 = scmp.eq.s32.totalorder %s21, 1
      %p191 = por %p189, %p190
      %p192 = scmp.ne.s32.totalorder %s181, %s182
      %p193 = scmp.eq.s32.totalorder %s21, 0
      %p194 = por %p192, %p193
      %p195 = scmp.ne.s32.totalorder %s181, %s182
      %p196 = scmp.eq.s32.totalorder %s22, 1
      %p197 = por %p195, %p196
      %p199 = scmp.ne.s32.totalorder %s182, %s198
      %p200 = scmp.eq.s32.totalorder %s22, 0
      %p201 = por %p199, %p200
      %p202 = scmp.le.s32.totalorder 1, %s16
      %p203 = scmp.lt.s32.totalorder %s16, 3
      %p204 = pnand %p202, %p203
      %p205 = pneg %p204
      // Predicated region
      $region9: #{l_block_forward.3} parent=5 // pred_check
        _
      $region10: #{l_block_forward.3} parent=5 // pred_check_branch
        %207 = sbr.rel (%p204) target = $region12
      $region11: #{l_block_forward.3} parent=5 // pred_region
        %s208 = ssub.s32 %s16, 1
        // Predicated region
        $region13: #{l_block_forward.3} parent=11 // pred_check
          %p209 = pneg %p63
        $region14: #{l_block_forward.3} parent=11 // pred_check_branch
          %211 = sbr.rel (%p209) target = $region16
        $region15: #{l_block_forward.3} parent=11 // pred_region
          _
        $region16: #{l_block_forward.3} parent=11 // pred_fallthru
          _
        // Predicated region
        $region17: #{l_block_forward.3} parent=11 // pred_check
          %p212 = pneg %p84
        $region18: #{l_block_forward.3} parent=11 // pred_check_branch
          %214 = sbr.rel (%p212) target = $region20
        $region19: #{l_block_forward.3} parent=11 // pred_region
          _
        $region20: #{l_block_forward.3} parent=11 // pred_fallthru
          _
        // Predicated region
        $region21: #{l_block_forward.3} parent=11 // pred_check
          %p215 = pneg %p105
        $region22: #{l_block_forward.3} parent=11 // pred_check_branch
          %217 = sbr.rel (%p215) target = $region24
        $region23: #{l_block_forward.3} parent=11 // pred_region
          _
        $region24: #{l_block_forward.3} parent=11 // pred_fallthru
          _
        // Predicated region
        $region25: #{l_block_forward.3} parent=11 // pred_check
          %p218 = pneg %p126
        $region26: #{l_block_forward.3} parent=11 // pred_check_branch
          %220 = sbr.rel (%p218) target = $region28
        $region27: #{l_block_forward.3} parent=11 // pred_region
          _
        $region28: #{l_block_forward.3} parent=11 // pred_fallthru
          _
        // Predicated region
        $region29: #{l_block_forward.3} parent=11 // pred_check
          %p221 = pneg %p147
        $region30: #{l_block_forward.3} parent=11 // pred_check_branch
          %223 = sbr.rel (%p221) target = $region32
        $region31: #{l_block_forward.3} parent=11 // pred_region
          _
        $region32: #{l_block_forward.3} parent=11 // pred_fallthru
          _
        // Predicated region
        $region33: #{l_block_forward.3} parent=11 // pred_check
          %p224 = pneg %p168
        $region34: #{l_block_forward.3} parent=11 // pred_check_branch
          %226 = sbr.rel (%p224) target = $region36
        $region35: #{l_block_forward.3} parent=11 // pred_region
          _
        $region36: #{l_block_forward.3} parent=11 // pred_fallthru
          _
      $region12: #{l_block_forward.3} parent=5 // pred_fallthru
        _
      %p227 = scmp.lt.s32.totalorder %s16, 2
      // Predicated region
      $region37: #{l_block_forward.3} parent=5 // pred_check
        %p228 = pneg %p227
      $region38: #{l_block_forward.3} parent=5 // pred_check_branch
        %230 = sbr.rel (%p228) target = $region40
      $region39: #{l_block_forward.3} parent=5 // pred_region
        // Predicated region
        $region41: #{l_block_forward.3} parent=39 // pred_check
          %p231 = pneg %p36
        $region42: #{l_block_forward.3} parent=39 // pred_check_branch
          %233 = sbr.rel (%p231) target = $region44
        $region43: #{l_block_forward.3} parent=39 // pred_region
          %p234 = scmp.lt.s32.totalorder %s16, 1
          %s235 = scalar_select %p234, %s16, 1
          %s236 = smul.addr %s235, 16
          %s237 = smul.addr %s236, 4
          %s238 = scalar_lea.vmem %s0, %s237
        $region44: #{l_block_forward.3} parent=39 // pred_fallthru
          _
      $region40: #{l_block_forward.3} parent=5 // pred_fallthru
        _
      %p239 = scmp.le.s32.totalorder 1, %s16
      %p240 = scmp.lt.s32.totalorder %s16, 3
      %p241 = pnand %p239, %p240
      %p242 = pneg %p241
      // Predicated region
      $region45: #{l_block_forward.3} parent=5 // pred_check
        _
      $region46: #{l_block_forward.3} parent=5 // pred_check_branch
        %244 = sbr.rel (%p241) target = $region48
      $region47: #{l_block_forward.3} parent=5 // pred_region
        %s245 = ssub.s32 %s16, 1
        %p246 = scmp.lt.s32.totalorder %s21, 1
        %s247 = scalar_select %p246, %s21, 1
        %s248 = smul.addr %s247, 16
        %s249 = smul.addr %s248, 4
        %s250 = scalar_lea.vmem %s0, %s249
        %p251 = pneg %p42
        %p252 = pneg %p39
        %p253 = pneg %p63
        %p254 = pneg %p60
        %p255 = pneg %p84
        %p256 = pneg %p81
        %p257 = pneg %p105
        %p258 = pneg %p102
        %p259 = pneg %p126
        %p260 = pneg %p123
        %p261 = pneg %p147
        %p262 = pneg %p144
        %p263 = pneg %p168
        %p264 = pneg %p165
        %p265 = pneg %p194
        %p266 = pneg %p191
        %s267 = sand.u32 %s181, 1
        %s268 = scalar_lea.sflag [#allocation3], %s267
        %s269 = sand.u32 %s181, 1
        %s270 = smul.addr %s269, 16
        %s271 = scalar_lea.vmem [#allocation2], %s270
        %p272 = scmp.lt.s32.totalorder %s21, 1
        %s273 = scalar_select %p272, %s21, 1
        %s274 = smul.addr %s273, 16
        %s275 = smul.addr %s274, 4
        %s276 = scalar_lea.vmem %s0, %s275
        %v278 = vld [vmem:[%s276] sm:$0xff]
        %v279 = vld [vmem:[%s276 + $0x8] sm:$0xff]
        %v280 = vld [vmem:[%s276 + $0x10] sm:$0xff]
        %v281 = vld [vmem:[%s276 + $0x18] sm:$0xff]
        %v282 = vld [vmem:[%s276 + $0x20] sm:$0xff]
        %v283 = vld [vmem:[%s276 + $0x28] sm:$0xff]
        %v284 = vld [vmem:[%s276 + $0x30] sm:$0xff]
        %v285 = vld [vmem:[%s276 + $0x38] sm:$0xff]
        %v286 = vld [vmem:[%s1] sm:$0xf]
        %v287 = vld [vmem:[%s1 + $0x4] sm:$0xf]
        %v288 = vld [vmem:[%s1 + $0x8] sm:$0xf]
        %v289 = vld [vmem:[%s1 + $0xc] sm:$0xf]
        %v290 = vld [vmem:[%s1 + $0x10] sm:$0xf]
        %v291 = vld [vmem:[%s1 + $0x14] sm:$0xf]
        %v292 = vld [vmem:[%s1 + $0x18] sm:$0xf]
        %v293 = vld [vmem:[%s1 + $0x1c] sm:$0xf]
        %v294 = vld [vmem:[%s1 + $0x20] sm:$0xf]
        %v295 = vld [vmem:[%s1 + $0x24] sm:$0xf]
        %v296 = vld [vmem:[%s1 + $0x28] sm:$0xf]
        %v297 = vld [vmem:[%s1 + $0x2c] sm:$0xf]
        %v298 = vld [vmem:[%s1 + $0x30] sm:$0xf]
        %v299 = vld [vmem:[%s1 + $0x34] sm:$0xf]
        %v300 = vld [vmem:[%s1 + $0x38] sm:$0xf]
        %v301 = vld [vmem:[%s1 + $0x3c] sm:$0xf]
        %v302 = vld [vmem:[%s1 + $0x40] sm:$0xf]
        %v303 = vld [vmem:[%s1 + $0x44] sm:$0xf]
        %v304 = vld [vmem:[%s2] sm:$0x1]
        %v305 = vperm.slane %v304, 0
        %v314 = vunpack.c.l.b16 %v278
        %v315 = vunpack.c.h.b16 %v278
        %v316 = vunpack.c.l.b16 %v279
        %v317 = vunpack.c.h.b16 %v279
        %v318 = vunpack.c.l.b16 %v280
        %v319 = vunpack.c.h.b16 %v280
        %v320 = vunpack.c.l.b16 %v281
        %v321 = vunpack.c.h.b16 %v281
        %v322 = vunpack.c.l.b16 %v282
        %v323 = vunpack.c.h.b16 %v282
        %v324 = vunpack.c.l.b16 %v283
        %v325 = vunpack.c.h.b16 %v283
        %v326 = vunpack.c.l.b16 %v284
        %v327 = vunpack.c.h.b16 %v284
        %v328 = vunpack.c.l.b16 %v285
        %v329 = vunpack.c.h.b16 %v285
        %v330 = vpack.c.b16 %v316, %v314
        %v331 = vpack.c.b16 %v317, %v315
        %v332 = vpack.c.b16 %v320, %v318
        %v333 = vpack.c.b16 %v321, %v319
        %v334 = vpack.c.b16 %v324, %v322
        %v335 = vpack.c.b16 %v325, %v323
        %v336 = vpack.c.b16 %v328, %v326
        %v337 = vpack.c.b16 %v329, %v327
        %v360 = vunpack.c.l.b16 %v286
        %v361 = vunpack.c.l.b16 %v287
        %v362 = vunpack.c.l.b16 %v288
        %v363 = vunpack.c.l.b16 %v289
        %v364 = vunpack.c.l.b16 %v290
        %v365 = vunpack.c.l.b16 %v291
        %v366 = vunpack.c.l.b16 %v292
        %v367 = vunpack.c.l.b16 %v293
        %v368 = vunpack.c.l.b16 %v294
        %v369 = vunpack.c.l.b16 %v295
        %v370 = vunpack.c.l.b16 %v296
        %v371 = vunpack.c.l.b16 %v297
        %v372 = vunpack.c.l.b16 %v298
        %v373 = vunpack.c.l.b16 %v299
        %v374 = vunpack.c.l.b16 %v300
        %v375 = vunpack.c.l.b16 %v301
        %v376 = vunpack.c.l.b16 %v302
        %v377 = vunpack.c.l.b16 %v303
        %v378 = vpack.c.b16 %v361, %v360
        %v379 = vpack.c.b16 %v363, %v362
        %v380 = vpack.c.b16 %v365, %v364
        %v381 = vpack.c.b16 %v367, %v366
        %v382 = vpack.c.b16 %v369, %v368
        %v383 = vpack.c.b16 %v371, %v370
        %v384 = vpack.c.b16 %v373, %v372
        %v385 = vpack.c.b16 %v375, %v374
        %v386 = vpack.c.b16 %v377, %v376
        %vm396 = vcmask 130048
        %v398 = vsel %vm396, %v331, 0
        %v401 = vsel %vm396, %v333, 0
        %v404 = vsel %vm396, %v335, 0
        %v407 = vsel %vm396, %v337, 0
        %409 = vmatpush.bf16.msra.mxu0 %v385
        %410 = vmatpush.bf16.msra.mxu0 %v384
        %411 = vmatpush.bf16.msra.mxu0 %v383
        %412 = vmatpush.bf16.msra.mxu0 %v382
        %413 = vmatpush.bf16.msra.mxu0 %v381
        %414 = vmatpush.bf16.msra.mxu0 %v380
        %415 = vmatpush.bf16.msra.mxu0 %v379
        %416 = vmatpush.bf16.msra.mxu0 %v378
        %417 = vmatmul.bf16.gmra.mxu0 %v330
        %v418 = vpop.f32.mrf.mxu0
        %v419 = vadd.f32 %v305, %v418
        %v420 = vpop.f32.mrf.mxu0
        %v421 = vadd.f32 %v305, %v420
        %422 = vmatmul.bf16.gmra.mxu0 %v332
        %v423 = vpop.f32.mrf.mxu0
        %v424 = vadd.f32 %v305, %v423
        %v425 = vpop.f32.mrf.mxu0
        %v426 = vadd.f32 %v305, %v425
        %427 = vmatmul.bf16.gmra.mxu0 %v334
        %v428 = vpop.f32.mrf.mxu0
        %v429 = vadd.f32 %v305, %v428
        %v430 = vpop.f32.mrf.mxu0
        %v431 = vadd.f32 %v305, %v430
        %432 = vmatmul.bf16.gmra.mxu0 %v336
        %v433 = vpop.f32.mrf.mxu0
        %v434 = vadd.f32 %v305, %v433
        %v435 = vpop.f32.mrf.mxu0
        %v436 = vadd.f32 %v305, %v435
        %437 = vdwg.mxu0
        %438 = vmatpush.bf16.msra.mxu0 0
        %439 = vmatpush.bf16.msra.mxu0 0
        %440 = vmatpush.bf16.msra.mxu0 0
        %441 = vmatpush.bf16.msra.mxu0 0
        %442 = vmatpush.bf16.msra.mxu0 0
        %443 = vmatpush.bf16.msra.mxu0 0
        %444 = vmatpush.bf16.msra.mxu0 0
        %445 = vmatpush.bf16.msra.mxu0 %v386
        %446 = vmatmul.bf16.gmra.mxu0 %v398
        %v447 = vpop.f32.mrf.mxu0
        %v448 = vadd.f32 %v419, %v447
        %v449 = vpop.f32.mrf.mxu0
        %v450 = vadd.f32 %v421, %v449
        %451 = vmatmul.bf16.gmra.mxu0 %v401
        %v452 = vpop.f32.mrf.mxu0
        %v453 = vadd.f32 %v424, %v452
        %v454 = vpop.f32.mrf.mxu0
        %v455 = vadd.f32 %v426, %v454
        %456 = vmatmul.bf16.gmra.mxu0 %v404
        %v457 = vpop.f32.mrf.mxu0
        %v458 = vadd.f32 %v429, %v457
        %v459 = vpop.f32.mrf.mxu0
        %v460 = vadd.f32 %v431, %v459
        %461 = vmatmul.bf16.gmra.mxu0 %v407
        %v462 = vpop.f32.mrf.mxu0
        %v463 = vadd.f32 %v434, %v462
        %v464 = vpop.f32.mrf.mxu0
        %v465 = vadd.f32 %v436, %v464
        %466 = vdwg.mxu0
        %v467 = vld [vmem:[%s2 + $0x1] sm:$0x1]
        %v468 = vld [vmem:[%s2 + $0x2] sm:$0x1]
        %vm469 = vcmask 261120
        %v470 = vsel %vm469, %v448, 0.0
        %v471 = vsel %vm469, %v450, 0.0
        %v472 = vadd.f32 %v470, %v471
        %v473 = vsel %vm469, %v453, 0.0
        %v474 = vadd.f32 %v472, %v473
        %v475 = vsel %vm469, %v455, 0.0
        %v476 = vadd.f32 %v474, %v475
        %v477 = vsel %vm469, %v458, 0.0
        %v478 = vadd.f32 %v476, %v477
        %v479 = vsel %vm469, %v460, 0.0
        %v480 = vadd.f32 %v478, %v479
        %v481 = vsel %vm469, %v463, 0.0
        %v482 = vadd.f32 %v480, %v481
        %v483 = vsel %vm469, %v465, 0.0
        %v484 = vadd.f32 %v482, %v483
        %v485 = vrot.slane %v484, 4
        %v486 = vadd.f32 %v484, %v485
        %v487 = vrot.slane %v486, 2
        %v488 = vadd.f32 %v486, %v487
        %v489 = vrot.slane %v488, 1
        %v490 = vadd.f32 %v488, %v489
        %v491 = vrcp.pop 64.0
        %v492 = vmul.f32 64.0, %v491
        %v493 = vsub.f32 1.0, %v492
        %v494 = vmul.f32 %v491, %v493
        %v495 = vadd.f32 %v491, %v494
        %vm496 = vweird.f32 %v491
        %v497 = vsel %vm496, %v491, %v495
        %v498 = vmul.f32 %v490, %v497
        %v499 = vsub.f32 %v448, %v498
        %v500 = vsub.f32 %v450, %v498
        %v501 = vsub.f32 %v453, %v498
        %v502 = vsub.f32 %v455, %v498
        %v503 = vsub.f32 %v458, %v498
        %v504 = vsub.f32 %v460, %v498
        %v505 = vsub.f32 %v463, %v498
        %v506 = vsub.f32 %v465, %v498
        %v507 = vmul.f32 %v499, %v499
        %v508 = vmul.f32 %v500, %v500
        %v509 = vmul.f32 %v501, %v501
        %v510 = vmul.f32 %v502, %v502
        %v511 = vmul.f32 %v503, %v503
        %v512 = vmul.f32 %v504, %v504
        %v513 = vmul.f32 %v505, %v505
        %v514 = vmul.f32 %v506, %v506
        %v515 = vsel %vm469, %v507, 0.0
        %v516 = vsel %vm469, %v508, 0.0
        %v517 = vadd.f32 %v515, %v516
        %v518 = vsel %vm469, %v509, 0.0
        %v519 = vadd.f32 %v517, %v518
        %v520 = vsel %vm469, %v510, 0.0
        %v521 = vadd.f32 %v519, %v520
        %v522 = vsel %vm469, %v511, 0.0
        %v523 = vadd.f32 %v521, %v522
        %v524 = vsel %vm469, %v512, 0.0
        %v525 = vadd.f32 %v523, %v524
        %v526 = vsel %vm469, %v513, 0.0
        %v527 = vadd.f32 %v525, %v526
        %v528 = vsel %vm469, %v514, 0.0
        %v529 = vadd.f32 %v527, %v528
        %v530 = vrot.slane %v529, 4
        %v531 = vadd.f32 %v529, %v530
        %v532 = vrot.slane %v531, 2
        %v533 = vadd.f32 %v531, %v532
        %v534 = vrot.slane %v533, 1
        %v535 = vadd.f32 %v533, %v534
        %v536 = vmul.f32 %v535, %v497
        %v537 = vadd.f32 %v536, 1e-05
        %v538 = vrsqrt.pop %v537
        %v539 = vmul.f32 %v538, %v537
        %v540 = vmul.f32 %v539, %v538
        %v541 = vmul.f32 0.5, %v540
        %v542 = vsub.f32 1.5, %v541
        %v543 = vmul.f32 %v538, %v542
        %vm544 = vweird.f32 %v537
        %vm545 = vweird.f32 %v538
        %vm546 = vmor %vm544, %vm545
        %v547 = vsel %vm546, %v538, %v543
        %v548 = vmul.f32 %v499, %v547
        %v549 = vmul.f32 %v500, %v547
        %v550 = vmul.f32 %v501, %v547
        %v551 = vmul.f32 %v502, %v547
        %v552 = vmul.f32 %v503, %v547
        %v553 = vmul.f32 %v504, %v547
        %v554 = vmul.f32 %v505, %v547
        %v555 = vmul.f32 %v506, %v547
        %v556 = vperm.slane %v467, 0
        %v557 = vmul.f32 %v548, %v556
        %v558 = vmul.f32 %v549, %v556
        %v559 = vmul.f32 %v550, %v556
        %v560 = vmul.f32 %v551, %v556
        %v561 = vmul.f32 %v552, %v556
        %v562 = vmul.f32 %v553, %v556
        %v563 = vmul.f32 %v554, %v556
        %v564 = vmul.f32 %v555, %v556
        %v565 = vperm.slane %v468, 0
        %v566 = vadd.f32 %v557, %v565
        %v567 = vadd.f32 %v558, %v565
        %v568 = vadd.f32 %v559, %v565
        %v569 = vadd.f32 %v560, %v565
        %v570 = vadd.f32 %v561, %v565
        %v571 = vadd.f32 %v562, %v565
        %v572 = vadd.f32 %v563, %v565
        %v573 = vadd.f32 %v564, %v565
        %v574 = vmax.f32 %v566, 0.0
        %v575 = vmax.f32 %v567, 0.0
        %v576 = vmax.f32 %v568, 0.0
        %v577 = vmax.f32 %v569, 0.0
        %v578 = vmax.f32 %v570, 0.0
        %v579 = vmax.f32 %v571, 0.0
        %v580 = vmax.f32 %v572, 0.0
        %v581 = vmax.f32 %v573, 0.0
        %v582 = vpack.c.bf16 %v574, %v574
        %v583 = vpack.c.bf16 %v575, %v575
        %v584 = vpack.c.bf16 %v576, %v576
        %v585 = vpack.c.bf16 %v577, %v577
        %v586 = vpack.c.bf16 %v578, %v578
        %v587 = vpack.c.bf16 %v579, %v579
        %v588 = vpack.c.bf16 %v580, %v580
        %v589 = vpack.c.bf16 %v581, %v581
        %v591 = vrot.slane %v582, 6
        %v592 = vrot.slane %v591, 4
        %v594 = vrot.slane %v583, 6
        %v595 = vrot.slane %v594, 4
        %v597 = vrot.slane %v584, 6
        %v598 = vrot.slane %v597, 4
        %v601 = vrot.slane %v585, 6
        %v602 = vrot.slane %v601, 4
        %v605 = vrot.slane %v586, 6
        %v606 = vrot.slane %v605, 4
        %v608 = vrot.slane %v587, 6
        %v609 = vrot.slane %v608, 4
        %v611 = vrot.slane %v588, 6
        %v612 = vrot.slane %v611, 4
        %v615 = vrot.slane %v589, 6
        %v616 = vrot.slane %v615, 4
        %v618 = vunpack.c.l.b16 %v588
        %v619 = vunpack.c.l.b16 %v612
        %v620 = vunpack.c.l.b16 %v589
        %v621 = vunpack.c.l.b16 %v616
        %v622 = vpack.c.b16 %v618, %v618
        %v623 = vpack.c.b16 %v619, %v619
        %v624 = vpack.c.b16 %v620, %v620
        %v625 = vpack.c.b16 %v621, %v621
        %v627 = vshrl.u32 %v622, 16
        %v629 = vrot.slane %v627, 7
        %v630 = vshll.u32 %v622, 16
        %v632 = vor.u32 %v629, %v630
        %v634 = vshrl.u32 %v623, 16
        %v636 = vrot.slane %v634, 7
        %v637 = vshll.u32 %v623, 16
        %v639 = vor.u32 %v636, %v637
        %v641 = vshrl.u32 %v624, 16
        %v643 = vrot.slane %v641, 7
        %v644 = vshll.u32 %v624, 16
        %v646 = vor.u32 %v643, %v644
        %v648 = vshrl.u32 %v625, 16
        %v650 = vrot.slane %v648, 7
        %v651 = vshll.u32 %v625, 16
        %v653 = vor.u32 %v650, %v651
        %vm658 = vcmask 1040384
        %vm659 = vsmask.f32 256
        %vm660 = vmand %vm658, %vm659
        %v661 = vsel %vm660, %v588, %v632
        %v662 = vsel %vm660, %v612, %v639
        %v663 = vsel %vm660, %v589, %v646
        %v664 = vsel %vm660, %v616, %v653
        %v665 = vunpack.c.l.b16 %v586
        %v666 = vunpack.c.l.b16 %v606
        %v667 = vunpack.c.l.b16 %v587
        %v668 = vunpack.c.l.b16 %v609
        %v669 = vpack.c.b16 %v665, %v665
        %v670 = vpack.c.b16 %v666, %v666
        %v671 = vpack.c.b16 %v667, %v667
        %v672 = vpack.c.b16 %v668, %v668
        %v674 = vshrl.u32 %v669, 16
        %v676 = vrot.slane %v674, 7
        %v678 = vshrl.u32 %v670, 16
        %v680 = vrot.slane %v678, 7
        %v682 = vshrl.u32 %v671, 16
        %v684 = vrot.slane %v682, 7
        %v686 = vshrl.u32 %v672, 16
        %v688 = vrot.slane %v686, 7
        %vm689 = vcmask 1041408
        %v692 = vsel %vm689, %v586, %v676
        %v695 = vsel %vm689, %v606, %v680
        %v698 = vsel %vm689, %v587, %v684
        %v701 = vsel %vm689, %v609, %v688
        %v702 = vunpack.c.l.b16 %v584
        %v703 = vunpack.c.l.b16 %v598
        %v704 = vunpack.c.l.b16 %v585
        %v705 = vunpack.c.l.b16 %v602
        %v706 = vpack.c.b16 %v702, %v702
        %v707 = vpack.c.b16 %v703, %v703
        %v708 = vpack.c.b16 %v704, %v704
        %v709 = vpack.c.b16 %v705, %v705
        %v711 = vshrl.u32 %v706, 16
        %v713 = vrot.slane %v711, 7
        %v714 = vshll.u32 %v706, 16
        %v716 = vor.u32 %v713, %v714
        %v718 = vshrl.u32 %v707, 16
        %v720 = vrot.slane %v718, 7
        %v721 = vshll.u32 %v707, 16
        %v723 = vor.u32 %v720, %v721
        %v725 = vshrl.u32 %v708, 16
        %v727 = vrot.slane %v725, 7
        %v728 = vshll.u32 %v708, 16
        %v730 = vor.u32 %v727, %v728
        %v732 = vshrl.u32 %v709, 16
        %v734 = vrot.slane %v732, 7
        %v735 = vshll.u32 %v709, 16
        %v737 = vor.u32 %v734, %v735
        %v742 = vsel %vm660, %v584, %v716
        %v743 = vsel %vm660, %v598, %v723
        %v744 = vsel %vm660, %v585, %v730
        %v745 = vsel %vm660, %v602, %v737
        %v746 = vunpack.c.l.b16 %v582
        %v747 = vunpack.c.l.b16 %v592
        %v748 = vunpack.c.l.b16 %v583
        %v749 = vunpack.c.l.b16 %v595
        %v750 = vpack.c.b16 %v746, %v746
        %v751 = vpack.c.b16 %v747, %v747
        %v752 = vpack.c.b16 %v748, %v748
        %v753 = vpack.c.b16 %v749, %v749
        %v755 = vshrl.u32 %v750, 16
        %v757 = vrot.slane %v755, 7
        %v759 = vshrl.u32 %v751, 16
        %v761 = vrot.slane %v759, 7
        %v763 = vshrl.u32 %v752, 16
        %v765 = vrot.slane %v763, 7
        %v767 = vshrl.u32 %v753, 16
        %v769 = vrot.slane %v767, 7
        %v772 = vsel %vm689, %v582, %v757
        %v775 = vsel %vm689, %v592, %v761
        %v778 = vsel %vm689, %v583, %v765
        %v781 = vsel %vm689, %v595, %v769
        %783 = vrot.lane.b32.xlu0 %v692, 32
        %v784 = vpop.permute.xlu0 %783
        %v786 = vshrl.u32 %v661, 16
        %v788 = vshll.u32 %v661, 16
        %v790 = vrot.slane %v788, 1
        %v791 = vor.u32 %v786, %v790
        %792 = vrot.lane.b32.xlu0 %v791, 64
        %v793 = vpop.permute.xlu0 %792
        %795 = vrot.lane.b32.xlu0 %v742, 96
        %v796 = vpop.permute.xlu0 %795
        %v798 = vshrl.u32 %v742, 16
        %v800 = vshll.u32 %v742, 16
        %v802 = vrot.slane %v800, 1
        %v803 = vor.u32 %v798, %v802
        %804 = vrot.lane.b32.xlu0 %v803, 32
        %v805 = vpop.permute.xlu0 %804
        %807 = vrot.lane.b32.xlu0 %v661, 64
        %v808 = vpop.permute.xlu0 %807
        %809 = vrot.lane.b32.xlu0 %v692, 96
        %v810 = vpop.permute.xlu0 %809
        %v812 = vsel %vm469, %v661, %v784
        %vm813 = vcmask 523264
        %v815 = vsel %vm813, %v812, %v793
        %vm816 = vcmask 785408
        %v818 = vsel %vm816, %v815, %v796
        %v820 = vsel %vm469, %v772, %v805
        %v822 = vsel %vm813, %v820, %v808
        %v824 = vsel %vm816, %v822, %v810
        %826 = vrot.lane.b32.xlu0 %v743, 96
        %v827 = vpop.permute.xlu0 %826
        %v829 = vshrl.u32 %v743, 16
        %v831 = vshll.u32 %v743, 16
        %v833 = vrot.slane %v831, 1
        %v834 = vor.u32 %v829, %v833
        %835 = vrot.lane.b32.xlu0 %v834, 32
        %v836 = vpop.permute.xlu0 %835
        %838 = vrot.lane.b32.xlu0 %v662, 64
        %v839 = vpop.permute.xlu0 %838
        %841 = vrot.lane.b32.xlu0 %v695, 96
        %v842 = vpop.permute.xlu0 %841
        %v844 = vshrl.u32 %v662, 16
        %v846 = vshll.u32 %v662, 16
        %v848 = vrot.slane %v846, 1
        %v849 = vor.u32 %v844, %v848
        %v851 = vsel %vm816, %v815, %v827
        %v853 = vsel %vm469, %v775, %v836
        %v855 = vsel %vm813, %v853, %v839
        %v857 = vsel %vm816, %v855, %v842
        %858 = vrot.lane.b32.xlu0 %v695, 32
        %v859 = vpop.permute.xlu0 %858
        %860 = vrot.lane.b32.xlu0 %v849, 64
        %v861 = vpop.permute.xlu0 %860
        %863 = vrot.lane.b32.xlu0 %v744, 96
        %v864 = vpop.permute.xlu0 %863
        %v866 = vshrl.u32 %v744, 16
        %v868 = vshll.u32 %v744, 16
        %v870 = vrot.slane %v868, 1
        %v871 = vor.u32 %v866, %v870
        %872 = vrot.lane.b32.xlu0 %v871, 32
        %v873 = vpop.permute.xlu0 %872
        %875 = vrot.lane.b32.xlu0 %v663, 64
        %v876 = vpop.permute.xlu0 %875
        %878 = vrot.lane.b32.xlu0 %v698, 96
        %v879 = vpop.permute.xlu0 %878
        %v881 = vshrl.u32 %v663, 16
        %v883 = vshll.u32 %v663, 16
        %v885 = vrot.slane %v883, 1
        %v886 = vor.u32 %v881, %v885
        %v888 = vsel %vm469, %v662, %v859
        %v890 = vsel %vm813, %v888, %v861
        %v892 = vsel %vm816, %v890, %v864
        %v894 = vsel %vm469, %v778, %v873
        %v896 = vsel %vm813, %v894, %v876
        %v898 = vsel %vm816, %v896, %v879
        %899 = vrot.lane.b32.xlu0 %v698, 32
        %v900 = vpop.permute.xlu0 %899
        %901 = vrot.lane.b32.xlu0 %v886, 64
        %v902 = vpop.permute.xlu0 %901
        %904 = vrot.lane.b32.xlu0 %v745, 96
        %v905 = vpop.permute.xlu0 %904
        %v907 = vshrl.u32 %v745, 16
        %v909 = vshll.u32 %v745, 16
        %v911 = vrot.slane %v909, 1
        %v912 = vor.u32 %v907, %v911
        %913 = vrot.lane.b32.xlu0 %v912, 32
        %v914 = vpop.permute.xlu0 %913
        %916 = vrot.lane.b32.xlu0 %v664, 64
        %v917 = vpop.permute.xlu0 %916
        %919 = vrot.lane.b32.xlu0 %v701, 96
        %v920 = vpop.permute.xlu0 %919
        %v922 = vshrl.u32 %v664, 16
        %v924 = vshll.u32 %v664, 16
        %v926 = vrot.slane %v924, 1
        %v927 = vor.u32 %v922, %v926
        %v929 = vsel %vm469, %v663, %v900
        %v931 = vsel %vm813, %v929, %v902
        %v933 = vsel %vm816, %v931, %v905
        %v935 = vsel %vm469, %v781, %v914
        %v937 = vsel %vm813, %v935, %v917
        %v939 = vsel %vm816, %v937, %v920
        %v942 = vrot.slane %v851, 6
        %v943 = vrot.slane %v857, 6
        %v944 = vrot.slane %v849, 6
        %v947 = vrot.slane %v892, 4
        %v948 = vrot.slane %v898, 4
        %v949 = vrot.slane %v886, 4
        %v952 = vrot.slane %v933, 2
        %v953 = vrot.slane %v939, 2
        %v954 = vrot.slane %v927, 2
        %v956 = vsel %vm689, %v818, %v942
        %v958 = vsel %vm689, %v824, %v943
        %v961 = vsel %vm689, %v791, %v944
        %vm962 = vcmask 1043456
        %v964 = vsel %vm962, %v956, %v947
        %v966 = vsel %vm962, %v958, %v948
        %v968 = vsel %vm962, %v961, %v949
        %vm969 = vcmask 1045504
        %v971 = vsel %vm969, %v964, %v952
        %v974 = vsel %vm969, %v966, %v953
        %v977 = vsel %vm969, %v968, %v954
        %v978 = vld [vmem:[%s3] sm:$0xf]
        %v979 = vld [vmem:[%s3 + $0x4] sm:$0xf]
        %v980 = vld [vmem:[%s3 + $0x8] sm:$0xf]
        %v981 = vld [vmem:[%s3 + $0xc] sm:$0xf]
        %v982 = vld [vmem:[%s3 + $0x10] sm:$0xf]
        %v983 = vld [vmem:[%s3 + $0x14] sm:$0xf]
        %v984 = vld [vmem:[%s3 + $0x18] sm:$0xf]
        %v985 = vld [vmem:[%s3 + $0x1c] sm:$0xf]
        %v986 = vld [vmem:[%s3 + $0x20] sm:$0xf]
        %v987 = vld [vmem:[%s3 + $0x24] sm:$0xf]
        %v988 = vld [vmem:[%s3 + $0x28] sm:$0xf]
        %v989 = vld [vmem:[%s3 + $0x2c] sm:$0xf]
        %v990 = vld [vmem:[%s3 + $0x30] sm:$0xf]
        %v991 = vld [vmem:[%s3 + $0x34] sm:$0xf]
        %v992 = vld [vmem:[%s3 + $0x38] sm:$0xf]
        %v993 = vld [vmem:[%s3 + $0x3c] sm:$0xf]
        %v994 = vld [vmem:[%s3 + $0x40] sm:$0xf]
        %v995 = vld [vmem:[%s3 + $0x44] sm:$0xf]
        %v996 = vld [vmem:[%s3 + $0x48] sm:$0xf]
        %v997 = vld [vmem:[%s3 + $0x4c] sm:$0xf]
        %v998 = vld [vmem:[%s3 + $0x50] sm:$0xf]
        %v999 = vld [vmem:[%s3 + $0x54] sm:$0xf]
        %v1000 = vld [vmem:[%s3 + $0x58] sm:$0xf]
        %v1001 = vld [vmem:[%s3 + $0x5c] sm:$0xf]
        %v1002 = vld [vmem:[%s3 + $0x60] sm:$0xf]
        %v1003 = vld [vmem:[%s3 + $0x64] sm:$0xf]
        %v1004 = vld [vmem:[%s3 + $0x68] sm:$0xf]
        %v1005 = vld [vmem:[%s3 + $0x6c] sm:$0xf]
        %v1006 = vld [vmem:[%s3 + $0x70] sm:$0xf]
        %v1007 = vld [vmem:[%s3 + $0x74] sm:$0xf]
        %v1008 = vld [vmem:[%s3 + $0x78] sm:$0xf]
        %v1009 = vld [vmem:[%s3 + $0x7c] sm:$0xf]
        %v1010 = vld [vmem:[%s3 + $0x80] sm:$0xf]
        %v1011 = vld [vmem:[%s3 + $0x84] sm:$0xf]
        %v1012 = vld [vmem:[%s3 + $0x88] sm:$0xf]
        %v1013 = vld [vmem:[%s3 + $0x8c] sm:$0xf]
        %v1014 = vld [vmem:[%s4] sm:$0x1]
        %v1015 = vperm.slane %v1014, 0
        %v1052 = vunpack.c.l.b16 %v978
        %v1053 = vunpack.c.l.b16 %v979
        %v1054 = vunpack.c.l.b16 %v980
        %v1055 = vunpack.c.l.b16 %v981
        %v1056 = vunpack.c.l.b16 %v982
        %v1057 = vunpack.c.l.b16 %v983
        %v1058 = vunpack.c.l.b16 %v984
        %v1059 = vunpack.c.l.b16 %v985
        %v1060 = vunpack.c.l.b16 %v986
        %v1061 = vunpack.c.l.b16 %v987
        %v1062 = vunpack.c.l.b16 %v988
        %v1063 = vunpack.c.l.b16 %v989
        %v1064 = vunpack.c.l.b16 %v990
        %v1065 = vunpack.c.l.b16 %v991
        %v1066 = vunpack.c.l.b16 %v992
        %v1067 = vunpack.c.l.b16 %v993
        %v1068 = vunpack.c.l.b16 %v994
        %v1069 = vunpack.c.l.b16 %v995
        %v1070 = vunpack.c.l.b16 %v996
        %v1071 = vunpack.c.l.b16 %v997
        %v1072 = vunpack.c.l.b16 %v998
        %v1073 = vunpack.c.l.b16 %v999
        %v1074 = vunpack.c.l.b16 %v1000
        %v1075 = vunpack.c.l.b16 %v1001
        %v1076 = vunpack.c.l.b16 %v1002
        %v1077 = vunpack.c.l.b16 %v1003
        %v1078 = vunpack.c.l.b16 %v1004
        %v1079 = vunpack.c.l.b16 %v1005
        %v1080 = vunpack.c.l.b16 %v1006
        %v1081 = vunpack.c.l.b16 %v1007
        %v1082 = vunpack.c.l.b16 %v1008
        %v1083 = vunpack.c.l.b16 %v1009
        %v1084 = vunpack.c.l.b16 %v1010
        %v1085 = vunpack.c.l.b16 %v1011
        %v1086 = vunpack.c.l.b16 %v1012
        %v1087 = vunpack.c.l.b16 %v1013
        %v1088 = vpack.c.b16 %v1053, %v1052
        %v1089 = vpack.c.b16 %v1055, %v1054
        %v1090 = vpack.c.b16 %v1057, %v1056
        %v1091 = vpack.c.b16 %v1059, %v1058
        %v1092 = vpack.c.b16 %v1061, %v1060
        %v1093 = vpack.c.b16 %v1063, %v1062
        %v1094 = vpack.c.b16 %v1065, %v1064
        %v1095 = vpack.c.b16 %v1067, %v1066
        %v1096 = vpack.c.b16 %v1069, %v1068
        %v1097 = vpack.c.b16 %v1071, %v1070
        %v1098 = vpack.c.b16 %v1073, %v1072
        %v1099 = vpack.c.b16 %v1075, %v1074
        %v1100 = vpack.c.b16 %v1077, %v1076
        %v1101 = vpack.c.b16 %v1079, %v1078
        %v1102 = vpack.c.b16 %v1081, %v1080
        %v1103 = vpack.c.b16 %v1083, %v1082
        %v1104 = vpack.c.b16 %v1085, %v1084
        %v1105 = vpack.c.b16 %v1087, %v1086
        %v1124 = vsel %vm469, %v977, 0
        %1126 = vmatpush.bf16.msra.mxu0 %v1095
        %1127 = vmatpush.bf16.msra.mxu0 %v1094
        %1128 = vmatpush.bf16.msra.mxu0 %v1093
        %1129 = vmatpush.bf16.msra.mxu0 %v1092
        %1130 = vmatpush.bf16.msra.mxu0 %v1091
        %1131 = vmatpush.bf16.msra.mxu0 %v1090
        %1132 = vmatpush.bf16.msra.mxu0 %v1089
        %1133 = vmatpush.bf16.msra.mxu0 %v1088
        %1134 = vmatmul.bf16.gmra.mxu0 %v971
        %v1135 = vpop.f32.mrf.mxu0
        %v1136 = vadd.f32 %v1015, %v1135
        %v1137 = vpop.f32.mrf.mxu0
        %v1138 = vadd.f32 %v1015, %v1137
        %1139 = vdwg.mxu0
        %1140 = vmatpush.bf16.msra.mxu0 %v1103
        %1141 = vmatpush.bf16.msra.mxu0 %v1102
        %1142 = vmatpush.bf16.msra.mxu0 %v1101
        %1143 = vmatpush.bf16.msra.mxu0 %v1100
        %1144 = vmatpush.bf16.msra.mxu0 %v1099
        %1145 = vmatpush.bf16.msra.mxu0 %v1098
        %1146 = vmatpush.bf16.msra.mxu0 %v1097
        %1147 = vmatpush.bf16.msra.mxu0 %v1096
        %1148 = vmatmul.bf16.gmra.mxu0 %v974
        %v1149 = vpop.f32.mrf.mxu0
        %v1150 = vadd.f32 %v1136, %v1149
        %v1151 = vpop.f32.mrf.mxu0
        %v1152 = vadd.f32 %v1138, %v1151
        %1153 = vdwg.mxu0
        %1154 = vmatpush.bf16.msra.mxu0 0
        %1155 = vmatpush.bf16.msra.mxu0 0
        %1156 = vmatpush.bf16.msra.mxu0 0
        %1157 = vmatpush.bf16.msra.mxu0 0
        %1158 = vmatpush.bf16.msra.mxu0 0
        %1159 = vmatpush.bf16.msra.mxu0 0
        %1160 = vmatpush.bf16.msra.mxu0 %v1105
        %1161 = vmatpush.bf16.msra.mxu0 %v1104
        %1162 = vmatmul.bf16.gmra.mxu0 %v1124
        %v1163 = vpop.f32.mrf.mxu0
        %v1164 = vadd.f32 %v1150, %v1163
        %v1165 = vpop.f32.mrf.mxu0
        %v1166 = vadd.f32 %v1152, %v1165
        %1167 = vdwg.mxu0
        %v1168 = vld [vmem:[%s4 + $0x1] sm:$0x1]
        %v1169 = vld [vmem:[%s4 + $0x2] sm:$0x1]
        %v1170 = vsel %vm813, %v1164, 0.0
        %v1171 = vsel %vm813, %v1166, 0.0
        %v1172 = vadd.f32 %v1170, %v1171
        %v1173 = vrot.slane %v1172, 4
        %v1174 = vadd.f32 %v1172, %v1173
        %v1175 = vrot.slane %v1174, 2
        %v1176 = vadd.f32 %v1174, %v1175
        %v1177 = vrot.slane %v1176, 1
        %v1178 = vadd.f32 %v1176, %v1177
        %v1179 = vrcp.pop 16.0
        %v1180 = vmul.f32 16.0, %v1179
        %v1181 = vsub.f32 1.0, %v1180
        %v1182 = vmul.f32 %v1179, %v1181
        %v1183 = vadd.f32 %v1179, %v1182
        %vm1184 = vweird.f32 %v1179
        %v1185 = vsel %vm1184, %v1179, %v1183
        %v1186 = vmul.f32 %v1178, %v1185
        %v1187 = vsub.f32 %v1164, %v1186
        %v1188 = vsub.f32 %v1166, %v1186
        %v1189 = vmul.f32 %v1187, %v1187
        %v1190 = vmul.f32 %v1188, %v1188
        %v1191 = vsel %vm813, %v1189, 0.0
        %v1192 = vsel %vm813, %v1190, 0.0
        %v1193 = vadd.f32 %v1191, %v1192
        %v1194 = vrot.slane %v1193, 4
        %v1195 = vadd.f32 %v1193, %v1194
        %v1196 = vrot.slane %v1195, 2
        %v1197 = vadd.f32 %v1195, %v1196
        %v1198 = vrot.slane %v1197, 1
        %v1199 = vadd.f32 %v1197, %v1198
        %v1200 = vmul.f32 %v1199, %v1185
        %v1201 = vadd.f32 %v1200, 1e-05
        %v1202 = vrsqrt.pop %v1201
        %v1203 = vmul.f32 %v1202, %v1201
        %v1204 = vmul.f32 %v1203, %v1202
        %v1205 = vmul.f32 0.5, %v1204
        %v1206 = vsub.f32 1.5, %v1205
        %v1207 = vmul.f32 %v1202, %v1206
        %vm1208 = vweird.f32 %v1201
        %vm1209 = vweird.f32 %v1202
        %vm1210 = vmor %vm1208, %vm1209
        %v1211 = vsel %vm1210, %v1202, %v1207
        %v1212 = vmul.f32 %v1187, %v1211
        %v1213 = vmul.f32 %v1188, %v1211
        %v1214 = vperm.slane %v1168, 0
        %v1215 = vmul.f32 %v1212, %v1214
        %v1216 = vmul.f32 %v1213, %v1214
        %v1217 = vperm.slane %v1169, 0
        %v1218 = vadd.f32 %v1215, %v1217
        %v1219 = vadd.f32 %v1216, %v1217
        %v1220 = vmax.f32 %v1218, 0.0
        %v1221 = vmax.f32 %v1219, 0.0
        %v1222 = vld [vmem:[%s5] sm:$0xf]
        %v1223 = vld [vmem:[%s5 + $0x4] sm:$0xf]
        %v1224 = vld [vmem:[%s5 + $0x8] sm:$0xf]
        %v1225 = vld [vmem:[%s5 + $0xc] sm:$0xf]
        %v1226 = vld [vmem:[%s5 + $0x10] sm:$0xf]
        %v1227 = vld [vmem:[%s5 + $0x14] sm:$0xf]
        %v1228 = vld [vmem:[%s5 + $0x18] sm:$0xf]
        %v1229 = vld [vmem:[%s5 + $0x1c] sm:$0xf]
        %v1230 = vld [vmem:[%s5 + $0x20] sm:$0xf]
        %v1231 = vld [vmem:[%s5 + $0x24] sm:$0xf]
        %v1232 = vld [vmem:[%s5 + $0x28] sm:$0xf]
        %v1233 = vld [vmem:[%s5 + $0x2c] sm:$0xf]
        %v1234 = vld [vmem:[%s5 + $0x30] sm:$0xf]
        %v1235 = vld [vmem:[%s5 + $0x34] sm:$0xf]
        %v1236 = vld [vmem:[%s5 + $0x38] sm:$0xf]
        %v1237 = vld [vmem:[%s5 + $0x3c] sm:$0xf]
        %v1238 = vld [vmem:[%s5 + $0x40] sm:$0xf]
        %v1239 = vld [vmem:[%s5 + $0x44] sm:$0xf]
        %v1240 = vld [vmem:[%s5 + $0x48] sm:$0xf]
        %v1241 = vld [vmem:[%s5 + $0x4c] sm:$0xf]
        %v1242 = vld [vmem:[%s5 + $0x50] sm:$0xf]
        %v1243 = vld [vmem:[%s5 + $0x54] sm:$0xf]
        %v1244 = vld [vmem:[%s5 + $0x58] sm:$0xf]
        %v1245 = vld [vmem:[%s5 + $0x5c] sm:$0xf]
        %v1246 = vld [vmem:[%s5 + $0x60] sm:$0xf]
        %v1247 = vld [vmem:[%s5 + $0x64] sm:$0xf]
        %v1248 = vld [vmem:[%s5 + $0x68] sm:$0xf]
        %v1249 = vld [vmem:[%s5 + $0x6c] sm:$0xf]
        %v1250 = vld [vmem:[%s5 + $0x70] sm:$0xf]
        %v1251 = vld [vmem:[%s5 + $0x74] sm:$0xf]
        %v1252 = vld [vmem:[%s5 + $0x78] sm:$0xf]
        %v1253 = vld [vmem:[%s5 + $0x7c] sm:$0xf]
        %v1254 = vld [vmem:[%s5 + $0x80] sm:$0xf]
        %v1255 = vld [vmem:[%s5 + $0x84] sm:$0xf]
        %v1256 = vld [vmem:[%s5 + $0x88] sm:$0xf]
        %v1257 = vld [vmem:[%s5 + $0x8c] sm:$0xf]
        %v1258 = vld [vmem:[%s5 + $0x90] sm:$0xf]
        %v1259 = vld [vmem:[%s5 + $0x94] sm:$0xf]
        %v1260 = vld [vmem:[%s5 + $0x98] sm:$0xf]
        %v1261 = vld [vmem:[%s5 + $0x9c] sm:$0xf]
        %v1262 = vld [vmem:[%s5 + $0xa0] sm:$0xf]
        %v1263 = vld [vmem:[%s5 + $0xa4] sm:$0xf]
        %v1264 = vld [vmem:[%s5 + $0xa8] sm:$0xf]
        %v1265 = vld [vmem:[%s5 + $0xac] sm:$0xf]
        %v1266 = vld [vmem:[%s5 + $0xb0] sm:$0xf]
        %v1267 = vld [vmem:[%s5 + $0xb4] sm:$0xf]
        %v1268 = vld [vmem:[%s5 + $0xb8] sm:$0xf]
        %v1269 = vld [vmem:[%s5 + $0xbc] sm:$0xf]
        %v1270 = vld [vmem:[%s5 + $0xc0] sm:$0xf]
        %v1271 = vld [vmem:[%s5 + $0xc4] sm:$0xf]
        %v1272 = vld [vmem:[%s5 + $0xc8] sm:$0xf]
        %v1273 = vld [vmem:[%s5 + $0xcc] sm:$0xf]
        %v1274 = vld [vmem:[%s5 + $0xd0] sm:$0xf]
        %v1275 = vld [vmem:[%s5 + $0xd4] sm:$0xf]
        %v1276 = vld [vmem:[%s5 + $0xd8] sm:$0xf]
        %v1277 = vld [vmem:[%s5 + $0xdc] sm:$0xf]
        %v1278 = vld [vmem:[%s5 + $0xe0] sm:$0xf]
        %v1279 = vld [vmem:[%s5 + $0xe4] sm:$0xf]
        %v1280 = vld [vmem:[%s5 + $0xe8] sm:$0xf]
        %v1281 = vld [vmem:[%s5 + $0xec] sm:$0xf]
        %v1282 = vld [vmem:[%s5 + $0xf0] sm:$0xf]
        %v1283 = vld [vmem:[%s5 + $0xf4] sm:$0xf]
        %v1284 = vld [vmem:[%s5 + $0xf8] sm:$0xf]
        %v1285 = vld [vmem:[%s5 + $0xfc] sm:$0xf]
        %v1286 = vld [vmem:[%s5 + $0x100] sm:$0xf]
        %v1287 = vld [vmem:[%s5 + $0x104] sm:$0xf]
        %v1288 = vld [vmem:[%s5 + $0x108] sm:$0xf]
        %v1289 = vld [vmem:[%s5 + $0x10c] sm:$0xf]
        %v1290 = vld [vmem:[%s5 + $0x110] sm:$0xf]
        %v1291 = vld [vmem:[%s5 + $0x114] sm:$0xf]
        %v1292 = vld [vmem:[%s5 + $0x118] sm:$0xf]
        %v1293 = vld [vmem:[%s5 + $0x11c] sm:$0xf]
        %v1294 = vld [vmem:[%s6] sm:$0x7]
        %v1295 = vpack.c.bf16 %v1220, %v1220
        %v1296 = vpack.c.bf16 %v1221, %v1221
        %v1298 = vunpack.c.l.b16 %v1295
        %v1299 = vpack.c.b16 %v1298, %v1298
        %v1301 = vshrl.u32 %v1299, 16
        %v1304 = vrot.slane %v1301, 7
        %v1305 = vshll.u32 %v1299, 16
        %v1307 = vor.u32 %v1304, %v1305
        %v1309 = vrot.slane %v1305, 7
        %v1311 = vsel %vm660, %v1301, %v1307
        %vm1312 = vcmask 1042432
        %vm1313 = vsmask.f32 2304
        %vm1314 = vmand %vm1312, %vm1313
        %v1315 = vsel %vm1314, %v1311, %v1309
        %v1316 = vrot.slane %v1301, 2
        %v1318 = vrot.slane %v1301, 1
        %v1319 = vrot.slane %v1305, 2
        %v1320 = vor.u32 %v1318, %v1319
        %v1322 = vrot.slane %v1305, 1
        %v1324 = vsel %vm660, %v1316, %v1320
        %v1325 = vsel %vm1314, %v1324, %v1322
        %v1327 = vunpack.c.l.b16 %v1296
        %v1328 = vpack.c.b16 %v1327, %v1327
        %v1330 = vshrl.u32 %v1328, 16
        %v1333 = vrot.slane %v1330, 7
        %v1334 = vshll.u32 %v1328, 16
        %v1336 = vor.u32 %v1333, %v1334
        %v1338 = vrot.slane %v1334, 7
        %v1340 = vsel %vm660, %v1330, %v1336
        %v1341 = vsel %vm1314, %v1340, %v1338
        %v1342 = vrot.slane %v1330, 2
        %v1344 = vrot.slane %v1330, 1
        %v1345 = vrot.slane %v1334, 2
        %v1346 = vor.u32 %v1344, %v1345
        %v1348 = vrot.slane %v1334, 1
        %v1350 = vsel %vm660, %v1342, %v1346
        %v1351 = vsel %vm1314, %v1350, %v1348
        %v1353 = vshrl.u32 %v1325, 16
        %v1355 = vshll.u32 %v1325, 16
        %v1357 = vrot.slane %v1355, 1
        %v1358 = vor.u32 %v1353, %v1357
        %1359 = vrot.lane.b32.xlu0 %v1358, 64
        %v1360 = vpop.permute.xlu0 %1359
        %v1362 = vrot.slane %v1325, 1
        %v1364 = vsel %vm813, %v1325, %v1360
        %v1366 = vshrl.u32 %v1315, 16
        %v1368 = vshll.u32 %v1315, 16
        %v1370 = vrot.slane %v1368, 1
        %v1371 = vor.u32 %v1366, %v1370
        %1372 = vrot.lane.b32.xlu0 %v1371, 64
        %v1373 = vpop.permute.xlu0 %1372
        %v1375 = vrot.slane %v1315, 1
        %v1377 = vsel %vm813, %v1315, %v1373
        %v1379 = vshrl.u32 %v1341, 16
        %v1381 = vshll.u32 %v1341, 16
        %v1383 = vrot.slane %v1381, 1
        %v1384 = vor.u32 %v1379, %v1383
        %1385 = vrot.lane.b32.xlu0 %v1384, 64
        %v1386 = vpop.permute.xlu0 %1385
        %v1388 = vrot.slane %v1341, 1
        %v1390 = vsel %vm813, %v1341, %v1386
        %v1392 = vshrl.u32 %v1351, 16
        %v1394 = vshll.u32 %v1351, 16
        %v1396 = vrot.slane %v1394, 1
        %v1397 = vor.u32 %v1392, %v1396
        %1398 = vrot.lane.b32.xlu0 %v1397, 64
        %v1399 = vpop.permute.xlu0 %1398
        %v1401 = vrot.slane %v1351, 1
        %v1403 = vsel %vm813, %v1351, %v1399
        %1405 = vrot.lane.b32.xlu0 %v1377, 64
        %v1406 = vpop.permute.xlu0 %1405
        %1407 = vrot.lane.b32.xlu0 %v1375, 64
        %v1408 = vpop.permute.xlu0 %1407
        %vm1409 = vcmask 523264
        %v1410 = vsel %vm1409, %v1406, %v1408
        %v1413 = vsel %vm813, %v1362, %v1406
        %1415 = vrot.lane.b32.xlu0 %v1364, 64
        %v1416 = vpop.permute.xlu0 %1415
        %1417 = vrot.lane.b32.xlu0 %v1362, 64
        %v1418 = vpop.permute.xlu0 %1417
        %v1419 = vsel %vm1409, %v1416, %v1418
        %v1422 = vsel %vm813, %v1375, %v1416
        %1424 = vrot.lane.b32.xlu0 %v1390, 64
        %v1425 = vpop.permute.xlu0 %1424
        %1426 = vrot.lane.b32.xlu0 %v1388, 64
        %v1427 = vpop.permute.xlu0 %1426
        %v1428 = vsel %vm1409, %v1425, %v1427
        %v1430 = vsel %vm813, %v1362, %v1425
        %1432 = vrot.lane.b32.xlu0 %v1403, 64
        %v1433 = vpop.permute.xlu0 %1432
        %1434 = vrot.lane.b32.xlu0 %v1401, 64
        %v1435 = vpop.permute.xlu0 %1434
        %v1436 = vsel %vm1409, %v1433, %v1435
        %v1439 = vsel %vm813, %v1388, %v1433
        %v1441 = vrot.slane %v1377, 6
        %v1442 = vrot.slane %v1422, 6
        %v1443 = vrot.slane %v1419, 6
        %v1444 = vrot.slane %v1390, 6
        %v1445 = vrot.slane %v1388, 6
        %v1447 = vrot.slane %v1364, 4
        %v1448 = vrot.slane %v1430, 4
        %v1449 = vrot.slane %v1428, 4
        %v1450 = vrot.slane %v1403, 4
        %v1451 = vrot.slane %v1401, 4
        %v1453 = vrot.slane %v1390, 2
        %v1454 = vrot.slane %v1439, 2
        %v1455 = vrot.slane %v1436, 2
        %v1456 = vrot.slane %v1388, 2
        %v1458 = vsel %vm689, %v1364, %v1441
        %v1460 = vsel %vm689, %v1413, %v1442
        %v1463 = vsel %vm689, %v1410, %v1443
        %v1465 = vsel %vm689, %v1364, %v1444
        %v1467 = vsel %vm689, %v1362, %v1445
        %v1469 = vsel %vm962, %v1458, %v1447
        %v1471 = vsel %vm962, %v1460, %v1448
        %v1473 = vsel %vm962, %v1463, %v1449
        %v1475 = vsel %vm962, %v1465, %v1450
        %v1477 = vsel %vm962, %v1467, %v1451
        %v1479 = vsel %vm969, %v1469, %v1453
        %v1482 = vsel %vm969, %v1471, %v1454
        %v1485 = vsel %vm969, %v1473, %v1455
        %v1487 = vsel %vm969, %v1475, %v1453
        %v1490 = vsel %vm969, %v1477, %v1456
        %v1491 = vperm.slane %v1294, 0
        %v1564 = vunpack.c.l.b16 %v1222
        %v1565 = vunpack.c.l.b16 %v1223
        %v1566 = vunpack.c.l.b16 %v1224
        %v1567 = vunpack.c.l.b16 %v1225
        %v1568 = vunpack.c.l.b16 %v1226
        %v1569 = vunpack.c.l.b16 %v1227
        %v1570 = vunpack.c.l.b16 %v1228
        %v1571 = vunpack.c.l.b16 %v1229
        %v1572 = vunpack.c.l.b16 %v1230
        %v1573 = vunpack.c.l.b16 %v1231
        %v1574 = vunpack.c.l.b16 %v1232
        %v1575 = vunpack.c.l.b16 %v1233
        %v1576 = vunpack.c.l.b16 %v1234
        %v1577 = vunpack.c.l.b16 %v1235
        %v1578 = vunpack.c.l.b16 %v1236
        %v1579 = vunpack.c.l.b16 %v1237
        %v1580 = vunpack.c.l.b16 %v1238
        %v1581 = vunpack.c.l.b16 %v1239
        %v1582 = vunpack.c.l.b16 %v1240
        %v1583 = vunpack.c.l.b16 %v1241
        %v1584 = vunpack.c.l.b16 %v1242
        %v1585 = vunpack.c.l.b16 %v1243
        %v1586 = vunpack.c.l.b16 %v1244
        %v1587 = vunpack.c.l.b16 %v1245
        %v1588 = vunpack.c.l.b16 %v1246
        %v1589 = vunpack.c.l.b16 %v1247
        %v1590 = vunpack.c.l.b16 %v1248
        %v1591 = vunpack.c.l.b16 %v1249
        %v1592 = vunpack.c.l.b16 %v1250
        %v1593 = vunpack.c.l.b16 %v1251
        %v1594 = vunpack.c.l.b16 %v1252
        %v1595 = vunpack.c.l.b16 %v1253
        %v1596 = vunpack.c.l.b16 %v1254
        %v1597 = vunpack.c.l.b16 %v1255
        %v1598 = vunpack.c.l.b16 %v1256
        %v1599 = vunpack.c.l.b16 %v1257
        %v1600 = vunpack.c.l.b16 %v1258
        %v1601 = vunpack.c.l.b16 %v1259
        %v1602 = vunpack.c.l.b16 %v1260
        %v1603 = vunpack.c.l.b16 %v1261
        %v1604 = vunpack.c.l.b16 %v1262
        %v1605 = vunpack.c.l.b16 %v1263
        %v1606 = vunpack.c.l.b16 %v1264
        %v1607 = vunpack.c.l.b16 %v1265
        %v1608 = vunpack.c.l.b16 %v1266
        %v1609 = vunpack.c.l.b16 %v1267
        %v1610 = vunpack.c.l.b16 %v1268
        %v1611 = vunpack.c.l.b16 %v1269
        %v1612 = vunpack.c.l.b16 %v1270
        %v1613 = vunpack.c.l.b16 %v1271
        %v1614 = vunpack.c.l.b16 %v1272
        %v1615 = vunpack.c.l.b16 %v1273
        %v1616 = vunpack.c.l.b16 %v1274
        %v1617 = vunpack.c.l.b16 %v1275
        %v1618 = vunpack.c.l.b16 %v1276
        %v1619 = vunpack.c.l.b16 %v1277
        %v1620 = vunpack.c.l.b16 %v1278
        %v1621 = vunpack.c.l.b16 %v1279
        %v1622 = vunpack.c.l.b16 %v1280
        %v1623 = vunpack.c.l.b16 %v1281
        %v1624 = vunpack.c.l.b16 %v1282
        %v1625 = vunpack.c.l.b16 %v1283
        %v1626 = vunpack.c.l.b16 %v1284
        %v1627 = vunpack.c.l.b16 %v1285
        %v1628 = vunpack.c.l.b16 %v1286
        %v1629 = vunpack.c.l.b16 %v1287
        %v1630 = vunpack.c.l.b16 %v1288
        %v1631 = vunpack.c.l.b16 %v1289
        %v1632 = vunpack.c.l.b16 %v1290
        %v1633 = vunpack.c.l.b16 %v1291
        %v1634 = vunpack.c.l.b16 %v1292
        %v1635 = vunpack.c.l.b16 %v1293
        %v1636 = vpack.c.b16 %v1565, %v1564
        %v1637 = vpack.c.b16 %v1567, %v1566
        %v1638 = vpack.c.b16 %v1569, %v1568
        %v1639 = vpack.c.b16 %v1571, %v1570
        %v1640 = vpack.c.b16 %v1573, %v1572
        %v1641 = vpack.c.b16 %v1575, %v1574
        %v1642 = vpack.c.b16 %v1577, %v1576
        %v1643 = vpack.c.b16 %v1579, %v1578
        %v1644 = vpack.c.b16 %v1581, %v1580
        %v1645 = vpack.c.b16 %v1583, %v1582
        %v1646 = vpack.c.b16 %v1585, %v1584
        %v1647 = vpack.c.b16 %v1587, %v1586
        %v1648 = vpack.c.b16 %v1589, %v1588
        %v1649 = vpack.c.b16 %v1591, %v1590
        %v1650 = vpack.c.b16 %v1593, %v1592
        %v1651 = vpack.c.b16 %v1595, %v1594
        %v1652 = vpack.c.b16 %v1597, %v1596
        %v1653 = vpack.c.b16 %v1599, %v1598
        %v1654 = vpack.c.b16 %v1601, %v1600
        %v1655 = vpack.c.b16 %v1603, %v1602
        %v1656 = vpack.c.b16 %v1605, %v1604
        %v1657 = vpack.c.b16 %v1607, %v1606
        %v1658 = vpack.c.b16 %v1609, %v1608
        %v1659 = vpack.c.b16 %v1611, %v1610
        %v1660 = vpack.c.b16 %v1613, %v1612
        %v1661 = vpack.c.b16 %v1615, %v1614
        %v1662 = vpack.c.b16 %v1617, %v1616
        %v1663 = vpack.c.b16 %v1619, %v1618
        %v1664 = vpack.c.b16 %v1621, %v1620
        %v1665 = vpack.c.b16 %v1623, %v1622
        %v1666 = vpack.c.b16 %v1625, %v1624
        %v1667 = vpack.c.b16 %v1627, %v1626
        %v1668 = vpack.c.b16 %v1629, %v1628
        %v1669 = vpack.c.b16 %v1631, %v1630
        %v1670 = vpack.c.b16 %v1633, %v1632
        %v1671 = vpack.c.b16 %v1635, %v1634
        %v1708 = vsel %vm813, %v1490, 0
        %1710 = vmatpush.bf16.msra.mxu0 %v1643
        %1711 = vmatpush.bf16.msra.mxu0 %v1642
        %1712 = vmatpush.bf16.msra.mxu0 %v1641
        %1713 = vmatpush.bf16.msra.mxu0 %v1640
        %1714 = vmatpush.bf16.msra.mxu0 %v1639
        %1715 = vmatpush.bf16.msra.mxu0 %v1638
        %1716 = vmatpush.bf16.msra.mxu0 %v1637
        %1717 = vmatpush.bf16.msra.mxu0 %v1636
        %1718 = vmatmul.bf16.gmra.mxu0 %v1479
        %v1719 = vpop.f32.mrf.mxu0
        %v1720 = vadd.f32 %v1491, %v1719
        %v1721 = vpop.f32.mrf.mxu0
        %v1722 = vadd.f32 %v1491, %v1721
        %1723 = vdwg.mxu0
        %1724 = vmatpush.bf16.msra.mxu0 %v1651
        %1725 = vmatpush.bf16.msra.mxu0 %v1650
        %1726 = vmatpush.bf16.msra.mxu0 %v1649
        %1727 = vmatpush.bf16.msra.mxu0 %v1648
        %1728 = vmatpush.bf16.msra.mxu0 %v1647
        %1729 = vmatpush.bf16.msra.mxu0 %v1646
        %1730 = vmatpush.bf16.msra.mxu0 %v1645
        %1731 = vmatpush.bf16.msra.mxu0 %v1644
        %1732 = vmatmul.bf16.gmra.mxu0 %v1482
        %v1733 = vpop.f32.mrf.mxu0
        %v1734 = vadd.f32 %v1720, %v1733
        %v1735 = vpop.f32.mrf.mxu0
        %v1736 = vadd.f32 %v1722, %v1735
        %1737 = vdwg.mxu0
        %1738 = vmatpush.bf16.msra.mxu0 %v1659
        %1739 = vmatpush.bf16.msra.mxu0 %v1658
        %1740 = vmatpush.bf16.msra.mxu0 %v1657
        %1741 = vmatpush.bf16.msra.mxu0 %v1656
        %1742 = vmatpush.bf16.msra.mxu0 %v1655
        %1743 = vmatpush.bf16.msra.mxu0 %v1654
        %1744 = vmatpush.bf16.msra.mxu0 %v1653
        %1745 = vmatpush.bf16.msra.mxu0 %v1652
        %1746 = vmatmul.bf16.gmra.mxu0 %v1485
        %v1747 = vpop.f32.mrf.mxu0
        %v1748 = vadd.f32 %v1734, %v1747
        %v1749 = vpop.f32.mrf.mxu0
        %v1750 = vadd.f32 %v1736, %v1749
        %1751 = vdwg.mxu0
        %1752 = vmatpush.bf16.msra.mxu0 %v1667
        %1753 = vmatpush.bf16.msra.mxu0 %v1666
        %1754 = vmatpush.bf16.msra.mxu0 %v1665
        %1755 = vmatpush.bf16.msra.mxu0 %v1664
        %1756 = vmatpush.bf16.msra.mxu0 %v1663
        %1757 = vmatpush.bf16.msra.mxu0 %v1662
        %1758 = vmatpush.bf16.msra.mxu0 %v1661
        %1759 = vmatpush.bf16.msra.mxu0 %v1660
        %1760 = vmatmul.bf16.gmra.mxu0 %v1487
        %v1761 = vpop.f32.mrf.mxu0
        %v1762 = vadd.f32 %v1748, %v1761
        %v1763 = vpop.f32.mrf.mxu0
        %v1764 = vadd.f32 %v1750, %v1763
        %1765 = vdwg.mxu0
        %1766 = vmatpush.bf16.msra.mxu0 0
        %1767 = vmatpush.bf16.msra.mxu0 0
        %1768 = vmatpush.bf16.msra.mxu0 0
        %1769 = vmatpush.bf16.msra.mxu0 0
        %1770 = vmatpush.bf16.msra.mxu0 %v1671
        %1771 = vmatpush.bf16.msra.mxu0 %v1670
        %1772 = vmatpush.bf16.msra.mxu0 %v1669
        %1773 = vmatpush.bf16.msra.mxu0 %v1668
        %1774 = vmatmul.bf16.gmra.mxu0 %v1708
        %v1775 = vpop.f32.mrf.mxu0
        %v1776 = vadd.f32 %v1762, %v1775
        %v1777 = vpop.f32.mrf.mxu0
        %v1778 = vadd.f32 %v1764, %v1777
        %1779 = vdwg.mxu0
        %v1780 = vsel %vm813, %v1776, 0.0
        %v1781 = vsel %vm813, %v1778, 0.0
        %v1782 = vadd.f32 %v1780, %v1781
        %v1783 = vrot.slane %v1782, 4
        %v1784 = vadd.f32 %v1782, %v1783
        %v1785 = vrot.slane %v1784, 2
        %v1786 = vadd.f32 %v1784, %v1785
        %v1787 = vrot.slane %v1786, 1
        %v1788 = vadd.f32 %v1786, %v1787
        %v1789 = vmul.f32 %v1788, %v1185
        %v1790 = vsub.f32 %v1776, %v1789
        %v1791 = vsub.f32 %v1778, %v1789
        %v1792 = vmul.f32 %v1790, %v1790
        %v1793 = vmul.f32 %v1791, %v1791
        %v1794 = vsel %vm813, %v1792, 0.0
        %v1795 = vsel %vm813, %v1793, 0.0
        %v1796 = vadd.f32 %v1794, %v1795
        %v1797 = vrot.slane %v1796, 4
        %v1798 = vadd.f32 %v1796, %v1797
        %v1799 = vrot.slane %v1798, 2
        %v1800 = vadd.f32 %v1798, %v1799
        %v1801 = vrot.slane %v1800, 1
        %v1802 = vadd.f32 %v1800, %v1801
        %v1803 = vmul.f32 %v1802, %v1185
        %v1804 = vadd.f32 %v1803, 1e-05
        %v1805 = vrsqrt.pop %v1804
        %v1806 = vmul.f32 %v1805, %v1804
        %v1807 = vmul.f32 %v1806, %v1805
        %v1808 = vmul.f32 0.5, %v1807
        %v1809 = vsub.f32 1.5, %v1808
        %v1810 = vmul.f32 %v1805, %v1809
        %vm1811 = vweird.f32 %v1804
        %vm1812 = vweird.f32 %v1805
        %vm1813 = vmor %vm1811, %vm1812
        %v1814 = vsel %vm1813, %v1805, %v1810
        %v1815 = vmul.f32 %v1790, %v1814
        %v1816 = vmul.f32 %v1791, %v1814
        %v1817 = vperm.slane %v1294, 1
        %v1818 = vmul.f32 %v1815, %v1817
        %v1819 = vmul.f32 %v1816, %v1817
        %v1820 = vperm.slane %v1294, 2
        %v1821 = vadd.f32 %v1818, %v1820
        %v1822 = vadd.f32 %v1819, %v1820
        %v1823 = vmax.f32 %v1821, 0.0
        %v1824 = vmax.f32 %v1822, 0.0
        %s1825 = scalar_lea.vmem %s5, 288
        %v1826 = vld [vmem:[%s1825] sm:$0xf]
        %v1827 = vld [vmem:[%s1825 + $0x4] sm:$0xf]
        %v1828 = vld [vmem:[%s1825 + $0x8] sm:$0xf]
        %v1829 = vld [vmem:[%s1825 + $0xc] sm:$0xf]
        %v1830 = vld [vmem:[%s1825 + $0x10] sm:$0xf]
        %v1831 = vld [vmem:[%s1825 + $0x14] sm:$0xf]
        %v1832 = vld [vmem:[%s1825 + $0x18] sm:$0xf]
        %v1833 = vld [vmem:[%s1825 + $0x1c] sm:$0xf]
        %v1834 = vld [vmem:[%s1825 + $0x20] sm:$0xf]
        %v1835 = vld [vmem:[%s1825 + $0x24] sm:$0xf]
        %v1836 = vld [vmem:[%s1825 + $0x28] sm:$0xf]
        %v1837 = vld [vmem:[%s1825 + $0x2c] sm:$0xf]
        %v1838 = vld [vmem:[%s1825 + $0x30] sm:$0xf]
        %v1839 = vld [vmem:[%s1825 + $0x34] sm:$0xf]
        %v1840 = vld [vmem:[%s1825 + $0x38] sm:$0xf]
        %v1841 = vld [vmem:[%s1825 + $0x3c] sm:$0xf]
        %v1842 = vld [vmem:[%s1825 + $0x40] sm:$0xf]
        %v1843 = vld [vmem:[%s1825 + $0x44] sm:$0xf]
        %v1844 = vld [vmem:[%s1825 + $0x48] sm:$0xf]
        %v1845 = vld [vmem:[%s1825 + $0x4c] sm:$0xf]
        %v1846 = vld [vmem:[%s1825 + $0x50] sm:$0xf]
        %v1847 = vld [vmem:[%s1825 + $0x54] sm:$0xf]
        %v1848 = vld [vmem:[%s1825 + $0x58] sm:$0xf]
        %v1849 = vld [vmem:[%s1825 + $0x5c] sm:$0xf]
        %v1850 = vld [vmem:[%s1825 + $0x60] sm:$0xf]
        %v1851 = vld [vmem:[%s1825 + $0x64] sm:$0xf]
        %v1852 = vld [vmem:[%s1825 + $0x68] sm:$0xf]
        %v1853 = vld [vmem:[%s1825 + $0x6c] sm:$0xf]
        %v1854 = vld [vmem:[%s1825 + $0x70] sm:$0xf]
        %v1855 = vld [vmem:[%s1825 + $0x74] sm:$0xf]
        %v1856 = vld [vmem:[%s1825 + $0x78] sm:$0xf]
        %v1857 = vld [vmem:[%s1825 + $0x7c] sm:$0xf]
        %v1858 = vld [vmem:[%s1825 + $0x80] sm:$0xf]
        %v1859 = vld [vmem:[%s1825 + $0x84] sm:$0xf]
        %v1860 = vld [vmem:[%s1825 + $0x88] sm:$0xf]
        %v1861 = vld [vmem:[%s1825 + $0x8c] sm:$0xf]
        %v1862 = vld [vmem:[%s1825 + $0x90] sm:$0xf]
        %v1863 = vld [vmem:[%s1825 + $0x94] sm:$0xf]
        %v1864 = vld [vmem:[%s1825 + $0x98] sm:$0xf]
        %v1865 = vld [vmem:[%s1825 + $0x9c] sm:$0xf]
        %v1866 = vld [vmem:[%s1825 + $0xa0] sm:$0xf]
        %v1867 = vld [vmem:[%s1825 + $0xa4] sm:$0xf]
        %v1868 = vld [vmem:[%s1825 + $0xa8] sm:$0xf]
        %v1869 = vld [vmem:[%s1825 + $0xac] sm:$0xf]
        %v1870 = vld [vmem:[%s1825 + $0xb0] sm:$0xf]
        %v1871 = vld [vmem:[%s1825 + $0xb4] sm:$0xf]
        %v1872 = vld [vmem:[%s1825 + $0xb8] sm:$0xf]
        %v1873 = vld [vmem:[%s1825 + $0xbc] sm:$0xf]
        %v1874 = vld [vmem:[%s1825 + $0xc0] sm:$0xf]
        %v1875 = vld [vmem:[%s1825 + $0xc4] sm:$0xf]
        %v1876 = vld [vmem:[%s1825 + $0xc8] sm:$0xf]
        %v1877 = vld [vmem:[%s1825 + $0xcc] sm:$0xf]
        %v1878 = vld [vmem:[%s1825 + $0xd0] sm:$0xf]
        %v1879 = vld [vmem:[%s1825 + $0xd4] sm:$0xf]
        %v1880 = vld [vmem:[%s1825 + $0xd8] sm:$0xf]
        %v1881 = vld [vmem:[%s1825 + $0xdc] sm:$0xf]
        %v1882 = vld [vmem:[%s1825 + $0xe0] sm:$0xf]
        %v1883 = vld [vmem:[%s1825 + $0xe4] sm:$0xf]
        %v1884 = vld [vmem:[%s1825 + $0xe8] sm:$0xf]
        %v1885 = vld [vmem:[%s1825 + $0xec] sm:$0xf]
        %v1886 = vld [vmem:[%s1825 + $0xf0] sm:$0xf]
        %v1887 = vld [vmem:[%s1825 + $0xf4] sm:$0xf]
        %v1888 = vld [vmem:[%s1825 + $0xf8] sm:$0xf]
        %v1889 = vld [vmem:[%s1825 + $0xfc] sm:$0xf]
        %v1890 = vld [vmem:[%s1825 + $0x100] sm:$0xf]
        %v1891 = vld [vmem:[%s1825 + $0x104] sm:$0xf]
        %v1892 = vld [vmem:[%s1825 + $0x108] sm:$0xf]
        %v1893 = vld [vmem:[%s1825 + $0x10c] sm:$0xf]
        %v1894 = vld [vmem:[%s1825 + $0x110] sm:$0xf]
        %v1895 = vld [vmem:[%s1825 + $0x114] sm:$0xf]
        %v1896 = vld [vmem:[%s1825 + $0x118] sm:$0xf]
        %v1897 = vld [vmem:[%s1825 + $0x11c] sm:$0xf]
        %s1898 = scalar_lea.vmem %s6, 4
        %v1899 = vld [vmem:[%s1898] sm:$0x7]
        %v1900 = vpack.c.bf16 %v1823, %v1823
        %v1901 = vpack.c.bf16 %v1824, %v1824
        %v1903 = vunpack.c.l.b16 %v1900
        %v1904 = vpack.c.b16 %v1903, %v1903
        %v1906 = vshrl.u32 %v1904, 16
        %v1909 = vrot.slane %v1906, 7
        %v1910 = vshll.u32 %v1904, 16
        %v1912 = vor.u32 %v1909, %v1910
        %v1914 = vrot.slane %v1910, 7
        %v1916 = vsel %vm660, %v1906, %v1912
        %v1917 = vsel %vm1314, %v1916, %v1914
        %v1918 = vrot.slane %v1906, 2
        %v1920 = vrot.slane %v1906, 1
        %v1921 = vrot.slane %v1910, 2
        %v1922 = vor.u32 %v1920, %v1921
        %v1924 = vrot.slane %v1910, 1
        %v1926 = vsel %vm660, %v1918, %v1922
        %v1927 = vsel %vm1314, %v1926, %v1924
        %v1929 = vunpack.c.l.b16 %v1901
        %v1930 = vpack.c.b16 %v1929, %v1929
        %v1932 = vshrl.u32 %v1930, 16
        %v1935 = vrot.slane %v1932, 7
        %v1936 = vshll.u32 %v1930, 16
        %v1938 = vor.u32 %v1935, %v1936
        %v1940 = vrot.slane %v1936, 7
        %v1942 = vsel %vm660, %v1932, %v1938
        %v1943 = vsel %vm1314, %v1942, %v1940
        %v1944 = vrot.slane %v1932, 2
        %v1946 = vrot.slane %v1932, 1
        %v1947 = vrot.slane %v1936, 2
        %v1948 = vor.u32 %v1946, %v1947
        %v1950 = vrot.slane %v1936, 1
        %v1952 = vsel %vm660, %v1944, %v1948
        %v1953 = vsel %vm1314, %v1952, %v1950
        %v1955 = vshrl.u32 %v1927, 16
        %v1957 = vshll.u32 %v1927, 16
        %v1959 = vrot.slane %v1957, 1
        %v1960 = vor.u32 %v1955, %v1959
        %1961 = vrot.lane.b32.xlu0 %v1960, 64
        %v1962 = vpop.permute.xlu0 %1961
        %v1964 = vrot.slane %v1927, 1
        %v1966 = vsel %vm813, %v1927, %v1962
        %v1968 = vshrl.u32 %v1917, 16
        %v1970 = vshll.u32 %v1917, 16
        %v1972 = vrot.slane %v1970, 1
        %v1973 = vor.u32 %v1968, %v1972
        %1974 = vrot.lane.b32.xlu0 %v1973, 64
        %v1975 = vpop.permute.xlu0 %1974
        %v1977 = vrot.slane %v1917, 1
        %v1979 = vsel %vm813, %v1917, %v1975
        %v1981 = vshrl.u32 %v1943, 16
        %v1983 = vshll.u32 %v1943, 16
        %v1985 = vrot.slane %v1983, 1
        %v1986 = vor.u32 %v1981, %v1985
        %1987 = vrot.lane.b32.xlu0 %v1986, 64
        %v1988 = vpop.permute.xlu0 %1987
        %v1990 = vrot.slane %v1943, 1
        %v1992 = vsel %vm813, %v1943, %v1988
        %v1994 = vshrl.u32 %v1953, 16
        %v1996 = vshll.u32 %v1953, 16
        %v1998 = vrot.slane %v1996, 1
        %v1999 = vor.u32 %v1994, %v1998
        %2000 = vrot.lane.b32.xlu0 %v1999, 64
        %v2001 = vpop.permute.xlu0 %2000
        %v2003 = vrot.slane %v1953, 1
        %v2005 = vsel %vm813, %v1953, %v2001
        %2007 = vrot.lane.b32.xlu0 %v1979, 64
        %v2008 = vpop.permute.xlu0 %2007
        %2009 = vrot.lane.b32.xlu0 %v1977, 64
        %v2010 = vpop.permute.xlu0 %2009
        %v2011 = vsel %vm1409, %v2008, %v2010
        %v2014 = vsel %vm813, %v1964, %v2008
        %2016 = vrot.lane.b32.xlu0 %v1966, 64
        %v2017 = vpop.permute.xlu0 %2016
        %2018 = vrot.lane.b32.xlu0 %v1964, 64
        %v2019 = vpop.permute.xlu0 %2018
        %v2020 = vsel %vm1409, %v2017, %v2019
        %v2023 = vsel %vm813, %v1977, %v2017
        %2025 = vrot.lane.b32.xlu0 %v1992, 64
        %v2026 = vpop.permute.xlu0 %2025
        %2027 = vrot.lane.b32.xlu0 %v1990, 64
        %v2028 = vpop.permute.xlu0 %2027
        %v2029 = vsel %vm1409, %v2026, %v2028
        %v2031 = vsel %vm813, %v1964, %v2026
        %2033 = vrot.lane.b32.xlu0 %v2005, 64
        %v2034 = vpop.permute.xlu0 %2033
        %2035 = vrot.lane.b32.xlu0 %v2003, 64
        %v2036 = vpop.permute.xlu0 %2035
        %v2037 = vsel %vm1409, %v2034, %v2036
        %v2040 = vsel %vm813, %v1990, %v2034
        %v2042 = vrot.slane %v1979, 6
        %v2043 = vrot.slane %v2023, 6
        %v2044 = vrot.slane %v2020, 6
        %v2045 = vrot.slane %v1992, 6
        %v2046 = vrot.slane %v1990, 6
        %v2048 = vrot.slane %v1966, 4
        %v2049 = vrot.slane %v2031, 4
        %v2050 = vrot.slane %v2029, 4
        %v2051 = vrot.slane %v2005, 4
        %v2052 = vrot.slane %v2003, 4
        %v2054 = vrot.slane %v1992, 2
        %v2055 = vrot.slane %v2040, 2
        %v2056 = vrot.slane %v2037, 2
        %v2057 = vrot.slane %v1990, 2
        %v2059 = vsel %vm689, %v1966, %v2042
        %v2061 = vsel %vm689, %v2014, %v2043
        %v2064 = vsel %vm689, %v2011, %v2044
        %v2066 = vsel %vm689, %v1966, %v2045
        %v2068 = vsel %vm689, %v1964, %v2046
        %v2070 = vsel %vm962, %v2059, %v2048
        %v2072 = vsel %vm962, %v2061, %v2049
        %v2074 = vsel %vm962, %v2064, %v2050
        %v2076 = vsel %vm962, %v2066, %v2051
        %v2078 = vsel %vm962, %v2068, %v2052
        %v2080 = vsel %vm969, %v2070, %v2054
        %v2083 = vsel %vm969, %v2072, %v2055
        %v2086 = vsel %vm969, %v2074, %v2056
        %v2088 = vsel %vm969, %v2076, %v2054
        %v2091 = vsel %vm969, %v2078, %v2057
        %v2092 = vperm.slane %v1899, 0
        %v2165 = vunpack.c.l.b16 %v1826
        %v2166 = vunpack.c.l.b16 %v1827
        %v2167 = vunpack.c.l.b16 %v1828
        %v2168 = vunpack.c.l.b16 %v1829
        %v2169 = vunpack.c.l.b16 %v1830
        %v2170 = vunpack.c.l.b16 %v1831
        %v2171 = vunpack.c.l.b16 %v1832
        %v2172 = vunpack.c.l.b16 %v1833
        %v2173 = vunpack.c.l.b16 %v1834
        %v2174 = vunpack.c.l.b16 %v1835
        %v2175 = vunpack.c.l.b16 %v1836
        %v2176 = vunpack.c.l.b16 %v1837
        %v2177 = vunpack.c.l.b16 %v1838
        %v2178 = vunpack.c.l.b16 %v1839
        %v2179 = vunpack.c.l.b16 %v1840
        %v2180 = vunpack.c.l.b16 %v1841
        %v2181 = vunpack.c.l.b16 %v1842
        %v2182 = vunpack.c.l.b16 %v1843
        %v2183 = vunpack.c.l.b16 %v1844
        %v2184 = vunpack.c.l.b16 %v1845
        %v2185 = vunpack.c.l.b16 %v1846
        %v2186 = vunpack.c.l.b16 %v1847
        %v2187 = vunpack.c.l.b16 %v1848
        %v2188 = vunpack.c.l.b16 %v1849
        %v2189 = vunpack.c.l.b16 %v1850
        %v2190 = vunpack.c.l.b16 %v1851
        %v2191 = vunpack.c.l.b16 %v1852
        %v2192 = vunpack.c.l.b16 %v1853
        %v2193 = vunpack.c.l.b16 %v1854
        %v2194 = vunpack.c.l.b16 %v1855
        %v2195 = vunpack.c.l.b16 %v1856
        %v2196 = vunpack.c.l.b16 %v1857
        %v2197 = vunpack.c.l.b16 %v1858
        %v2198 = vunpack.c.l.b16 %v1859
        %v2199 = vunpack.c.l.b16 %v1860
        %v2200 = vunpack.c.l.b16 %v1861
        %v2201 = vunpack.c.l.b16 %v1862
        %v2202 = vunpack.c.l.b16 %v1863
        %v2203 = vunpack.c.l.b16 %v1864
        %v2204 = vunpack.c.l.b16 %v1865
        %v2205 = vunpack.c.l.b16 %v1866
        %v2206 = vunpack.c.l.b16 %v1867
        %v2207 = vunpack.c.l.b16 %v1868
        %v2208 = vunpack.c.l.b16 %v1869
        %v2209 = vunpack.c.l.b16 %v1870
        %v2210 = vunpack.c.l.b16 %v1871
        %v2211 = vunpack.c.l.b16 %v1872
        %v2212 = vunpack.c.l.b16 %v1873
        %v2213 = vunpack.c.l.b16 %v1874
        %v2214 = vunpack.c.l.b16 %v1875
        %v2215 = vunpack.c.l.b16 %v1876
        %v2216 = vunpack.c.l.b16 %v1877
        %v2217 = vunpack.c.l.b16 %v1878
        %v2218 = vunpack.c.l.b16 %v1879
        %v2219 = vunpack.c.l.b16 %v1880
        %v2220 = vunpack.c.l.b16 %v1881
        %v2221 = vunpack.c.l.b16 %v1882
        %v2222 = vunpack.c.l.b16 %v1883
        %v2223 = vunpack.c.l.b16 %v1884
        %v2224 = vunpack.c.l.b16 %v1885
        %v2225 = vunpack.c.l.b16 %v1886
        %v2226 = vunpack.c.l.b16 %v1887
        %v2227 = vunpack.c.l.b16 %v1888
        %v2228 = vunpack.c.l.b16 %v1889
        %v2229 = vunpack.c.l.b16 %v1890
        %v2230 = vunpack.c.l.b16 %v1891
        %v2231 = vunpack.c.l.b16 %v1892
        %v2232 = vunpack.c.l.b16 %v1893
        %v2233 = vunpack.c.l.b16 %v1894
        %v2234 = vunpack.c.l.b16 %v1895
        %v2235 = vunpack.c.l.b16 %v1896
        %v2236 = vunpack.c.l.b16 %v1897
        %v2237 = vpack.c.b16 %v2166, %v2165
        %v2238 = vpack.c.b16 %v2168, %v2167
        %v2239 = vpack.c.b16 %v2170, %v2169
        %v2240 = vpack.c.b16 %v2172, %v2171
        %v2241 = vpack.c.b16 %v2174, %v2173
        %v2242 = vpack.c.b16 %v2176, %v2175
        %v2243 = vpack.c.b16 %v2178, %v2177
        %v2244 = vpack.c.b16 %v2180, %v2179
        %v2245 = vpack.c.b16 %v2182, %v2181
        %v2246 = vpack.c.b16 %v2184, %v2183
        %v2247 = vpack.c.b16 %v2186, %v2185
        %v2248 = vpack.c.b16 %v2188, %v2187
        %v2249 = vpack.c.b16 %v2190, %v2189
        %v2250 = vpack.c.b16 %v2192, %v2191
        %v2251 = vpack.c.b16 %v2194, %v2193
        %v2252 = vpack.c.b16 %v2196, %v2195
        %v2253 = vpack.c.b16 %v2198, %v2197
        %v2254 = vpack.c.b16 %v2200, %v2199
        %v2255 = vpack.c.b16 %v2202, %v2201
        %v2256 = vpack.c.b16 %v2204, %v2203
        %v2257 = vpack.c.b16 %v2206, %v2205
        %v2258 = vpack.c.b16 %v2208, %v2207
        %v2259 = vpack.c.b16 %v2210, %v2209
        %v2260 = vpack.c.b16 %v2212, %v2211
        %v2261 = vpack.c.b16 %v2214, %v2213
        %v2262 = vpack.c.b16 %v2216, %v2215
        %v2263 = vpack.c.b16 %v2218, %v2217
        %v2264 = vpack.c.b16 %v2220, %v2219
        %v2265 = vpack.c.b16 %v2222, %v2221
        %v2266 = vpack.c.b16 %v2224, %v2223
        %v2267 = vpack.c.b16 %v2226, %v2225
        %v2268 = vpack.c.b16 %v2228, %v2227
        %v2269 = vpack.c.b16 %v2230, %v2229
        %v2270 = vpack.c.b16 %v2232, %v2231
        %v2271 = vpack.c.b16 %v2234, %v2233
        %v2272 = vpack.c.b16 %v2236, %v2235
        %v2309 = vsel %vm813, %v2091, 0
        %2311 = vmatpush.bf16.msra.mxu0 %v2244
        %2312 = vmatpush.bf16.msra.mxu0 %v2243
        %2313 = vmatpush.bf16.msra.mxu0 %v2242
        %2314 = vmatpush.bf16.msra.mxu0 %v2241
        %2315 = vmatpush.bf16.msra.mxu0 %v2240
        %2316 = vmatpush.bf16.msra.mxu0 %v2239
        %2317 = vmatpush.bf16.msra.mxu0 %v2238
        %2318 = vmatpush.bf16.msra.mxu0 %v2237
        %2319 = vmatmul.bf16.gmra.mxu0 %v2080
        %v2320 = vpop.f32.mrf.mxu0
        %v2321 = vadd.f32 %v2092, %v2320
        %v2322 = vpop.f32.mrf.mxu0
        %v2323 = vadd.f32 %v2092, %v2322
        %2324 = vdwg.mxu0
        %2325 = vmatpush.bf16.msra.mxu0 %v2252
        %2326 = vmatpush.bf16.msra.mxu0 %v2251
        %2327 = vmatpush.bf16.msra.mxu0 %v2250
        %2328 = vmatpush.bf16.msra.mxu0 %v2249
        %2329 = vmatpush.bf16.msra.mxu0 %v2248
        %2330 = vmatpush.bf16.msra.mxu0 %v2247
        %2331 = vmatpush.bf16.msra.mxu0 %v2246
        %2332 = vmatpush.bf16.msra.mxu0 %v2245
        %2333 = vmatmul.bf16.gmra.mxu0 %v2083
        %v2334 = vpop.f32.mrf.mxu0
        %v2335 = vadd.f32 %v2321, %v2334
        %v2336 = vpop.f32.mrf.mxu0
        %v2337 = vadd.f32 %v2323, %v2336
        %2338 = vdwg.mxu0
        %2339 = vmatpush.bf16.msra.mxu0 %v2260
        %2340 = vmatpush.bf16.msra.mxu0 %v2259
        %2341 = vmatpush.bf16.msra.mxu0 %v2258
        %2342 = vmatpush.bf16.msra.mxu0 %v2257
        %2343 = vmatpush.bf16.msra.mxu0 %v2256
        %2344 = vmatpush.bf16.msra.mxu0 %v2255
        %2345 = vmatpush.bf16.msra.mxu0 %v2254
        %2346 = vmatpush.bf16.msra.mxu0 %v2253
        %2347 = vmatmul.bf16.gmra.mxu0 %v2086
        %v2348 = vpop.f32.mrf.mxu0
        %v2349 = vadd.f32 %v2335, %v2348
        %v2350 = vpop.f32.mrf.mxu0
        %v2351 = vadd.f32 %v2337, %v2350
        %2352 = vdwg.mxu0
        %2353 = vmatpush.bf16.msra.mxu0 %v2268
        %2354 = vmatpush.bf16.msra.mxu0 %v2267
        %2355 = vmatpush.bf16.msra.mxu0 %v2266
        %2356 = vmatpush.bf16.msra.mxu0 %v2265
        %2357 = vmatpush.bf16.msra.mxu0 %v2264
        %2358 = vmatpush.bf16.msra.mxu0 %v2263
        %2359 = vmatpush.bf16.msra.mxu0 %v2262
        %2360 = vmatpush.bf16.msra.mxu0 %v2261
        %2361 = vmatmul.bf16.gmra.mxu0 %v2088
        %v2362 = vpop.f32.mrf.mxu0
        %v2363 = vadd.f32 %v2349, %v2362
        %v2364 = vpop.f32.mrf.mxu0
        %v2365 = vadd.f32 %v2351, %v2364
        %2366 = vdwg.mxu0
        %2367 = vmatpush.bf16.msra.mxu0 0
        %2368 = vmatpush.bf16.msra.mxu0 0
        %2369 = vmatpush.bf16.msra.mxu0 0
        %2370 = vmatpush.bf16.msra.mxu0 0
        %2371 = vmatpush.bf16.msra.mxu0 %v2272
        %2372 = vmatpush.bf16.msra.mxu0 %v2271
        %2373 = vmatpush.bf16.msra.mxu0 %v2270
        %2374 = vmatpush.bf16.msra.mxu0 %v2269
        %2375 = vmatmul.bf16.gmra.mxu0 %v2309
        %v2376 = vpop.f32.mrf.mxu0
        %v2377 = vadd.f32 %v2363, %v2376
        %v2378 = vpop.f32.mrf.mxu0
        %v2379 = vadd.f32 %v2365, %v2378
        %2380 = vdwg.mxu0
        %v2381 = vsel %vm813, %v2377, 0.0
        %v2382 = vsel %vm813, %v2379, 0.0
        %v2383 = vadd.f32 %v2381, %v2382
        %v2384 = vrot.slane %v2383, 4
        %v2385 = vadd.f32 %v2383, %v2384
        %v2386 = vrot.slane %v2385, 2
        %v2387 = vadd.f32 %v2385, %v2386
        %v2388 = vrot.slane %v2387, 1
        %v2389 = vadd.f32 %v2387, %v2388
        %v2390 = vmul.f32 %v2389, %v1185
        %v2391 = vsub.f32 %v2377, %v2390
        %v2392 = vsub.f32 %v2379, %v2390
        %v2393 = vmul.f32 %v2391, %v2391
        %v2394 = vmul.f32 %v2392, %v2392
        %v2395 = vsel %vm813, %v2393, 0.0
        %v2396 = vsel %vm813, %v2394, 0.0
        %v2397 = vadd.f32 %v2395, %v2396
        %v2398 = vrot.slane %v2397, 4
        %v2399 = vadd.f32 %v2397, %v2398
        %v2400 = vrot.slane %v2399, 2
        %v2401 = vadd.f32 %v2399, %v2400
        %v2402 = vrot.slane %v2401, 1
        %v2403 = vadd.f32 %v2401, %v2402
        %v2404 = vmul.f32 %v2403, %v1185
        %v2405 = vadd.f32 %v2404, 1e-05
        %v2406 = vrsqrt.pop %v2405
        %v2407 = vmul.f32 %v2406, %v2405
        %v2408 = vmul.f32 %v2407, %v2406
        %v2409 = vmul.f32 0.5, %v2408
        %v2410 = vsub.f32 1.5, %v2409
        %v2411 = vmul.f32 %v2406, %v2410
        %vm2412 = vweird.f32 %v2405
        %vm2413 = vweird.f32 %v2406
        %vm2414 = vmor %vm2412, %vm2413
        %v2415 = vsel %vm2414, %v2406, %v2411
        %v2416 = vmul.f32 %v2391, %v2415
        %v2417 = vmul.f32 %v2392, %v2415
        %v2418 = vperm.slane %v1899, 1
        %v2419 = vmul.f32 %v2416, %v2418
        %v2420 = vmul.f32 %v2417, %v2418
        %v2421 = vperm.slane %v1899, 2
        %v2422 = vadd.f32 %v2419, %v2421
        %v2423 = vadd.f32 %v2420, %v2421
        %v2424 = vadd.f32 %v2422, %v1220
        %v2425 = vadd.f32 %v2423, %v1221
        %s2426 = scalar_lea.vmem %s5, 576
        %v2427 = vld [vmem:[%s2426] sm:$0xf]
        %v2428 = vld [vmem:[%s2426 + $0x4] sm:$0xf]
        %v2429 = vld [vmem:[%s2426 + $0x8] sm:$0xf]
        %v2430 = vld [vmem:[%s2426 + $0xc] sm:$0xf]
        %v2431 = vld [vmem:[%s2426 + $0x10] sm:$0xf]
        %v2432 = vld [vmem:[%s2426 + $0x14] sm:$0xf]
        %v2433 = vld [vmem:[%s2426 + $0x18] sm:$0xf]
        %v2434 = vld [vmem:[%s2426 + $0x1c] sm:$0xf]
        %v2435 = vld [vmem:[%s2426 + $0x20] sm:$0xf]
        %v2436 = vld [vmem:[%s2426 + $0x24] sm:$0xf]
        %v2437 = vld [vmem:[%s2426 + $0x28] sm:$0xf]
        %v2438 = vld [vmem:[%s2426 + $0x2c] sm:$0xf]
        %v2439 = vld [vmem:[%s2426 + $0x30] sm:$0xf]
        %v2440 = vld [vmem:[%s2426 + $0x34] sm:$0xf]
        %v2441 = vld [vmem:[%s2426 + $0x38] sm:$0xf]
        %v2442 = vld [vmem:[%s2426 + $0x3c] sm:$0xf]
        %v2443 = vld [vmem:[%s2426 + $0x40] sm:$0xf]
        %v2444 = vld [vmem:[%s2426 + $0x44] sm:$0xf]
        %v2445 = vld [vmem:[%s2426 + $0x48] sm:$0xf]
        %v2446 = vld [vmem:[%s2426 + $0x4c] sm:$0xf]
        %v2447 = vld [vmem:[%s2426 + $0x50] sm:$0xf]
        %v2448 = vld [vmem:[%s2426 + $0x54] sm:$0xf]
        %v2449 = vld [vmem:[%s2426 + $0x58] sm:$0xf]
        %v2450 = vld [vmem:[%s2426 + $0x5c] sm:$0xf]
        %v2451 = vld [vmem:[%s2426 + $0x60] sm:$0xf]
        %v2452 = vld [vmem:[%s2426 + $0x64] sm:$0xf]
        %v2453 = vld [vmem:[%s2426 + $0x68] sm:$0xf]
        %v2454 = vld [vmem:[%s2426 + $0x6c] sm:$0xf]
        %v2455 = vld [vmem:[%s2426 + $0x70] sm:$0xf]
        %v2456 = vld [vmem:[%s2426 + $0x74] sm:$0xf]
        %v2457 = vld [vmem:[%s2426 + $0x78] sm:$0xf]
        %v2458 = vld [vmem:[%s2426 + $0x7c] sm:$0xf]
        %v2459 = vld [vmem:[%s2426 + $0x80] sm:$0xf]
        %v2460 = vld [vmem:[%s2426 + $0x84] sm:$0xf]
        %v2461 = vld [vmem:[%s2426 + $0x88] sm:$0xf]
        %v2462 = vld [vmem:[%s2426 + $0x8c] sm:$0xf]
        %v2463 = vld [vmem:[%s2426 + $0x90] sm:$0xf]
        %v2464 = vld [vmem:[%s2426 + $0x94] sm:$0xf]
        %v2465 = vld [vmem:[%s2426 + $0x98] sm:$0xf]
        %v2466 = vld [vmem:[%s2426 + $0x9c] sm:$0xf]
        %v2467 = vld [vmem:[%s2426 + $0xa0] sm:$0xf]
        %v2468 = vld [vmem:[%s2426 + $0xa4] sm:$0xf]
        %v2469 = vld [vmem:[%s2426 + $0xa8] sm:$0xf]
        %v2470 = vld [vmem:[%s2426 + $0xac] sm:$0xf]
        %v2471 = vld [vmem:[%s2426 + $0xb0] sm:$0xf]
        %v2472 = vld [vmem:[%s2426 + $0xb4] sm:$0xf]
        %v2473 = vld [vmem:[%s2426 + $0xb8] sm:$0xf]
        %v2474 = vld [vmem:[%s2426 + $0xbc] sm:$0xf]
        %v2475 = vld [vmem:[%s2426 + $0xc0] sm:$0xf]
        %v2476 = vld [vmem:[%s2426 + $0xc4] sm:$0xf]
        %v2477 = vld [vmem:[%s2426 + $0xc8] sm:$0xf]
        %v2478 = vld [vmem:[%s2426 + $0xcc] sm:$0xf]
        %v2479 = vld [vmem:[%s2426 + $0xd0] sm:$0xf]
        %v2480 = vld [vmem:[%s2426 + $0xd4] sm:$0xf]
        %v2481 = vld [vmem:[%s2426 + $0xd8] sm:$0xf]
        %v2482 = vld [vmem:[%s2426 + $0xdc] sm:$0xf]
        %v2483 = vld [vmem:[%s2426 + $0xe0] sm:$0xf]
        %v2484 = vld [vmem:[%s2426 + $0xe4] sm:$0xf]
        %v2485 = vld [vmem:[%s2426 + $0xe8] sm:$0xf]
        %v2486 = vld [vmem:[%s2426 + $0xec] sm:$0xf]
        %v2487 = vld [vmem:[%s2426 + $0xf0] sm:$0xf]
        %v2488 = vld [vmem:[%s2426 + $0xf4] sm:$0xf]
        %v2489 = vld [vmem:[%s2426 + $0xf8] sm:$0xf]
        %v2490 = vld [vmem:[%s2426 + $0xfc] sm:$0xf]
        %v2491 = vld [vmem:[%s2426 + $0x100] sm:$0xf]
        %v2492 = vld [vmem:[%s2426 + $0x104] sm:$0xf]
        %v2493 = vld [vmem:[%s2426 + $0x108] sm:$0xf]
        %v2494 = vld [vmem:[%s2426 + $0x10c] sm:$0xf]
        %v2495 = vld [vmem:[%s2426 + $0x110] sm:$0xf]
        %v2496 = vld [vmem:[%s2426 + $0x114] sm:$0xf]
        %v2497 = vld [vmem:[%s2426 + $0x118] sm:$0xf]
        %v2498 = vld [vmem:[%s2426 + $0x11c] sm:$0xf]
        %s2499 = scalar_lea.vmem %s6, 8
        %v2500 = vld [vmem:[%s2499] sm:$0x7]
        %v2501 = vpack.c.bf16 %v2424, %v2424
        %v2502 = vpack.c.bf16 %v2425, %v2425
        %v2504 = vunpack.c.l.b16 %v2501
        %v2505 = vpack.c.b16 %v2504, %v2504
        %v2507 = vshrl.u32 %v2505, 16
        %v2510 = vrot.slane %v2507, 7
        %v2511 = vshll.u32 %v2505, 16
        %v2513 = vor.u32 %v2510, %v2511
        %v2515 = vrot.slane %v2511, 7
        %v2517 = vsel %vm660, %v2507, %v2513
        %v2518 = vsel %vm1314, %v2517, %v2515
        %v2519 = vrot.slane %v2507, 2
        %v2521 = vrot.slane %v2507, 1
        %v2522 = vrot.slane %v2511, 2
        %v2523 = vor.u32 %v2521, %v2522
        %v2525 = vrot.slane %v2511, 1
        %v2527 = vsel %vm660, %v2519, %v2523
        %v2528 = vsel %vm1314, %v2527, %v2525
        %v2530 = vunpack.c.l.b16 %v2502
        %v2531 = vpack.c.b16 %v2530, %v2530
        %v2533 = vshrl.u32 %v2531, 16
        %v2536 = vrot.slane %v2533, 7
        %v2537 = vshll.u32 %v2531, 16
        %v2539 = vor.u32 %v2536, %v2537
        %v2541 = vrot.slane %v2537, 7
        %v2543 = vsel %vm660, %v2533, %v2539
        %v2544 = vsel %vm1314, %v2543, %v2541
        %v2545 = vrot.slane %v2533, 2
        %v2547 = vrot.slane %v2533, 1
        %v2548 = vrot.slane %v2537, 2
        %v2549 = vor.u32 %v2547, %v2548
        %v2551 = vrot.slane %v2537, 1
        %v2553 = vsel %vm660, %v2545, %v2549
        %v2554 = vsel %vm1314, %v2553, %v2551
        %v2556 = vshrl.u32 %v2528, 16
        %v2558 = vshll.u32 %v2528, 16
        %v2560 = vrot.slane %v2558, 1
        %v2561 = vor.u32 %v2556, %v2560
        %2562 = vrot.lane.b32.xlu0 %v2561, 64
        %v2563 = vpop.permute.xlu0 %2562
        %v2565 = vrot.slane %v2528, 1
        %v2567 = vsel %vm813, %v2528, %v2563
        %v2569 = vshrl.u32 %v2518, 16
        %v2571 = vshll.u32 %v2518, 16
        %v2573 = vrot.slane %v2571, 1
        %v2574 = vor.u32 %v2569, %v2573
        %2575 = vrot.lane.b32.xlu0 %v2574, 64
        %v2576 = vpop.permute.xlu0 %2575
        %v2578 = vrot.slane %v2518, 1
        %v2580 = vsel %vm813, %v2518, %v2576
        %v2582 = vshrl.u32 %v2544, 16
        %v2584 = vshll.u32 %v2544, 16
        %v2586 = vrot.slane %v2584, 1
        %v2587 = vor.u32 %v2582, %v2586
        %2588 = vrot.lane.b32.xlu0 %v2587, 64
        %v2589 = vpop.permute.xlu0 %2588
        %v2591 = vrot.slane %v2544, 1
        %v2593 = vsel %vm813, %v2544, %v2589
        %v2595 = vshrl.u32 %v2554, 16
        %v2597 = vshll.u32 %v2554, 16
        %v2599 = vrot.slane %v2597, 1
        %v2600 = vor.u32 %v2595, %v2599
        %2601 = vrot.lane.b32.xlu0 %v2600, 64
        %v2602 = vpop.permute.xlu0 %2601
        %v2604 = vrot.slane %v2554, 1
        %v2606 = vsel %vm813, %v2554, %v2602
        %2608 = vrot.lane.b32.xlu0 %v2580, 64
        %v2609 = vpop.permute.xlu0 %2608
        %2610 = vrot.lane.b32.xlu0 %v2578, 64
        %v2611 = vpop.permute.xlu0 %2610
        %v2612 = vsel %vm1409, %v2609, %v2611
        %v2615 = vsel %vm813, %v2565, %v2609
        %2617 = vrot.lane.b32.xlu0 %v2567, 64
        %v2618 = vpop.permute.xlu0 %2617
        %2619 = vrot.lane.b32.xlu0 %v2565, 64
        %v2620 = vpop.permute.xlu0 %2619
        %v2621 = vsel %vm1409, %v2618, %v2620
        %v2624 = vsel %vm813, %v2578, %v2618
        %2626 = vrot.lane.b32.xlu0 %v2593, 64
        %v2627 = vpop.permute.xlu0 %2626
        %2628 = vrot.lane.b32.xlu0 %v2591, 64
        %v2629 = vpop.permute.xlu0 %2628
        %v2630 = vsel %vm1409, %v2627, %v2629
        %v2632 = vsel %vm813, %v2565, %v2627
        %2634 = vrot.lane.b32.xlu0 %v2606, 64
        %v2635 = vpop.permute.xlu0 %2634
        %2636 = vrot.lane.b32.xlu0 %v2604, 64
        %v2637 = vpop.permute.xlu0 %2636
        %v2638 = vsel %vm1409, %v2635, %v2637
        %v2641 = vsel %vm813, %v2591, %v2635
        %v2643 = vrot.slane %v2580, 6
        %v2644 = vrot.slane %v2624, 6
        %v2645 = vrot.slane %v2621, 6
        %v2646 = vrot.slane %v2593, 6
        %v2647 = vrot.slane %v2591, 6
        %v2649 = vrot.slane %v2567, 4
        %v2650 = vrot.slane %v2632, 4
        %v2651 = vrot.slane %v2630, 4
        %v2652 = vrot.slane %v2606, 4
        %v2653 = vrot.slane %v2604, 4
        %v2655 = vrot.slane %v2593, 2
        %v2656 = vrot.slane %v2641, 2
        %v2657 = vrot.slane %v2638, 2
        %v2658 = vrot.slane %v2591, 2
        %v2660 = vsel %vm689, %v2567, %v2643
        %v2662 = vsel %vm689, %v2615, %v2644
        %v2665 = vsel %vm689, %v2612, %v2645
        %v2667 = vsel %vm689, %v2567, %v2646
        %v2669 = vsel %vm689, %v2565, %v2647
        %v2671 = vsel %vm962, %v2660, %v2649
        %v2673 = vsel %vm962, %v2662, %v2650
        %v2675 = vsel %vm962, %v2665, %v2651
        %v2677 = vsel %vm962, %v2667, %v2652
        %v2679 = vsel %vm962, %v2669, %v2653
        %v2681 = vsel %vm969, %v2671, %v2655
        %v2684 = vsel %vm969, %v2673, %v2656
        %v2687 = vsel %vm969, %v2675, %v2657
        %v2689 = vsel %vm969, %v2677, %v2655
        %v2692 = vsel %vm969, %v2679, %v2658
        %v2693 = vperm.slane %v2500, 0
        %v2766 = vunpack.c.l.b16 %v2427
        %v2767 = vunpack.c.l.b16 %v2428
        %v2768 = vunpack.c.l.b16 %v2429
        %v2769 = vunpack.c.l.b16 %v2430
        %v2770 = vunpack.c.l.b16 %v2431
        %v2771 = vunpack.c.l.b16 %v2432
        %v2772 = vunpack.c.l.b16 %v2433
        %v2773 = vunpack.c.l.b16 %v2434
        %v2774 = vunpack.c.l.b16 %v2435
        %v2775 = vunpack.c.l.b16 %v2436
        %v2776 = vunpack.c.l.b16 %v2437
        %v2777 = vunpack.c.l.b16 %v2438
        %v2778 = vunpack.c.l.b16 %v2439
        %v2779 = vunpack.c.l.b16 %v2440
        %v2780 = vunpack.c.l.b16 %v2441
        %v2781 = vunpack.c.l.b16 %v2442
        %v2782 = vunpack.c.l.b16 %v2443
        %v2783 = vunpack.c.l.b16 %v2444
        %v2784 = vunpack.c.l.b16 %v2445
        %v2785 = vunpack.c.l.b16 %v2446
        %v2786 = vunpack.c.l.b16 %v2447
        %v2787 = vunpack.c.l.b16 %v2448
        %v2788 = vunpack.c.l.b16 %v2449
        %v2789 = vunpack.c.l.b16 %v2450
        %v2790 = vunpack.c.l.b16 %v2451
        %v2791 = vunpack.c.l.b16 %v2452
        %v2792 = vunpack.c.l.b16 %v2453
        %v2793 = vunpack.c.l.b16 %v2454
        %v2794 = vunpack.c.l.b16 %v2455
        %v2795 = vunpack.c.l.b16 %v2456
        %v2796 = vunpack.c.l.b16 %v2457
        %v2797 = vunpack.c.l.b16 %v2458
        %v2798 = vunpack.c.l.b16 %v2459
        %v2799 = vunpack.c.l.b16 %v2460
        %v2800 = vunpack.c.l.b16 %v2461
        %v2801 = vunpack.c.l.b16 %v2462
        %v2802 = vunpack.c.l.b16 %v2463
        %v2803 = vunpack.c.l.b16 %v2464
        %v2804 = vunpack.c.l.b16 %v2465
        %v2805 = vunpack.c.l.b16 %v2466
        %v2806 = vunpack.c.l.b16 %v2467
        %v2807 = vunpack.c.l.b16 %v2468
        %v2808 = vunpack.c.l.b16 %v2469
        %v2809 = vunpack.c.l.b16 %v2470
        %v2810 = vunpack.c.l.b16 %v2471
        %v2811 = vunpack.c.l.b16 %v2472
        %v2812 = vunpack.c.l.b16 %v2473
        %v2813 = vunpack.c.l.b16 %v2474
        %v2814 = vunpack.c.l.b16 %v2475
        %v2815 = vunpack.c.l.b16 %v2476
        %v2816 = vunpack.c.l.b16 %v2477
        %v2817 = vunpack.c.l.b16 %v2478
        %v2818 = vunpack.c.l.b16 %v2479
        %v2819 = vunpack.c.l.b16 %v2480
        %v2820 = vunpack.c.l.b16 %v2481
        %v2821 = vunpack.c.l.b16 %v2482
        %v2822 = vunpack.c.l.b16 %v2483
        %v2823 = vunpack.c.l.b16 %v2484
        %v2824 = vunpack.c.l.b16 %v2485
        %v2825 = vunpack.c.l.b16 %v2486
        %v2826 = vunpack.c.l.b16 %v2487
        %v2827 = vunpack.c.l.b16 %v2488
        %v2828 = vunpack.c.l.b16 %v2489
        %v2829 = vunpack.c.l.b16 %v2490
        %v2830 = vunpack.c.l.b16 %v2491
        %v2831 = vunpack.c.l.b16 %v2492
        %v2832 = vunpack.c.l.b16 %v2493
        %v2833 = vunpack.c.l.b16 %v2494
        %v2834 = vunpack.c.l.b16 %v2495
        %v2835 = vunpack.c.l.b16 %v2496
        %v2836 = vunpack.c.l.b16 %v2497
        %v2837 = vunpack.c.l.b16 %v2498
        %v2838 = vpack.c.b16 %v2767, %v2766
        %v2839 = vpack.c.b16 %v2769, %v2768
        %v2840 = vpack.c.b16 %v2771, %v2770
        %v2841 = vpack.c.b16 %v2773, %v2772
        %v2842 = vpack.c.b16 %v2775, %v2774
        %v2843 = vpack.c.b16 %v2777, %v2776
        %v2844 = vpack.c.b16 %v2779, %v2778
        %v2845 = vpack.c.b16 %v2781, %v2780
        %v2846 = vpack.c.b16 %v2783, %v2782
        %v2847 = vpack.c.b16 %v2785, %v2784
        %v2848 = vpack.c.b16 %v2787, %v2786
        %v2849 = vpack.c.b16 %v2789, %v2788
        %v2850 = vpack.c.b16 %v2791, %v2790
        %v2851 = vpack.c.b16 %v2793, %v2792
        %v2852 = vpack.c.b16 %v2795, %v2794
        %v2853 = vpack.c.b16 %v2797, %v2796
        %v2854 = vpack.c.b16 %v2799, %v2798
        %v2855 = vpack.c.b16 %v2801, %v2800
        %v2856 = vpack.c.b16 %v2803, %v2802
        %v2857 = vpack.c.b16 %v2805, %v2804
        %v2858 = vpack.c.b16 %v2807, %v2806
        %v2859 = vpack.c.b16 %v2809, %v2808
        %v2860 = vpack.c.b16 %v2811, %v2810
        %v2861 = vpack.c.b16 %v2813, %v2812
        %v2862 = vpack.c.b16 %v2815, %v2814
        %v2863 = vpack.c.b16 %v2817, %v2816
        %v2864 = vpack.c.b16 %v2819, %v2818
        %v2865 = vpack.c.b16 %v2821, %v2820
        %v2866 = vpack.c.b16 %v2823, %v2822
        %v2867 = vpack.c.b16 %v2825, %v2824
        %v2868 = vpack.c.b16 %v2827, %v2826
        %v2869 = vpack.c.b16 %v2829, %v2828
        %v2870 = vpack.c.b16 %v2831, %v2830
        %v2871 = vpack.c.b16 %v2833, %v2832
        %v2872 = vpack.c.b16 %v2835, %v2834
        %v2873 = vpack.c.b16 %v2837, %v2836
        %v2910 = vsel %vm813, %v2692, 0
        %2912 = vmatpush.bf16.msra.mxu0 %v2845
        %2913 = vmatpush.bf16.msra.mxu0 %v2844
        %2914 = vmatpush.bf16.msra.mxu0 %v2843
        %2915 = vmatpush.bf16.msra.mxu0 %v2842
        %2916 = vmatpush.bf16.msra.mxu0 %v2841
        %2917 = vmatpush.bf16.msra.mxu0 %v2840
        %2918 = vmatpush.bf16.msra.mxu0 %v2839
        %2919 = vmatpush.bf16.msra.mxu0 %v2838
        %2920 = vmatmul.bf16.gmra.mxu0 %v2681
        %v2921 = vpop.f32.mrf.mxu0
        %v2922 = vadd.f32 %v2693, %v2921
        %v2923 = vpop.f32.mrf.mxu0
        %v2924 = vadd.f32 %v2693, %v2923
        %2925 = vdwg.mxu0
        %2926 = vmatpush.bf16.msra.mxu0 %v2853
        %2927 = vmatpush.bf16.msra.mxu0 %v2852
        %2928 = vmatpush.bf16.msra.mxu0 %v2851
        %2929 = vmatpush.bf16.msra.mxu0 %v2850
        %2930 = vmatpush.bf16.msra.mxu0 %v2849
        %2931 = vmatpush.bf16.msra.mxu0 %v2848
        %2932 = vmatpush.bf16.msra.mxu0 %v2847
        %2933 = vmatpush.bf16.msra.mxu0 %v2846
        %2934 = vmatmul.bf16.gmra.mxu0 %v2684
        %v2935 = vpop.f32.mrf.mxu0
        %v2936 = vadd.f32 %v2922, %v2935
        %v2937 = vpop.f32.mrf.mxu0
        %v2938 = vadd.f32 %v2924, %v2937
        %2939 = vdwg.mxu0
        %2940 = vmatpush.bf16.msra.mxu0 %v2861
        %2941 = vmatpush.bf16.msra.mxu0 %v2860
        %2942 = vmatpush.bf16.msra.mxu0 %v2859
        %2943 = vmatpush.bf16.msra.mxu0 %v2858
        %2944 = vmatpush.bf16.msra.mxu0 %v2857
        %2945 = vmatpush.bf16.msra.mxu0 %v2856
        %2946 = vmatpush.bf16.msra.mxu0 %v2855
        %2947 = vmatpush.bf16.msra.mxu0 %v2854
        %2948 = vmatmul.bf16.gmra.mxu0 %v2687
        %v2949 = vpop.f32.mrf.mxu0
        %v2950 = vadd.f32 %v2936, %v2949
        %v2951 = vpop.f32.mrf.mxu0
        %v2952 = vadd.f32 %v2938, %v2951
        %2953 = vdwg.mxu0
        %2954 = vmatpush.bf16.msra.mxu0 %v2869
        %2955 = vmatpush.bf16.msra.mxu0 %v2868
        %2956 = vmatpush.bf16.msra.mxu0 %v2867
        %2957 = vmatpush.bf16.msra.mxu0 %v2866
        %2958 = vmatpush.bf16.msra.mxu0 %v2865
        %2959 = vmatpush.bf16.msra.mxu0 %v2864
        %2960 = vmatpush.bf16.msra.mxu0 %v2863
        %2961 = vmatpush.bf16.msra.mxu0 %v2862
        %2962 = vmatmul.bf16.gmra.mxu0 %v2689
        %v2963 = vpop.f32.mrf.mxu0
        %v2964 = vadd.f32 %v2950, %v2963
        %v2965 = vpop.f32.mrf.mxu0
        %v2966 = vadd.f32 %v2952, %v2965
        %2967 = vdwg.mxu0
        %2968 = vmatpush.bf16.msra.mxu0 0
        %2969 = vmatpush.bf16.msra.mxu0 0
        %2970 = vmatpush.bf16.msra.mxu0 0
        %2971 = vmatpush.bf16.msra.mxu0 0
        %2972 = vmatpush.bf16.msra.mxu0 %v2873
        %2973 = vmatpush.bf16.msra.mxu0 %v2872
        %2974 = vmatpush.bf16.msra.mxu0 %v2871
        %2975 = vmatpush.bf16.msra.mxu0 %v2870
        %2976 = vmatmul.bf16.gmra.mxu0 %v2910
        %v2977 = vpop.f32.mrf.mxu0
        %v2978 = vadd.f32 %v2964, %v2977
        %v2979 = vpop.f32.mrf.mxu0
        %v2980 = vadd.f32 %v2966, %v2979
        %2981 = vdwg.mxu0
        %v2982 = vsel %vm813, %v2978, 0.0
        %v2983 = vsel %vm813, %v2980, 0.0
        %v2984 = vadd.f32 %v2982, %v2983
        %v2985 = vrot.slane %v2984, 4
        %v2986 = vadd.f32 %v2984, %v2985
        %v2987 = vrot.slane %v2986, 2
        %v2988 = vadd.f32 %v2986, %v2987
        %v2989 = vrot.slane %v2988, 1
        %v2990 = vadd.f32 %v2988, %v2989
        %v2991 = vmul.f32 %v2990, %v1185
        %v2992 = vsub.f32 %v2978, %v2991
        %v2993 = vsub.f32 %v2980, %v2991
        %v2994 = vmul.f32 %v2992, %v2992
        %v2995 = vmul.f32 %v2993, %v2993
        %v2996 = vsel %vm813, %v2994, 0.0
        %v2997 = vsel %vm813, %v2995, 0.0
        %v2998 = vadd.f32 %v2996, %v2997
        %v2999 = vrot.slane %v2998, 4
        %v3000 = vadd.f32 %v2998, %v2999
        %v3001 = vrot.slane %v3000, 2
        %v3002 = vadd.f32 %v3000, %v3001
        %v3003 = vrot.slane %v3002, 1
        %v3004 = vadd.f32 %v3002, %v3003
        %v3005 = vmul.f32 %v3004, %v1185
        %v3006 = vadd.f32 %v3005, 1e-05
        %v3007 = vrsqrt.pop %v3006
        %v3008 = vmul.f32 %v3007, %v3006
        %v3009 = vmul.f32 %v3008, %v3007
        %v3010 = vmul.f32 0.5, %v3009
        %v3011 = vsub.f32 1.5, %v3010
        %v3012 = vmul.f32 %v3007, %v3011
        %vm3013 = vweird.f32 %v3006
        %vm3014 = vweird.f32 %v3007
        %vm3015 = vmor %vm3013, %vm3014
        %v3016 = vsel %vm3015, %v3007, %v3012
        %v3017 = vmul.f32 %v2992, %v3016
        %v3018 = vmul.f32 %v2993, %v3016
        %v3019 = vperm.slane %v2500, 1
        %v3020 = vmul.f32 %v3017, %v3019
        %v3021 = vmul.f32 %v3018, %v3019
        %v3022 = vperm.slane %v2500, 2
        %v3023 = vadd.f32 %v3020, %v3022
        %v3024 = vadd.f32 %v3021, %v3022
        %v3025 = vmax.f32 %v3023, 0.0
        %v3026 = vmax.f32 %v3024, 0.0
        %s3027 = scalar_lea.vmem %s5, 864
        %v3028 = vld [vmem:[%s3027] sm:$0xf]
        %v3029 = vld [vmem:[%s3027 + $0x4] sm:$0xf]
        %v3030 = vld [vmem:[%s3027 + $0x8] sm:$0xf]
        %v3031 = vld [vmem:[%s3027 + $0xc] sm:$0xf]
        %v3032 = vld [vmem:[%s3027 + $0x10] sm:$0xf]
        %v3033 = vld [vmem:[%s3027 + $0x14] sm:$0xf]
        %v3034 = vld [vmem:[%s3027 + $0x18] sm:$0xf]
        %v3035 = vld [vmem:[%s3027 + $0x1c] sm:$0xf]
        %v3036 = vld [vmem:[%s3027 + $0x20] sm:$0xf]
        %v3037 = vld [vmem:[%s3027 + $0x24] sm:$0xf]
        %v3038 = vld [vmem:[%s3027 + $0x28] sm:$0xf]
        %v3039 = vld [vmem:[%s3027 + $0x2c] sm:$0xf]
        %v3040 = vld [vmem:[%s3027 + $0x30] sm:$0xf]
        %v3041 = vld [vmem:[%s3027 + $0x34] sm:$0xf]
        %v3042 = vld [vmem:[%s3027 + $0x38] sm:$0xf]
        %v3043 = vld [vmem:[%s3027 + $0x3c] sm:$0xf]
        %v3044 = vld [vmem:[%s3027 + $0x40] sm:$0xf]
        %v3045 = vld [vmem:[%s3027 + $0x44] sm:$0xf]
        %v3046 = vld [vmem:[%s3027 + $0x48] sm:$0xf]
        %v3047 = vld [vmem:[%s3027 + $0x4c] sm:$0xf]
        %v3048 = vld [vmem:[%s3027 + $0x50] sm:$0xf]
        %v3049 = vld [vmem:[%s3027 + $0x54] sm:$0xf]
        %v3050 = vld [vmem:[%s3027 + $0x58] sm:$0xf]
        %v3051 = vld [vmem:[%s3027 + $0x5c] sm:$0xf]
        %v3052 = vld [vmem:[%s3027 + $0x60] sm:$0xf]
        %v3053 = vld [vmem:[%s3027 + $0x64] sm:$0xf]
        %v3054 = vld [vmem:[%s3027 + $0x68] sm:$0xf]
        %v3055 = vld [vmem:[%s3027 + $0x6c] sm:$0xf]
        %v3056 = vld [vmem:[%s3027 + $0x70] sm:$0xf]
        %v3057 = vld [vmem:[%s3027 + $0x74] sm:$0xf]
        %v3058 = vld [vmem:[%s3027 + $0x78] sm:$0xf]
        %v3059 = vld [vmem:[%s3027 + $0x7c] sm:$0xf]
        %v3060 = vld [vmem:[%s3027 + $0x80] sm:$0xf]
        %v3061 = vld [vmem:[%s3027 + $0x84] sm:$0xf]
        %v3062 = vld [vmem:[%s3027 + $0x88] sm:$0xf]
        %v3063 = vld [vmem:[%s3027 + $0x8c] sm:$0xf]
        %v3064 = vld [vmem:[%s3027 + $0x90] sm:$0xf]
        %v3065 = vld [vmem:[%s3027 + $0x94] sm:$0xf]
        %v3066 = vld [vmem:[%s3027 + $0x98] sm:$0xf]
        %v3067 = vld [vmem:[%s3027 + $0x9c] sm:$0xf]
        %v3068 = vld [vmem:[%s3027 + $0xa0] sm:$0xf]
        %v3069 = vld [vmem:[%s3027 + $0xa4] sm:$0xf]
        %v3070 = vld [vmem:[%s3027 + $0xa8] sm:$0xf]
        %v3071 = vld [vmem:[%s3027 + $0xac] sm:$0xf]
        %v3072 = vld [vmem:[%s3027 + $0xb0] sm:$0xf]
        %v3073 = vld [vmem:[%s3027 + $0xb4] sm:$0xf]
        %v3074 = vld [vmem:[%s3027 + $0xb8] sm:$0xf]
        %v3075 = vld [vmem:[%s3027 + $0xbc] sm:$0xf]
        %v3076 = vld [vmem:[%s3027 + $0xc0] sm:$0xf]
        %v3077 = vld [vmem:[%s3027 + $0xc4] sm:$0xf]
        %v3078 = vld [vmem:[%s3027 + $0xc8] sm:$0xf]
        %v3079 = vld [vmem:[%s3027 + $0xcc] sm:$0xf]
        %v3080 = vld [vmem:[%s3027 + $0xd0] sm:$0xf]
        %v3081 = vld [vmem:[%s3027 + $0xd4] sm:$0xf]
        %v3082 = vld [vmem:[%s3027 + $0xd8] sm:$0xf]
        %v3083 = vld [vmem:[%s3027 + $0xdc] sm:$0xf]
        %v3084 = vld [vmem:[%s3027 + $0xe0] sm:$0xf]
        %v3085 = vld [vmem:[%s3027 + $0xe4] sm:$0xf]
        %v3086 = vld [vmem:[%s3027 + $0xe8] sm:$0xf]
        %v3087 = vld [vmem:[%s3027 + $0xec] sm:$0xf]
        %v3088 = vld [vmem:[%s3027 + $0xf0] sm:$0xf]
        %v3089 = vld [vmem:[%s3027 + $0xf4] sm:$0xf]
        %v3090 = vld [vmem:[%s3027 + $0xf8] sm:$0xf]
        %v3091 = vld [vmem:[%s3027 + $0xfc] sm:$0xf]
        %v3092 = vld [vmem:[%s3027 + $0x100] sm:$0xf]
        %v3093 = vld [vmem:[%s3027 + $0x104] sm:$0xf]
        %v3094 = vld [vmem:[%s3027 + $0x108] sm:$0xf]
        %v3095 = vld [vmem:[%s3027 + $0x10c] sm:$0xf]
        %v3096 = vld [vmem:[%s3027 + $0x110] sm:$0xf]
        %v3097 = vld [vmem:[%s3027 + $0x114] sm:$0xf]
        %v3098 = vld [vmem:[%s3027 + $0x118] sm:$0xf]
        %v3099 = vld [vmem:[%s3027 + $0x11c] sm:$0xf]
        %s3100 = scalar_lea.vmem %s6, 12
        %v3101 = vld [vmem:[%s3100] sm:$0x7]
        %v3102 = vpack.c.bf16 %v3025, %v3025
        %v3103 = vpack.c.bf16 %v3026, %v3026
        %v3105 = vunpack.c.l.b16 %v3102
        %v3106 = vpack.c.b16 %v3105, %v3105
        %v3108 = vshrl.u32 %v3106, 16
        %v3111 = vrot.slane %v3108, 7
        %v3112 = vshll.u32 %v3106, 16
        %v3114 = vor.u32 %v3111, %v3112
        %v3116 = vrot.slane %v3112, 7
        %v3118 = vsel %vm660, %v3108, %v3114
        %v3119 = vsel %vm1314, %v3118, %v3116
        %v3120 = vrot.slane %v3108, 2
        %v3122 = vrot.slane %v3108, 1
        %v3123 = vrot.slane %v3112, 2
        %v3124 = vor.u32 %v3122, %v3123
        %v3126 = vrot.slane %v3112, 1
        %v3128 = vsel %vm660, %v3120, %v3124
        %v3129 = vsel %vm1314, %v3128, %v3126
        %v3131 = vunpack.c.l.b16 %v3103
        %v3132 = vpack.c.b16 %v3131, %v3131
        %v3134 = vshrl.u32 %v3132, 16
        %v3137 = vrot.slane %v3134, 7
        %v3138 = vshll.u32 %v3132, 16
        %v3140 = vor.u32 %v3137, %v3138
        %v3142 = vrot.slane %v3138, 7
        %v3144 = vsel %vm660, %v3134, %v3140
        %v3145 = vsel %vm1314, %v3144, %v3142
        %v3146 = vrot.slane %v3134, 2
        %v3148 = vrot.slane %v3134, 1
        %v3149 = vrot.slane %v3138, 2
        %v3150 = vor.u32 %v3148, %v3149
        %v3152 = vrot.slane %v3138, 1
        %v3154 = vsel %vm660, %v3146, %v3150
        %v3155 = vsel %vm1314, %v3154, %v3152
        %v3157 = vshrl.u32 %v3129, 16
        %v3159 = vshll.u32 %v3129, 16
        %v3161 = vrot.slane %v3159, 1
        %v3162 = vor.u32 %v3157, %v3161
        %3163 = vrot.lane.b32.xlu0 %v3162, 64
        %v3164 = vpop.permute.xlu0 %3163
        %v3166 = vrot.slane %v3129, 1
        %v3168 = vsel %vm813, %v3129, %v3164
        %v3170 = vshrl.u32 %v3119, 16
        %v3172 = vshll.u32 %v3119, 16
        %v3174 = vrot.slane %v3172, 1
        %v3175 = vor.u32 %v3170, %v3174
        %3176 = vrot.lane.b32.xlu0 %v3175, 64
        %v3177 = vpop.permute.xlu0 %3176
        %v3179 = vrot.slane %v3119, 1
        %v3181 = vsel %vm813, %v3119, %v3177
        %v3183 = vshrl.u32 %v3145, 16
        %v3185 = vshll.u32 %v3145, 16
        %v3187 = vrot.slane %v3185, 1
        %v3188 = vor.u32 %v3183, %v3187
        %3189 = vrot.lane.b32.xlu0 %v3188, 64
        %v3190 = vpop.permute.xlu0 %3189
        %v3192 = vrot.slane %v3145, 1
        %v3194 = vsel %vm813, %v3145, %v3190
        %v3196 = vshrl.u32 %v3155, 16
        %v3198 = vshll.u32 %v3155, 16
        %v3200 = vrot.slane %v3198, 1
        %v3201 = vor.u32 %v3196, %v3200
        %3202 = vrot.lane.b32.xlu0 %v3201, 64
        %v3203 = vpop.permute.xlu0 %3202
        %v3205 = vrot.slane %v3155, 1
        %v3207 = vsel %vm813, %v3155, %v3203
        %3209 = vrot.lane.b32.xlu0 %v3181, 64
        %v3210 = vpop.permute.xlu0 %3209
        %3211 = vrot.lane.b32.xlu0 %v3179, 64
        %v3212 = vpop.permute.xlu0 %3211
        %v3213 = vsel %vm1409, %v3210, %v3212
        %v3216 = vsel %vm813, %v3166, %v3210
        %3218 = vrot.lane.b32.xlu0 %v3168, 64
        %v3219 = vpop.permute.xlu0 %3218
        %3220 = vrot.lane.b32.xlu0 %v3166, 64
        %v3221 = vpop.permute.xlu0 %3220
        %v3222 = vsel %vm1409, %v3219, %v3221
        %v3225 = vsel %vm813, %v3179, %v3219
        %3227 = vrot.lane.b32.xlu0 %v3194, 64
        %v3228 = vpop.permute.xlu0 %3227
        %3229 = vrot.lane.b32.xlu0 %v3192, 64
        %v3230 = vpop.permute.xlu0 %3229
        %v3231 = vsel %vm1409, %v3228, %v3230
        %v3233 = vsel %vm813, %v3166, %v3228
        %3235 = vrot.lane.b32.xlu0 %v3207, 64
        %v3236 = vpop.permute.xlu0 %3235
        %3237 = vrot.lane.b32.xlu0 %v3205, 64
        %v3238 = vpop.permute.xlu0 %3237
        %v3239 = vsel %vm1409, %v3236, %v3238
        %v3242 = vsel %vm813, %v3192, %v3236
        %v3244 = vrot.slane %v3181, 6
        %v3245 = vrot.slane %v3225, 6
        %v3246 = vrot.slane %v3222, 6
        %v3247 = vrot.slane %v3194, 6
        %v3248 = vrot.slane %v3192, 6
        %v3250 = vrot.slane %v3168, 4
        %v3251 = vrot.slane %v3233, 4
        %v3252 = vrot.slane %v3231, 4
        %v3253 = vrot.slane %v3207, 4
        %v3254 = vrot.slane %v3205, 4
        %v3256 = vrot.slane %v3194, 2
        %v3257 = vrot.slane %v3242, 2
        %v3258 = vrot.slane %v3239, 2
        %v3259 = vrot.slane %v3192, 2
        %v3261 = vsel %vm689, %v3168, %v3244
        %v3263 = vsel %vm689, %v3216, %v3245
        %v3266 = vsel %vm689, %v3213, %v3246
        %v3268 = vsel %vm689, %v3168, %v3247
        %v3270 = vsel %vm689, %v3166, %v3248
        %v3272 = vsel %vm962, %v3261, %v3250
        %v3274 = vsel %vm962, %v3263, %v3251
        %v3276 = vsel %vm962, %v3266, %v3252
        %v3278 = vsel %vm962, %v3268, %v3253
        %v3280 = vsel %vm962, %v3270, %v3254
        %v3282 = vsel %vm969, %v3272, %v3256
        %v3285 = vsel %vm969, %v3274, %v3257
        %v3288 = vsel %vm969, %v3276, %v3258
        %v3290 = vsel %vm969, %v3278, %v3256
        %v3293 = vsel %vm969, %v3280, %v3259
        %v3294 = vperm.slane %v3101, 0
        %v3367 = vunpack.c.l.b16 %v3028
        %v3368 = vunpack.c.l.b16 %v3029
        %v3369 = vunpack.c.l.b16 %v3030
        %v3370 = vunpack.c.l.b16 %v3031
        %v3371 = vunpack.c.l.b16 %v3032
        %v3372 = vunpack.c.l.b16 %v3033
        %v3373 = vunpack.c.l.b16 %v3034
        %v3374 = vunpack.c.l.b16 %v3035
        %v3375 = vunpack.c.l.b16 %v3036
        %v3376 = vunpack.c.l.b16 %v3037
        %v3377 = vunpack.c.l.b16 %v3038
        %v3378 = vunpack.c.l.b16 %v3039
        %v3379 = vunpack.c.l.b16 %v3040
        %v3380 = vunpack.c.l.b16 %v3041
        %v3381 = vunpack.c.l.b16 %v3042
        %v3382 = vunpack.c.l.b16 %v3043
        %v3383 = vunpack.c.l.b16 %v3044
        %v3384 = vunpack.c.l.b16 %v3045
        %v3385 = vunpack.c.l.b16 %v3046
        %v3386 = vunpack.c.l.b16 %v3047
        %v3387 = vunpack.c.l.b16 %v3048
        %v3388 = vunpack.c.l.b16 %v3049
        %v3389 = vunpack.c.l.b16 %v3050
        %v3390 = vunpack.c.l.b16 %v3051
        %v3391 = vunpack.c.l.b16 %v3052
        %v3392 = vunpack.c.l.b16 %v3053
        %v3393 = vunpack.c.l.b16 %v3054
        %v3394 = vunpack.c.l.b16 %v3055
        %v3395 = vunpack.c.l.b16 %v3056
        %v3396 = vunpack.c.l.b16 %v3057
        %v3397 = vunpack.c.l.b16 %v3058
        %v3398 = vunpack.c.l.b16 %v3059
        %v3399 = vunpack.c.l.b16 %v3060
        %v3400 = vunpack.c.l.b16 %v3061
        %v3401 = vunpack.c.l.b16 %v3062
        %v3402 = vunpack.c.l.b16 %v3063
        %v3403 = vunpack.c.l.b16 %v3064
        %v3404 = vunpack.c.l.b16 %v3065
        %v3405 = vunpack.c.l.b16 %v3066
        %v3406 = vunpack.c.l.b16 %v3067
        %v3407 = vunpack.c.l.b16 %v3068
        %v3408 = vunpack.c.l.b16 %v3069
        %v3409 = vunpack.c.l.b16 %v3070
        %v3410 = vunpack.c.l.b16 %v3071
        %v3411 = vunpack.c.l.b16 %v3072
        %v3412 = vunpack.c.l.b16 %v3073
        %v3413 = vunpack.c.l.b16 %v3074
        %v3414 = vunpack.c.l.b16 %v3075
        %v3415 = vunpack.c.l.b16 %v3076
        %v3416 = vunpack.c.l.b16 %v3077
        %v3417 = vunpack.c.l.b16 %v3078
        %v3418 = vunpack.c.l.b16 %v3079
        %v3419 = vunpack.c.l.b16 %v3080
        %v3420 = vunpack.c.l.b16 %v3081
        %v3421 = vunpack.c.l.b16 %v3082
        %v3422 = vunpack.c.l.b16 %v3083
        %v3423 = vunpack.c.l.b16 %v3084
        %v3424 = vunpack.c.l.b16 %v3085
        %v3425 = vunpack.c.l.b16 %v3086
        %v3426 = vunpack.c.l.b16 %v3087
        %v3427 = vunpack.c.l.b16 %v3088
        %v3428 = vunpack.c.l.b16 %v3089
        %v3429 = vunpack.c.l.b16 %v3090
        %v3430 = vunpack.c.l.b16 %v3091
        %v3431 = vunpack.c.l.b16 %v3092
        %v3432 = vunpack.c.l.b16 %v3093
        %v3433 = vunpack.c.l.b16 %v3094
        %v3434 = vunpack.c.l.b16 %v3095
        %v3435 = vunpack.c.l.b16 %v3096
        %v3436 = vunpack.c.l.b16 %v3097
        %v3437 = vunpack.c.l.b16 %v3098
        %v3438 = vunpack.c.l.b16 %v3099
        %v3439 = vpack.c.b16 %v3368, %v3367
        %v3440 = vpack.c.b16 %v3370, %v3369
        %v3441 = vpack.c.b16 %v3372, %v3371
        %v3442 = vpack.c.b16 %v3374, %v3373
        %v3443 = vpack.c.b16 %v3376, %v3375
        %v3444 = vpack.c.b16 %v3378, %v3377
        %v3445 = vpack.c.b16 %v3380, %v3379
        %v3446 = vpack.c.b16 %v3382, %v3381
        %v3447 = vpack.c.b16 %v3384, %v3383
        %v3448 = vpack.c.b16 %v3386, %v3385
        %v3449 = vpack.c.b16 %v3388, %v3387
        %v3450 = vpack.c.b16 %v3390, %v3389
        %v3451 = vpack.c.b16 %v3392, %v3391
        %v3452 = vpack.c.b16 %v3394, %v3393
        %v3453 = vpack.c.b16 %v3396, %v3395
        %v3454 = vpack.c.b16 %v3398, %v3397
        %v3455 = vpack.c.b16 %v3400, %v3399
        %v3456 = vpack.c.b16 %v3402, %v3401
        %v3457 = vpack.c.b16 %v3404, %v3403
        %v3458 = vpack.c.b16 %v3406, %v3405
        %v3459 = vpack.c.b16 %v3408, %v3407
        %v3460 = vpack.c.b16 %v3410, %v3409
        %v3461 = vpack.c.b16 %v3412, %v3411
        %v3462 = vpack.c.b16 %v3414, %v3413
        %v3463 = vpack.c.b16 %v3416, %v3415
        %v3464 = vpack.c.b16 %v3418, %v3417
        %v3465 = vpack.c.b16 %v3420, %v3419
        %v3466 = vpack.c.b16 %v3422, %v3421
        %v3467 = vpack.c.b16 %v3424, %v3423
        %v3468 = vpack.c.b16 %v3426, %v3425
        %v3469 = vpack.c.b16 %v3428, %v3427
        %v3470 = vpack.c.b16 %v3430, %v3429
        %v3471 = vpack.c.b16 %v3432, %v3431
        %v3472 = vpack.c.b16 %v3434, %v3433
        %v3473 = vpack.c.b16 %v3436, %v3435
        %v3474 = vpack.c.b16 %v3438, %v3437
        %v3511 = vsel %vm813, %v3293, 0
        %3513 = vmatpush.bf16.msra.mxu0 %v3446
        %3514 = vmatpush.bf16.msra.mxu0 %v3445
        %3515 = vmatpush.bf16.msra.mxu0 %v3444
        %3516 = vmatpush.bf16.msra.mxu0 %v3443
        %3517 = vmatpush.bf16.msra.mxu0 %v3442
        %3518 = vmatpush.bf16.msra.mxu0 %v3441
        %3519 = vmatpush.bf16.msra.mxu0 %v3440
        %3520 = vmatpush.bf16.msra.mxu0 %v3439
        %3521 = vmatmul.bf16.gmra.mxu0 %v3282
        %v3522 = vpop.f32.mrf.mxu0
        %v3523 = vadd.f32 %v3294, %v3522
        %v3524 = vpop.f32.mrf.mxu0
        %v3525 = vadd.f32 %v3294, %v3524
        %3526 = vdwg.mxu0
        %3527 = vmatpush.bf16.msra.mxu0 %v3454
        %3528 = vmatpush.bf16.msra.mxu0 %v3453
        %3529 = vmatpush.bf16.msra.mxu0 %v3452
        %3530 = vmatpush.bf16.msra.mxu0 %v3451
        %3531 = vmatpush.bf16.msra.mxu0 %v3450
        %3532 = vmatpush.bf16.msra.mxu0 %v3449
        %3533 = vmatpush.bf16.msra.mxu0 %v3448
        %3534 = vmatpush.bf16.msra.mxu0 %v3447
        %3535 = vmatmul.bf16.gmra.mxu0 %v3285
        %v3536 = vpop.f32.mrf.mxu0
        %v3537 = vadd.f32 %v3523, %v3536
        %v3538 = vpop.f32.mrf.mxu0
        %v3539 = vadd.f32 %v3525, %v3538
        %3540 = vdwg.mxu0
        %3541 = vmatpush.bf16.msra.mxu0 %v3462
        %3542 = vmatpush.bf16.msra.mxu0 %v3461
        %3543 = vmatpush.bf16.msra.mxu0 %v3460
        %3544 = vmatpush.bf16.msra.mxu0 %v3459
        %3545 = vmatpush.bf16.msra.mxu0 %v3458
        %3546 = vmatpush.bf16.msra.mxu0 %v3457
        %3547 = vmatpush.bf16.msra.mxu0 %v3456
        %3548 = vmatpush.bf16.msra.mxu0 %v3455
        %3549 = vmatmul.bf16.gmra.mxu0 %v3288
        %v3550 = vpop.f32.mrf.mxu0
        %v3551 = vadd.f32 %v3537, %v3550
        %v3552 = vpop.f32.mrf.mxu0
        %v3553 = vadd.f32 %v3539, %v3552
        %3554 = vdwg.mxu0
        %3555 = vmatpush.bf16.msra.mxu0 %v3470
        %3556 = vmatpush.bf16.msra.mxu0 %v3469
        %3557 = vmatpush.bf16.msra.mxu0 %v3468
        %3558 = vmatpush.bf16.msra.mxu0 %v3467
        %3559 = vmatpush.bf16.msra.mxu0 %v3466
        %3560 = vmatpush.bf16.msra.mxu0 %v3465
        %3561 = vmatpush.bf16.msra.mxu0 %v3464
        %3562 = vmatpush.bf16.msra.mxu0 %v3463
        %3563 = vmatmul.bf16.gmra.mxu0 %v3290
        %v3564 = vpop.f32.mrf.mxu0
        %v3565 = vadd.f32 %v3551, %v3564
        %v3566 = vpop.f32.mrf.mxu0
        %v3567 = vadd.f32 %v3553, %v3566
        %3568 = vdwg.mxu0
        %3569 = vmatpush.bf16.msra.mxu0 0
        %3570 = vmatpush.bf16.msra.mxu0 0
        %3571 = vmatpush.bf16.msra.mxu0 0
        %3572 = vmatpush.bf16.msra.mxu0 0
        %3573 = vmatpush.bf16.msra.mxu0 %v3474
        %3574 = vmatpush.bf16.msra.mxu0 %v3473
        %3575 = vmatpush.bf16.msra.mxu0 %v3472
        %3576 = vmatpush.bf16.msra.mxu0 %v3471
        %3577 = vmatmul.bf16.gmra.mxu0 %v3511
        %v3578 = vpop.f32.mrf.mxu0
        %v3579 = vadd.f32 %v3565, %v3578
        %v3580 = vpop.f32.mrf.mxu0
        %v3581 = vadd.f32 %v3567, %v3580
        %3582 = vdwg.mxu0
        %v3583 = vsel %vm813, %v3579, 0.0
        %v3584 = vsel %vm813, %v3581, 0.0
        %v3585 = vadd.f32 %v3583, %v3584
        %v3586 = vrot.slane %v3585, 4
        %v3587 = vadd.f32 %v3585, %v3586
        %v3588 = vrot.slane %v3587, 2
        %v3589 = vadd.f32 %v3587, %v3588
        %v3590 = vrot.slane %v3589, 1
        %v3591 = vadd.f32 %v3589, %v3590
        %v3592 = vmul.f32 %v3591, %v1185
        %v3593 = vsub.f32 %v3579, %v3592
        %v3594 = vsub.f32 %v3581, %v3592
        %v3595 = vmul.f32 %v3593, %v3593
        %v3596 = vmul.f32 %v3594, %v3594
        %v3597 = vsel %vm813, %v3595, 0.0
        %v3598 = vsel %vm813, %v3596, 0.0
        %v3599 = vadd.f32 %v3597, %v3598
        %v3600 = vrot.slane %v3599, 4
        %v3601 = vadd.f32 %v3599, %v3600
        %v3602 = vrot.slane %v3601, 2
        %v3603 = vadd.f32 %v3601, %v3602
        %v3604 = vrot.slane %v3603, 1
        %v3605 = vadd.f32 %v3603, %v3604
        %v3606 = vmul.f32 %v3605, %v1185
        %v3607 = vadd.f32 %v3606, 1e-05
        %v3608 = vrsqrt.pop %v3607
        %v3609 = vmul.f32 %v3608, %v3607
        %v3610 = vmul.f32 %v3609, %v3608
        %v3611 = vmul.f32 0.5, %v3610
        %v3612 = vsub.f32 1.5, %v3611
        %v3613 = vmul.f32 %v3608, %v3612
        %vm3614 = vweird.f32 %v3607
        %vm3615 = vweird.f32 %v3608
        %vm3616 = vmor %vm3614, %vm3615
        %v3617 = vsel %vm3616, %v3608, %v3613
        %v3618 = vmul.f32 %v3593, %v3617
        %v3619 = vmul.f32 %v3594, %v3617
        %v3620 = vperm.slane %v3101, 1
        %v3621 = vmul.f32 %v3618, %v3620
        %v3622 = vmul.f32 %v3619, %v3620
        %v3623 = vperm.slane %v3101, 2
        %v3624 = vadd.f32 %v3621, %v3623
        %v3625 = vadd.f32 %v3622, %v3623
        %v3626 = vadd.f32 %v3624, %v2424
        %v3627 = vadd.f32 %v3625, %v2425
        %s3628 = scalar_lea.vmem %s5, 1152
        %v3629 = vld [vmem:[%s3628] sm:$0xf]
        %v3630 = vld [vmem:[%s3628 + $0x4] sm:$0xf]
        %v3631 = vld [vmem:[%s3628 + $0x8] sm:$0xf]
        %v3632 = vld [vmem:[%s3628 + $0xc] sm:$0xf]
        %v3633 = vld [vmem:[%s3628 + $0x10] sm:$0xf]
        %v3634 = vld [vmem:[%s3628 + $0x14] sm:$0xf]
        %v3635 = vld [vmem:[%s3628 + $0x18] sm:$0xf]
        %v3636 = vld [vmem:[%s3628 + $0x1c] sm:$0xf]
        %v3637 = vld [vmem:[%s3628 + $0x20] sm:$0xf]
        %v3638 = vld [vmem:[%s3628 + $0x24] sm:$0xf]
        %v3639 = vld [vmem:[%s3628 + $0x28] sm:$0xf]
        %v3640 = vld [vmem:[%s3628 + $0x2c] sm:$0xf]
        %v3641 = vld [vmem:[%s3628 + $0x30] sm:$0xf]
        %v3642 = vld [vmem:[%s3628 + $0x34] sm:$0xf]
        %v3643 = vld [vmem:[%s3628 + $0x38] sm:$0xf]
        %v3644 = vld [vmem:[%s3628 + $0x3c] sm:$0xf]
        %v3645 = vld [vmem:[%s3628 + $0x40] sm:$0xf]
        %v3646 = vld [vmem:[%s3628 + $0x44] sm:$0xf]
        %v3647 = vld [vmem:[%s3628 + $0x48] sm:$0xf]
        %v3648 = vld [vmem:[%s3628 + $0x4c] sm:$0xf]
        %v3649 = vld [vmem:[%s3628 + $0x50] sm:$0xf]
        %v3650 = vld [vmem:[%s3628 + $0x54] sm:$0xf]
        %v3651 = vld [vmem:[%s3628 + $0x58] sm:$0xf]
        %v3652 = vld [vmem:[%s3628 + $0x5c] sm:$0xf]
        %v3653 = vld [vmem:[%s3628 + $0x60] sm:$0xf]
        %v3654 = vld [vmem:[%s3628 + $0x64] sm:$0xf]
        %v3655 = vld [vmem:[%s3628 + $0x68] sm:$0xf]
        %v3656 = vld [vmem:[%s3628 + $0x6c] sm:$0xf]
        %v3657 = vld [vmem:[%s3628 + $0x70] sm:$0xf]
        %v3658 = vld [vmem:[%s3628 + $0x74] sm:$0xf]
        %v3659 = vld [vmem:[%s3628 + $0x78] sm:$0xf]
        %v3660 = vld [vmem:[%s3628 + $0x7c] sm:$0xf]
        %v3661 = vld [vmem:[%s3628 + $0x80] sm:$0xf]
        %v3662 = vld [vmem:[%s3628 + $0x84] sm:$0xf]
        %v3663 = vld [vmem:[%s3628 + $0x88] sm:$0xf]
        %v3664 = vld [vmem:[%s3628 + $0x8c] sm:$0xf]
        %v3665 = vld [vmem:[%s3628 + $0x90] sm:$0xf]
        %v3666 = vld [vmem:[%s3628 + $0x94] sm:$0xf]
        %v3667 = vld [vmem:[%s3628 + $0x98] sm:$0xf]
        %v3668 = vld [vmem:[%s3628 + $0x9c] sm:$0xf]
        %v3669 = vld [vmem:[%s3628 + $0xa0] sm:$0xf]
        %v3670 = vld [vmem:[%s3628 + $0xa4] sm:$0xf]
        %v3671 = vld [vmem:[%s3628 + $0xa8] sm:$0xf]
        %v3672 = vld [vmem:[%s3628 + $0xac] sm:$0xf]
        %v3673 = vld [vmem:[%s3628 + $0xb0] sm:$0xf]
        %v3674 = vld [vmem:[%s3628 + $0xb4] sm:$0xf]
        %v3675 = vld [vmem:[%s3628 + $0xb8] sm:$0xf]
        %v3676 = vld [vmem:[%s3628 + $0xbc] sm:$0xf]
        %v3677 = vld [vmem:[%s3628 + $0xc0] sm:$0xf]
        %v3678 = vld [vmem:[%s3628 + $0xc4] sm:$0xf]
        %v3679 = vld [vmem:[%s3628 + $0xc8] sm:$0xf]
        %v3680 = vld [vmem:[%s3628 + $0xcc] sm:$0xf]
        %v3681 = vld [vmem:[%s3628 + $0xd0] sm:$0xf]
        %v3682 = vld [vmem:[%s3628 + $0xd4] sm:$0xf]
        %v3683 = vld [vmem:[%s3628 + $0xd8] sm:$0xf]
        %v3684 = vld [vmem:[%s3628 + $0xdc] sm:$0xf]
        %v3685 = vld [vmem:[%s3628 + $0xe0] sm:$0xf]
        %v3686 = vld [vmem:[%s3628 + $0xe4] sm:$0xf]
        %v3687 = vld [vmem:[%s3628 + $0xe8] sm:$0xf]
        %v3688 = vld [vmem:[%s3628 + $0xec] sm:$0xf]
        %v3689 = vld [vmem:[%s3628 + $0xf0] sm:$0xf]
        %v3690 = vld [vmem:[%s3628 + $0xf4] sm:$0xf]
        %v3691 = vld [vmem:[%s3628 + $0xf8] sm:$0xf]
        %v3692 = vld [vmem:[%s3628 + $0xfc] sm:$0xf]
        %v3693 = vld [vmem:[%s3628 + $0x100] sm:$0xf]
        %v3694 = vld [vmem:[%s3628 + $0x104] sm:$0xf]
        %v3695 = vld [vmem:[%s3628 + $0x108] sm:$0xf]
        %v3696 = vld [vmem:[%s3628 + $0x10c] sm:$0xf]
        %v3697 = vld [vmem:[%s3628 + $0x110] sm:$0xf]
        %v3698 = vld [vmem:[%s3628 + $0x114] sm:$0xf]
        %v3699 = vld [vmem:[%s3628 + $0x118] sm:$0xf]
        %v3700 = vld [vmem:[%s3628 + $0x11c] sm:$0xf]
        %s3701 = scalar_lea.vmem %s6, 16
        %v3702 = vld [vmem:[%s3701] sm:$0x7]
        %v3703 = vpack.c.bf16 %v3626, %v3626
        %v3704 = vpack.c.bf16 %v3627, %v3627
        %v3706 = vunpack.c.l.b16 %v3703
        %v3707 = vpack.c.b16 %v3706, %v3706
        %v3709 = vshrl.u32 %v3707, 16
        %v3712 = vrot.slane %v3709, 7
        %v3713 = vshll.u32 %v3707, 16
        %v3715 = vor.u32 %v3712, %v3713
        %v3717 = vrot.slane %v3713, 7
        %v3719 = vsel %vm660, %v3709, %v3715
        %v3720 = vsel %vm1314, %v3719, %v3717
        %v3721 = vrot.slane %v3709, 2
        %v3723 = vrot.slane %v3709, 1
        %v3724 = vrot.slane %v3713, 2
        %v3725 = vor.u32 %v3723, %v3724
        %v3727 = vrot.slane %v3713, 1
        %v3729 = vsel %vm660, %v3721, %v3725
        %v3730 = vsel %vm1314, %v3729, %v3727
        %v3732 = vunpack.c.l.b16 %v3704
        %v3733 = vpack.c.b16 %v3732, %v3732
        %v3735 = vshrl.u32 %v3733, 16
        %v3738 = vrot.slane %v3735, 7
        %v3739 = vshll.u32 %v3733, 16
        %v3741 = vor.u32 %v3738, %v3739
        %v3743 = vrot.slane %v3739, 7
        %v3745 = vsel %vm660, %v3735, %v3741
        %v3746 = vsel %vm1314, %v3745, %v3743
        %v3747 = vrot.slane %v3735, 2
        %v3749 = vrot.slane %v3735, 1
        %v3750 = vrot.slane %v3739, 2
        %v3751 = vor.u32 %v3749, %v3750
        %v3753 = vrot.slane %v3739, 1
        %v3755 = vsel %vm660, %v3747, %v3751
        %v3756 = vsel %vm1314, %v3755, %v3753
        %v3758 = vshrl.u32 %v3730, 16
        %v3760 = vshll.u32 %v3730, 16
        %v3762 = vrot.slane %v3760, 1
        %v3763 = vor.u32 %v3758, %v3762
        %3764 = vrot.lane.b32.xlu0 %v3763, 64
        %v3765 = vpop.permute.xlu0 %3764
        %v3767 = vrot.slane %v3730, 1
        %v3769 = vsel %vm813, %v3730, %v3765
        %v3771 = vshrl.u32 %v3720, 16
        %v3773 = vshll.u32 %v3720, 16
        %v3775 = vrot.slane %v3773, 1
        %v3776 = vor.u32 %v3771, %v3775
        %3777 = vrot.lane.b32.xlu0 %v3776, 64
        %v3778 = vpop.permute.xlu0 %3777
        %v3780 = vrot.slane %v3720, 1
        %v3782 = vsel %vm813, %v3720, %v3778
        %v3784 = vshrl.u32 %v3746, 16
        %v3786 = vshll.u32 %v3746, 16
        %v3788 = vrot.slane %v3786, 1
        %v3789 = vor.u32 %v3784, %v3788
        %3790 = vrot.lane.b32.xlu0 %v3789, 64
        %v3791 = vpop.permute.xlu0 %3790
        %v3793 = vrot.slane %v3746, 1
        %v3795 = vsel %vm813, %v3746, %v3791
        %v3797 = vshrl.u32 %v3756, 16
        %v3799 = vshll.u32 %v3756, 16
        %v3801 = vrot.slane %v3799, 1
        %v3802 = vor.u32 %v3797, %v3801
        %3803 = vrot.lane.b32.xlu0 %v3802, 64
        %v3804 = vpop.permute.xlu0 %3803
        %v3806 = vrot.slane %v3756, 1
        %v3808 = vsel %vm813, %v3756, %v3804
        %3810 = vrot.lane.b32.xlu0 %v3782, 64
        %v3811 = vpop.permute.xlu0 %3810
        %3812 = vrot.lane.b32.xlu0 %v3780, 64
        %v3813 = vpop.permute.xlu0 %3812
        %v3814 = vsel %vm1409, %v3811, %v3813
        %v3817 = vsel %vm813, %v3767, %v3811
        %3819 = vrot.lane.b32.xlu0 %v3769, 64
        %v3820 = vpop.permute.xlu0 %3819
        %3821 = vrot.lane.b32.xlu0 %v3767, 64
        %v3822 = vpop.permute.xlu0 %3821
        %v3823 = vsel %vm1409, %v3820, %v3822
        %v3826 = vsel %vm813, %v3780, %v3820
        %3828 = vrot.lane.b32.xlu0 %v3795, 64
        %v3829 = vpop.permute.xlu0 %3828
        %3830 = vrot.lane.b32.xlu0 %v3793, 64
        %v3831 = vpop.permute.xlu0 %3830
        %v3832 = vsel %vm1409, %v3829, %v3831
        %v3834 = vsel %vm813, %v3767, %v3829
        %3836 = vrot.lane.b32.xlu0 %v3808, 64
        %v3837 = vpop.permute.xlu0 %3836
        %3838 = vrot.lane.b32.xlu0 %v3806, 64
        %v3839 = vpop.permute.xlu0 %3838
        %v3840 = vsel %vm1409, %v3837, %v3839
        %v3843 = vsel %vm813, %v3793, %v3837
        %v3845 = vrot.slane %v3782, 6
        %v3846 = vrot.slane %v3826, 6
        %v3847 = vrot.slane %v3823, 6
        %v3848 = vrot.slane %v3795, 6
        %v3849 = vrot.slane %v3793, 6
        %v3851 = vrot.slane %v3769, 4
        %v3852 = vrot.slane %v3834, 4
        %v3853 = vrot.slane %v3832, 4
        %v3854 = vrot.slane %v3808, 4
        %v3855 = vrot.slane %v3806, 4
        %v3857 = vrot.slane %v3795, 2
        %v3858 = vrot.slane %v3843, 2
        %v3859 = vrot.slane %v3840, 2
        %v3860 = vrot.slane %v3793, 2
        %v3862 = vsel %vm689, %v3769, %v3845
        %v3864 = vsel %vm689, %v3817, %v3846
        %v3867 = vsel %vm689, %v3814, %v3847
        %v3869 = vsel %vm689, %v3769, %v3848
        %v3871 = vsel %vm689, %v3767, %v3849
        %v3873 = vsel %vm962, %v3862, %v3851
        %v3875 = vsel %vm962, %v3864, %v3852
        %v3877 = vsel %vm962, %v3867, %v3853
        %v3879 = vsel %vm962, %v3869, %v3854
        %v3881 = vsel %vm962, %v3871, %v3855
        %v3883 = vsel %vm969, %v3873, %v3857
        %v3886 = vsel %vm969, %v3875, %v3858
        %v3889 = vsel %vm969, %v3877, %v3859
        %v3891 = vsel %vm969, %v3879, %v3857
        %v3894 = vsel %vm969, %v3881, %v3860
        %v3895 = vperm.slane %v3702, 0
        %v3968 = vunpack.c.l.b16 %v3629
        %v3969 = vunpack.c.l.b16 %v3630
        %v3970 = vunpack.c.l.b16 %v3631
        %v3971 = vunpack.c.l.b16 %v3632
        %v3972 = vunpack.c.l.b16 %v3633
        %v3973 = vunpack.c.l.b16 %v3634
        %v3974 = vunpack.c.l.b16 %v3635
        %v3975 = vunpack.c.l.b16 %v3636
        %v3976 = vunpack.c.l.b16 %v3637
        %v3977 = vunpack.c.l.b16 %v3638
        %v3978 = vunpack.c.l.b16 %v3639
        %v3979 = vunpack.c.l.b16 %v3640
        %v3980 = vunpack.c.l.b16 %v3641
        %v3981 = vunpack.c.l.b16 %v3642
        %v3982 = vunpack.c.l.b16 %v3643
        %v3983 = vunpack.c.l.b16 %v3644
        %v3984 = vunpack.c.l.b16 %v3645
        %v3985 = vunpack.c.l.b16 %v3646
        %v3986 = vunpack.c.l.b16 %v3647
        %v3987 = vunpack.c.l.b16 %v3648
        %v3988 = vunpack.c.l.b16 %v3649
        %v3989 = vunpack.c.l.b16 %v3650
        %v3990 = vunpack.c.l.b16 %v3651
        %v3991 = vunpack.c.l.b16 %v3652
        %v3992 = vunpack.c.l.b16 %v3653
        %v3993 = vunpack.c.l.b16 %v3654
        %v3994 = vunpack.c.l.b16 %v3655
        %v3995 = vunpack.c.l.b16 %v3656
        %v3996 = vunpack.c.l.b16 %v3657
        %v3997 = vunpack.c.l.b16 %v3658
        %v3998 = vunpack.c.l.b16 %v3659
        %v3999 = vunpack.c.l.b16 %v3660
        %v4000 = vunpack.c.l.b16 %v3661
        %v4001 = vunpack.c.l.b16 %v3662
        %v4002 = vunpack.c.l.b16 %v3663
        %v4003 = vunpack.c.l.b16 %v3664
        %v4004 = vunpack.c.l.b16 %v3665
        %v4005 = vunpack.c.l.b16 %v3666
        %v4006 = vunpack.c.l.b16 %v3667
        %v4007 = vunpack.c.l.b16 %v3668
        %v4008 = vunpack.c.l.b16 %v3669
        %v4009 = vunpack.c.l.b16 %v3670
        %v4010 = vunpack.c.l.b16 %v3671
        %v4011 = vunpack.c.l.b16 %v3672
        %v4012 = vunpack.c.l.b16 %v3673
        %v4013 = vunpack.c.l.b16 %v3674
        %v4014 = vunpack.c.l.b16 %v3675
        %v4015 = vunpack.c.l.b16 %v3676
        %v4016 = vunpack.c.l.b16 %v3677
        %v4017 = vunpack.c.l.b16 %v3678
        %v4018 = vunpack.c.l.b16 %v3679
        %v4019 = vunpack.c.l.b16 %v3680
        %v4020 = vunpack.c.l.b16 %v3681
        %v4021 = vunpack.c.l.b16 %v3682
        %v4022 = vunpack.c.l.b16 %v3683
        %v4023 = vunpack.c.l.b16 %v3684
        %v4024 = vunpack.c.l.b16 %v3685
        %v4025 = vunpack.c.l.b16 %v3686
        %v4026 = vunpack.c.l.b16 %v3687
        %v4027 = vunpack.c.l.b16 %v3688
        %v4028 = vunpack.c.l.b16 %v3689
        %v4029 = vunpack.c.l.b16 %v3690
        %v4030 = vunpack.c.l.b16 %v3691
        %v4031 = vunpack.c.l.b16 %v3692
        %v4032 = vunpack.c.l.b16 %v3693
        %v4033 = vunpack.c.l.b16 %v3694
        %v4034 = vunpack.c.l.b16 %v3695
        %v4035 = vunpack.c.l.b16 %v3696
        %v4036 = vunpack.c.l.b16 %v3697
        %v4037 = vunpack.c.l.b16 %v3698
        %v4038 = vunpack.c.l.b16 %v3699
        %v4039 = vunpack.c.l.b16 %v3700
        %v4040 = vpack.c.b16 %v3969, %v3968
        %v4041 = vpack.c.b16 %v3971, %v3970
        %v4042 = vpack.c.b16 %v3973, %v3972
        %v4043 = vpack.c.b16 %v3975, %v3974
        %v4044 = vpack.c.b16 %v3977, %v3976
        %v4045 = vpack.c.b16 %v3979, %v3978
        %v4046 = vpack.c.b16 %v3981, %v3980
        %v4047 = vpack.c.b16 %v3983, %v3982
        %v4048 = vpack.c.b16 %v3985, %v3984
        %v4049 = vpack.c.b16 %v3987, %v3986
        %v4050 = vpack.c.b16 %v3989, %v3988
        %v4051 = vpack.c.b16 %v3991, %v3990
        %v4052 = vpack.c.b16 %v3993, %v3992
        %v4053 = vpack.c.b16 %v3995, %v3994
        %v4054 = vpack.c.b16 %v3997, %v3996
        %v4055 = vpack.c.b16 %v3999, %v3998
        %v4056 = vpack.c.b16 %v4001, %v4000
        %v4057 = vpack.c.b16 %v4003, %v4002
        %v4058 = vpack.c.b16 %v4005, %v4004
        %v4059 = vpack.c.b16 %v4007, %v4006
        %v4060 = vpack.c.b16 %v4009, %v4008
        %v4061 = vpack.c.b16 %v4011, %v4010
        %v4062 = vpack.c.b16 %v4013, %v4012
        %v4063 = vpack.c.b16 %v4015, %v4014
        %v4064 = vpack.c.b16 %v4017, %v4016
        %v4065 = vpack.c.b16 %v4019, %v4018
        %v4066 = vpack.c.b16 %v4021, %v4020
        %v4067 = vpack.c.b16 %v4023, %v4022
        %v4068 = vpack.c.b16 %v4025, %v4024
        %v4069 = vpack.c.b16 %v4027, %v4026
        %v4070 = vpack.c.b16 %v4029, %v4028
        %v4071 = vpack.c.b16 %v4031, %v4030
        %v4072 = vpack.c.b16 %v4033, %v4032
        %v4073 = vpack.c.b16 %v4035, %v4034
        %v4074 = vpack.c.b16 %v4037, %v4036
        %v4075 = vpack.c.b16 %v4039, %v4038
        %v4112 = vsel %vm813, %v3894, 0
        %4114 = vmatpush.bf16.msra.mxu0 %v4047
        %4115 = vmatpush.bf16.msra.mxu0 %v4046
        %4116 = vmatpush.bf16.msra.mxu0 %v4045
        %4117 = vmatpush.bf16.msra.mxu0 %v4044
        %4118 = vmatpush.bf16.msra.mxu0 %v4043
        %4119 = vmatpush.bf16.msra.mxu0 %v4042
        %4120 = vmatpush.bf16.msra.mxu0 %v4041
        %4121 = vmatpush.bf16.msra.mxu0 %v4040
        %4122 = vmatmul.bf16.gmra.mxu0 %v3883
        %v4123 = vpop.f32.mrf.mxu0
        %v4124 = vadd.f32 %v3895, %v4123
        %v4125 = vpop.f32.mrf.mxu0
        %v4126 = vadd.f32 %v3895, %v4125
        %4127 = vdwg.mxu0
        %4128 = vmatpush.bf16.msra.mxu0 %v4055
        %4129 = vmatpush.bf16.msra.mxu0 %v4054
        %4130 = vmatpush.bf16.msra.mxu0 %v4053
        %4131 = vmatpush.bf16.msra.mxu0 %v4052
        %4132 = vmatpush.bf16.msra.mxu0 %v4051
        %4133 = vmatpush.bf16.msra.mxu0 %v4050
        %4134 = vmatpush.bf16.msra.mxu0 %v4049
        %4135 = vmatpush.bf16.msra.mxu0 %v4048
        %4136 = vmatmul.bf16.gmra.mxu0 %v3886
        %v4137 = vpop.f32.mrf.mxu0
        %v4138 = vadd.f32 %v4124, %v4137
        %v4139 = vpop.f32.mrf.mxu0
        %v4140 = vadd.f32 %v4126, %v4139
        %4141 = vdwg.mxu0
        %4142 = vmatpush.bf16.msra.mxu0 %v4063
        %4143 = vmatpush.bf16.msra.mxu0 %v4062
        %4144 = vmatpush.bf16.msra.mxu0 %v4061
        %4145 = vmatpush.bf16.msra.mxu0 %v4060
        %4146 = vmatpush.bf16.msra.mxu0 %v4059
        %4147 = vmatpush.bf16.msra.mxu0 %v4058
        %4148 = vmatpush.bf16.msra.mxu0 %v4057
        %4149 = vmatpush.bf16.msra.mxu0 %v4056
        %4150 = vmatmul.bf16.gmra.mxu0 %v3889
        %v4151 = vpop.f32.mrf.mxu0
        %v4152 = vadd.f32 %v4138, %v4151
        %v4153 = vpop.f32.mrf.mxu0
        %v4154 = vadd.f32 %v4140, %v4153
        %4155 = vdwg.mxu0
        %4156 = vmatpush.bf16.msra.mxu0 %v4071
        %4157 = vmatpush.bf16.msra.mxu0 %v4070
        %4158 = vmatpush.bf16.msra.mxu0 %v4069
        %4159 = vmatpush.bf16.msra.mxu0 %v4068
        %4160 = vmatpush.bf16.msra.mxu0 %v4067
        %4161 = vmatpush.bf16.msra.mxu0 %v4066
        %4162 = vmatpush.bf16.msra.mxu0 %v4065
        %4163 = vmatpush.bf16.msra.mxu0 %v4064
        %4164 = vmatmul.bf16.gmra.mxu0 %v3891
        %v4165 = vpop.f32.mrf.mxu0
        %v4166 = vadd.f32 %v4152, %v4165
        %v4167 = vpop.f32.mrf.mxu0
        %v4168 = vadd.f32 %v4154, %v4167
        %4169 = vdwg.mxu0
        %4170 = vmatpush.bf16.msra.mxu0 0
        %4171 = vmatpush.bf16.msra.mxu0 0
        %4172 = vmatpush.bf16.msra.mxu0 0
        %4173 = vmatpush.bf16.msra.mxu0 0
        %4174 = vmatpush.bf16.msra.mxu0 %v4075
        %4175 = vmatpush.bf16.msra.mxu0 %v4074
        %4176 = vmatpush.bf16.msra.mxu0 %v4073
        %4177 = vmatpush.bf16.msra.mxu0 %v4072
        %4178 = vmatmul.bf16.gmra.mxu0 %v4112
        %v4179 = vpop.f32.mrf.mxu0
        %v4180 = vadd.f32 %v4166, %v4179
        %v4181 = vpop.f32.mrf.mxu0
        %v4182 = vadd.f32 %v4168, %v4181
        %4183 = vdwg.mxu0
        %v4184 = vsel %vm813, %v4180, 0.0
        %v4185 = vsel %vm813, %v4182, 0.0
        %v4186 = vadd.f32 %v4184, %v4185
        %v4187 = vrot.slane %v4186, 4
        %v4188 = vadd.f32 %v4186, %v4187
        %v4189 = vrot.slane %v4188, 2
        %v4190 = vadd.f32 %v4188, %v4189
        %v4191 = vrot.slane %v4190, 1
        %v4192 = vadd.f32 %v4190, %v4191
        %v4193 = vmul.f32 %v4192, %v1185
        %v4194 = vsub.f32 %v4180, %v4193
        %v4195 = vsub.f32 %v4182, %v4193
        %v4196 = vmul.f32 %v4194, %v4194
        %v4197 = vmul.f32 %v4195, %v4195
        %v4198 = vsel %vm813, %v4196, 0.0
        %v4199 = vsel %vm813, %v4197, 0.0
        %v4200 = vadd.f32 %v4198, %v4199
        %v4201 = vrot.slane %v4200, 4
        %v4202 = vadd.f32 %v4200, %v4201
        %v4203 = vrot.slane %v4202, 2
        %v4204 = vadd.f32 %v4202, %v4203
        %v4205 = vrot.slane %v4204, 1
        %v4206 = vadd.f32 %v4204, %v4205
        %v4207 = vmul.f32 %v4206, %v1185
        %v4208 = vadd.f32 %v4207, 1e-05
        %v4209 = vrsqrt.pop %v4208
        %v4210 = vmul.f32 %v4209, %v4208
        %v4211 = vmul.f32 %v4210, %v4209
        %v4212 = vmul.f32 0.5, %v4211
        %v4213 = vsub.f32 1.5, %v4212
        %v4214 = vmul.f32 %v4209, %v4213
        %vm4215 = vweird.f32 %v4208
        %vm4216 = vweird.f32 %v4209
        %vm4217 = vmor %vm4215, %vm4216
        %v4218 = vsel %vm4217, %v4209, %v4214
        %v4219 = vmul.f32 %v4194, %v4218
        %v4220 = vmul.f32 %v4195, %v4218
        %v4221 = vperm.slane %v3702, 1
        %v4222 = vmul.f32 %v4219, %v4221
        %v4223 = vmul.f32 %v4220, %v4221
        %v4224 = vperm.slane %v3702, 2
        %v4225 = vadd.f32 %v4222, %v4224
        %v4226 = vadd.f32 %v4223, %v4224
        %v4227 = vmax.f32 %v4225, 0.0
        %v4228 = vmax.f32 %v4226, 0.0
        %s4229 = scalar_lea.vmem %s5, 1440
        %v4230 = vld [vmem:[%s4229] sm:$0xf]
        %v4231 = vld [vmem:[%s4229 + $0x4] sm:$0xf]
        %v4232 = vld [vmem:[%s4229 + $0x8] sm:$0xf]
        %v4233 = vld [vmem:[%s4229 + $0xc] sm:$0xf]
        %v4234 = vld [vmem:[%s4229 + $0x10] sm:$0xf]
        %v4235 = vld [vmem:[%s4229 + $0x14] sm:$0xf]
        %v4236 = vld [vmem:[%s4229 + $0x18] sm:$0xf]
        %v4237 = vld [vmem:[%s4229 + $0x1c] sm:$0xf]
        %v4238 = vld [vmem:[%s4229 + $0x20] sm:$0xf]
        %v4239 = vld [vmem:[%s4229 + $0x24] sm:$0xf]
        %v4240 = vld [vmem:[%s4229 + $0x28] sm:$0xf]
        %v4241 = vld [vmem:[%s4229 + $0x2c] sm:$0xf]
        %v4242 = vld [vmem:[%s4229 + $0x30] sm:$0xf]
        %v4243 = vld [vmem:[%s4229 + $0x34] sm:$0xf]
        %v4244 = vld [vmem:[%s4229 + $0x38] sm:$0xf]
        %v4245 = vld [vmem:[%s4229 + $0x3c] sm:$0xf]
        %v4246 = vld [vmem:[%s4229 + $0x40] sm:$0xf]
        %v4247 = vld [vmem:[%s4229 + $0x44] sm:$0xf]
        %v4248 = vld [vmem:[%s4229 + $0x48] sm:$0xf]
        %v4249 = vld [vmem:[%s4229 + $0x4c] sm:$0xf]
        %v4250 = vld [vmem:[%s4229 + $0x50] sm:$0xf]
        %v4251 = vld [vmem:[%s4229 + $0x54] sm:$0xf]
        %v4252 = vld [vmem:[%s4229 + $0x58] sm:$0xf]
        %v4253 = vld [vmem:[%s4229 + $0x5c] sm:$0xf]
        %v4254 = vld [vmem:[%s4229 + $0x60] sm:$0xf]
        %v4255 = vld [vmem:[%s4229 + $0x64] sm:$0xf]
        %v4256 = vld [vmem:[%s4229 + $0x68] sm:$0xf]
        %v4257 = vld [vmem:[%s4229 + $0x6c] sm:$0xf]
        %v4258 = vld [vmem:[%s4229 + $0x70] sm:$0xf]
        %v4259 = vld [vmem:[%s4229 + $0x74] sm:$0xf]
        %v4260 = vld [vmem:[%s4229 + $0x78] sm:$0xf]
        %v4261 = vld [vmem:[%s4229 + $0x7c] sm:$0xf]
        %v4262 = vld [vmem:[%s4229 + $0x80] sm:$0xf]
        %v4263 = vld [vmem:[%s4229 + $0x84] sm:$0xf]
        %v4264 = vld [vmem:[%s4229 + $0x88] sm:$0xf]
        %v4265 = vld [vmem:[%s4229 + $0x8c] sm:$0xf]
        %v4266 = vld [vmem:[%s4229 + $0x90] sm:$0xf]
        %v4267 = vld [vmem:[%s4229 + $0x94] sm:$0xf]
        %v4268 = vld [vmem:[%s4229 + $0x98] sm:$0xf]
        %v4269 = vld [vmem:[%s4229 + $0x9c] sm:$0xf]
        %v4270 = vld [vmem:[%s4229 + $0xa0] sm:$0xf]
        %v4271 = vld [vmem:[%s4229 + $0xa4] sm:$0xf]
        %v4272 = vld [vmem:[%s4229 + $0xa8] sm:$0xf]
        %v4273 = vld [vmem:[%s4229 + $0xac] sm:$0xf]
        %v4274 = vld [vmem:[%s4229 + $0xb0] sm:$0xf]
        %v4275 = vld [vmem:[%s4229 + $0xb4] sm:$0xf]
        %v4276 = vld [vmem:[%s4229 + $0xb8] sm:$0xf]
        %v4277 = vld [vmem:[%s4229 + $0xbc] sm:$0xf]
        %v4278 = vld [vmem:[%s4229 + $0xc0] sm:$0xf]
        %v4279 = vld [vmem:[%s4229 + $0xc4] sm:$0xf]
        %v4280 = vld [vmem:[%s4229 + $0xc8] sm:$0xf]
        %v4281 = vld [vmem:[%s4229 + $0xcc] sm:$0xf]
        %v4282 = vld [vmem:[%s4229 + $0xd0] sm:$0xf]
        %v4283 = vld [vmem:[%s4229 + $0xd4] sm:$0xf]
        %v4284 = vld [vmem:[%s4229 + $0xd8] sm:$0xf]
        %v4285 = vld [vmem:[%s4229 + $0xdc] sm:$0xf]
        %v4286 = vld [vmem:[%s4229 + $0xe0] sm:$0xf]
        %v4287 = vld [vmem:[%s4229 + $0xe4] sm:$0xf]
        %v4288 = vld [vmem:[%s4229 + $0xe8] sm:$0xf]
        %v4289 = vld [vmem:[%s4229 + $0xec] sm:$0xf]
        %v4290 = vld [vmem:[%s4229 + $0xf0] sm:$0xf]
        %v4291 = vld [vmem:[%s4229 + $0xf4] sm:$0xf]
        %v4292 = vld [vmem:[%s4229 + $0xf8] sm:$0xf]
        %v4293 = vld [vmem:[%s4229 + $0xfc] sm:$0xf]
        %v4294 = vld [vmem:[%s4229 + $0x100] sm:$0xf]
        %v4295 = vld [vmem:[%s4229 + $0x104] sm:$0xf]
        %v4296 = vld [vmem:[%s4229 + $0x108] sm:$0xf]
        %v4297 = vld [vmem:[%s4229 + $0x10c] sm:$0xf]
        %v4298 = vld [vmem:[%s4229 + $0x110] sm:$0xf]
        %v4299 = vld [vmem:[%s4229 + $0x114] sm:$0xf]
        %v4300 = vld [vmem:[%s4229 + $0x118] sm:$0xf]
        %v4301 = vld [vmem:[%s4229 + $0x11c] sm:$0xf]
        %s4302 = scalar_lea.vmem %s6, 20
        %v4303 = vld [vmem:[%s4302] sm:$0x7]
        %v4304 = vpack.c.bf16 %v4227, %v4227
        %v4305 = vpack.c.bf16 %v4228, %v4228
        %v4307 = vunpack.c.l.b16 %v4304
        %v4308 = vpack.c.b16 %v4307, %v4307
        %v4310 = vshrl.u32 %v4308, 16
        %v4313 = vrot.slane %v4310, 7
        %v4314 = vshll.u32 %v4308, 16
        %v4316 = vor.u32 %v4313, %v4314
        %v4318 = vrot.slane %v4314, 7
        %v4320 = vsel %vm660, %v4310, %v4316
        %v4321 = vsel %vm1314, %v4320, %v4318
        %v4322 = vrot.slane %v4310, 2
        %v4324 = vrot.slane %v4310, 1
        %v4325 = vrot.slane %v4314, 2
        %v4326 = vor.u32 %v4324, %v4325
        %v4328 = vrot.slane %v4314, 1
        %v4330 = vsel %vm660, %v4322, %v4326
        %v4331 = vsel %vm1314, %v4330, %v4328
        %v4333 = vunpack.c.l.b16 %v4305
        %v4334 = vpack.c.b16 %v4333, %v4333
        %v4336 = vshrl.u32 %v4334, 16
        %v4339 = vrot.slane %v4336, 7
        %v4340 = vshll.u32 %v4334, 16
        %v4342 = vor.u32 %v4339, %v4340
        %v4344 = vrot.slane %v4340, 7
        %v4346 = vsel %vm660, %v4336, %v4342
        %v4347 = vsel %vm1314, %v4346, %v4344
        %v4348 = vrot.slane %v4336, 2
        %v4350 = vrot.slane %v4336, 1
        %v4351 = vrot.slane %v4340, 2
        %v4352 = vor.u32 %v4350, %v4351
        %v4354 = vrot.slane %v4340, 1
        %v4356 = vsel %vm660, %v4348, %v4352
        %v4357 = vsel %vm1314, %v4356, %v4354
        %v4359 = vshrl.u32 %v4331, 16
        %v4361 = vshll.u32 %v4331, 16
        %v4363 = vrot.slane %v4361, 1
        %v4364 = vor.u32 %v4359, %v4363
        %4365 = vrot.lane.b32.xlu0 %v4364, 64
        %v4366 = vpop.permute.xlu0 %4365
        %v4368 = vrot.slane %v4331, 1
        %v4370 = vsel %vm813, %v4331, %v4366
        %v4372 = vshrl.u32 %v4321, 16
        %v4374 = vshll.u32 %v4321, 16
        %v4376 = vrot.slane %v4374, 1
        %v4377 = vor.u32 %v4372, %v4376
        %4378 = vrot.lane.b32.xlu0 %v4377, 64
        %v4379 = vpop.permute.xlu0 %4378
        %v4381 = vrot.slane %v4321, 1
        %v4383 = vsel %vm813, %v4321, %v4379
        %v4385 = vshrl.u32 %v4347, 16
        %v4387 = vshll.u32 %v4347, 16
        %v4389 = vrot.slane %v4387, 1
        %v4390 = vor.u32 %v4385, %v4389
        %4391 = vrot.lane.b32.xlu0 %v4390, 64
        %v4392 = vpop.permute.xlu0 %4391
        %v4394 = vrot.slane %v4347, 1
        %v4396 = vsel %vm813, %v4347, %v4392
        %v4398 = vshrl.u32 %v4357, 16
        %v4400 = vshll.u32 %v4357, 16
        %v4402 = vrot.slane %v4400, 1
        %v4403 = vor.u32 %v4398, %v4402
        %4404 = vrot.lane.b32.xlu0 %v4403, 64
        %v4405 = vpop.permute.xlu0 %4404
        %v4407 = vrot.slane %v4357, 1
        %v4409 = vsel %vm813, %v4357, %v4405
        %4411 = vrot.lane.b32.xlu0 %v4383, 64
        %v4412 = vpop.permute.xlu0 %4411
        %4413 = vrot.lane.b32.xlu0 %v4381, 64
        %v4414 = vpop.permute.xlu0 %4413
        %v4415 = vsel %vm1409, %v4412, %v4414
        %v4418 = vsel %vm813, %v4368, %v4412
        %4420 = vrot.lane.b32.xlu0 %v4370, 64
        %v4421 = vpop.permute.xlu0 %4420
        %4422 = vrot.lane.b32.xlu0 %v4368, 64
        %v4423 = vpop.permute.xlu0 %4422
        %v4424 = vsel %vm1409, %v4421, %v4423
        %v4427 = vsel %vm813, %v4381, %v4421
        %4429 = vrot.lane.b32.xlu0 %v4396, 64
        %v4430 = vpop.permute.xlu0 %4429
        %4431 = vrot.lane.b32.xlu0 %v4394, 64
        %v4432 = vpop.permute.xlu0 %4431
        %v4433 = vsel %vm1409, %v4430, %v4432
        %v4435 = vsel %vm813, %v4368, %v4430
        %4437 = vrot.lane.b32.xlu0 %v4409, 64
        %v4438 = vpop.permute.xlu0 %4437
        %4439 = vrot.lane.b32.xlu0 %v4407, 64
        %v4440 = vpop.permute.xlu0 %4439
        %v4441 = vsel %vm1409, %v4438, %v4440
        %v4444 = vsel %vm813, %v4394, %v4438
        %v4446 = vrot.slane %v4383, 6
        %v4447 = vrot.slane %v4427, 6
        %v4448 = vrot.slane %v4424, 6
        %v4449 = vrot.slane %v4396, 6
        %v4450 = vrot.slane %v4394, 6
        %v4452 = vrot.slane %v4370, 4
        %v4453 = vrot.slane %v4435, 4
        %v4454 = vrot.slane %v4433, 4
        %v4455 = vrot.slane %v4409, 4
        %v4456 = vrot.slane %v4407, 4
        %v4458 = vrot.slane %v4396, 2
        %v4459 = vrot.slane %v4444, 2
        %v4460 = vrot.slane %v4441, 2
        %v4461 = vrot.slane %v4394, 2
        %v4463 = vsel %vm689, %v4370, %v4446
        %v4465 = vsel %vm689, %v4418, %v4447
        %v4468 = vsel %vm689, %v4415, %v4448
        %v4470 = vsel %vm689, %v4370, %v4449
        %v4472 = vsel %vm689, %v4368, %v4450
        %v4474 = vsel %vm962, %v4463, %v4452
        %v4476 = vsel %vm962, %v4465, %v4453
        %v4478 = vsel %vm962, %v4468, %v4454
        %v4480 = vsel %vm962, %v4470, %v4455
        %v4482 = vsel %vm962, %v4472, %v4456
        %v4484 = vsel %vm969, %v4474, %v4458
        %v4487 = vsel %vm969, %v4476, %v4459
        %v4490 = vsel %vm969, %v4478, %v4460
        %v4492 = vsel %vm969, %v4480, %v4458
        %v4495 = vsel %vm969, %v4482, %v4461
        %v4496 = vperm.slane %v4303, 0
        %v4569 = vunpack.c.l.b16 %v4230
        %v4570 = vunpack.c.l.b16 %v4231
        %v4571 = vunpack.c.l.b16 %v4232
        %v4572 = vunpack.c.l.b16 %v4233
        %v4573 = vunpack.c.l.b16 %v4234
        %v4574 = vunpack.c.l.b16 %v4235
        %v4575 = vunpack.c.l.b16 %v4236
        %v4576 = vunpack.c.l.b16 %v4237
        %v4577 = vunpack.c.l.b16 %v4238
        %v4578 = vunpack.c.l.b16 %v4239
        %v4579 = vunpack.c.l.b16 %v4240
        %v4580 = vunpack.c.l.b16 %v4241
        %v4581 = vunpack.c.l.b16 %v4242
        %v4582 = vunpack.c.l.b16 %v4243
        %v4583 = vunpack.c.l.b16 %v4244
        %v4584 = vunpack.c.l.b16 %v4245
        %v4585 = vunpack.c.l.b16 %v4246
        %v4586 = vunpack.c.l.b16 %v4247
        %v4587 = vunpack.c.l.b16 %v4248
        %v4588 = vunpack.c.l.b16 %v4249
        %v4589 = vunpack.c.l.b16 %v4250
        %v4590 = vunpack.c.l.b16 %v4251
        %v4591 = vunpack.c.l.b16 %v4252
        %v4592 = vunpack.c.l.b16 %v4253
        %v4593 = vunpack.c.l.b16 %v4254
        %v4594 = vunpack.c.l.b16 %v4255
        %v4595 = vunpack.c.l.b16 %v4256
        %v4596 = vunpack.c.l.b16 %v4257
        %v4597 = vunpack.c.l.b16 %v4258
        %v4598 = vunpack.c.l.b16 %v4259
        %v4599 = vunpack.c.l.b16 %v4260
        %v4600 = vunpack.c.l.b16 %v4261
        %v4601 = vunpack.c.l.b16 %v4262
        %v4602 = vunpack.c.l.b16 %v4263
        %v4603 = vunpack.c.l.b16 %v4264
        %v4604 = vunpack.c.l.b16 %v4265
        %v4605 = vunpack.c.l.b16 %v4266
        %v4606 = vunpack.c.l.b16 %v4267
        %v4607 = vunpack.c.l.b16 %v4268
        %v4608 = vunpack.c.l.b16 %v4269
        %v4609 = vunpack.c.l.b16 %v4270
        %v4610 = vunpack.c.l.b16 %v4271
        %v4611 = vunpack.c.l.b16 %v4272
        %v4612 = vunpack.c.l.b16 %v4273
        %v4613 = vunpack.c.l.b16 %v4274
        %v4614 = vunpack.c.l.b16 %v4275
        %v4615 = vunpack.c.l.b16 %v4276
        %v4616 = vunpack.c.l.b16 %v4277
        %v4617 = vunpack.c.l.b16 %v4278
        %v4618 = vunpack.c.l.b16 %v4279
        %v4619 = vunpack.c.l.b16 %v4280
        %v4620 = vunpack.c.l.b16 %v4281
        %v4621 = vunpack.c.l.b16 %v4282
        %v4622 = vunpack.c.l.b16 %v4283
        %v4623 = vunpack.c.l.b16 %v4284
        %v4624 = vunpack.c.l.b16 %v4285
        %v4625 = vunpack.c.l.b16 %v4286
        %v4626 = vunpack.c.l.b16 %v4287
        %v4627 = vunpack.c.l.b16 %v4288
        %v4628 = vunpack.c.l.b16 %v4289
        %v4629 = vunpack.c.l.b16 %v4290
        %v4630 = vunpack.c.l.b16 %v4291
        %v4631 = vunpack.c.l.b16 %v4292
        %v4632 = vunpack.c.l.b16 %v4293
        %v4633 = vunpack.c.l.b16 %v4294
        %v4634 = vunpack.c.l.b16 %v4295
        %v4635 = vunpack.c.l.b16 %v4296
        %v4636 = vunpack.c.l.b16 %v4297
        %v4637 = vunpack.c.l.b16 %v4298
        %v4638 = vunpack.c.l.b16 %v4299
        %v4639 = vunpack.c.l.b16 %v4300
        %v4640 = vunpack.c.l.b16 %v4301
        %v4641 = vpack.c.b16 %v4570, %v4569
        %v4642 = vpack.c.b16 %v4572, %v4571
        %v4643 = vpack.c.b16 %v4574, %v4573
        %v4644 = vpack.c.b16 %v4576, %v4575
        %v4645 = vpack.c.b16 %v4578, %v4577
        %v4646 = vpack.c.b16 %v4580, %v4579
        %v4647 = vpack.c.b16 %v4582, %v4581
        %v4648 = vpack.c.b16 %v4584, %v4583
        %v4649 = vpack.c.b16 %v4586, %v4585
        %v4650 = vpack.c.b16 %v4588, %v4587
        %v4651 = vpack.c.b16 %v4590, %v4589
        %v4652 = vpack.c.b16 %v4592, %v4591
        %v4653 = vpack.c.b16 %v4594, %v4593
        %v4654 = vpack.c.b16 %v4596, %v4595
        %v4655 = vpack.c.b16 %v4598, %v4597
        %v4656 = vpack.c.b16 %v4600, %v4599
        %v4657 = vpack.c.b16 %v4602, %v4601
        %v4658 = vpack.c.b16 %v4604, %v4603
        %v4659 = vpack.c.b16 %v4606, %v4605
        %v4660 = vpack.c.b16 %v4608, %v4607
        %v4661 = vpack.c.b16 %v4610, %v4609
        %v4662 = vpack.c.b16 %v4612, %v4611
        %v4663 = vpack.c.b16 %v4614, %v4613
        %v4664 = vpack.c.b16 %v4616, %v4615
        %v4665 = vpack.c.b16 %v4618, %v4617
        %v4666 = vpack.c.b16 %v4620, %v4619
        %v4667 = vpack.c.b16 %v4622, %v4621
        %v4668 = vpack.c.b16 %v4624, %v4623
        %v4669 = vpack.c.b16 %v4626, %v4625
        %v4670 = vpack.c.b16 %v4628, %v4627
        %v4671 = vpack.c.b16 %v4630, %v4629
        %v4672 = vpack.c.b16 %v4632, %v4631
        %v4673 = vpack.c.b16 %v4634, %v4633
        %v4674 = vpack.c.b16 %v4636, %v4635
        %v4675 = vpack.c.b16 %v4638, %v4637
        %v4676 = vpack.c.b16 %v4640, %v4639
        %v4713 = vsel %vm813, %v4495, 0
        %4715 = vmatpush.bf16.msra.mxu0 %v4648
        %4716 = vmatpush.bf16.msra.mxu0 %v4647
        %4717 = vmatpush.bf16.msra.mxu0 %v4646
        %4718 = vmatpush.bf16.msra.mxu0 %v4645
        %4719 = vmatpush.bf16.msra.mxu0 %v4644
        %4720 = vmatpush.bf16.msra.mxu0 %v4643
        %4721 = vmatpush.bf16.msra.mxu0 %v4642
        %4722 = vmatpush.bf16.msra.mxu0 %v4641
        %4723 = vmatmul.bf16.gmra.mxu0 %v4484
        %v4724 = vpop.f32.mrf.mxu0
        %v4725 = vadd.f32 %v4496, %v4724
        %v4726 = vpop.f32.mrf.mxu0
        %v4727 = vadd.f32 %v4496, %v4726
        %4728 = vdwg.mxu0
        %4729 = vmatpush.bf16.msra.mxu0 %v4656
        %4730 = vmatpush.bf16.msra.mxu0 %v4655
        %4731 = vmatpush.bf16.msra.mxu0 %v4654
        %4732 = vmatpush.bf16.msra.mxu0 %v4653
        %4733 = vmatpush.bf16.msra.mxu0 %v4652
        %4734 = vmatpush.bf16.msra.mxu0 %v4651
        %4735 = vmatpush.bf16.msra.mxu0 %v4650
        %4736 = vmatpush.bf16.msra.mxu0 %v4649
        %4737 = vmatmul.bf16.gmra.mxu0 %v4487
        %v4738 = vpop.f32.mrf.mxu0
        %v4739 = vadd.f32 %v4725, %v4738
        %v4740 = vpop.f32.mrf.mxu0
        %v4741 = vadd.f32 %v4727, %v4740
        %4742 = vdwg.mxu0
        %4743 = vmatpush.bf16.msra.mxu0 %v4664
        %4744 = vmatpush.bf16.msra.mxu0 %v4663
        %4745 = vmatpush.bf16.msra.mxu0 %v4662
        %4746 = vmatpush.bf16.msra.mxu0 %v4661
        %4747 = vmatpush.bf16.msra.mxu0 %v4660
        %4748 = vmatpush.bf16.msra.mxu0 %v4659
        %4749 = vmatpush.bf16.msra.mxu0 %v4658
        %4750 = vmatpush.bf16.msra.mxu0 %v4657
        %4751 = vmatmul.bf16.gmra.mxu0 %v4490
        %v4752 = vpop.f32.mrf.mxu0
        %v4753 = vadd.f32 %v4739, %v4752
        %v4754 = vpop.f32.mrf.mxu0
        %v4755 = vadd.f32 %v4741, %v4754
        %4756 = vdwg.mxu0
        %4757 = vmatpush.bf16.msra.mxu0 %v4672
        %4758 = vmatpush.bf16.msra.mxu0 %v4671
        %4759 = vmatpush.bf16.msra.mxu0 %v4670
        %4760 = vmatpush.bf16.msra.mxu0 %v4669
        %4761 = vmatpush.bf16.msra.mxu0 %v4668
        %4762 = vmatpush.bf16.msra.mxu0 %v4667
        %4763 = vmatpush.bf16.msra.mxu0 %v4666
        %4764 = vmatpush.bf16.msra.mxu0 %v4665
        %4765 = vmatmul.bf16.gmra.mxu0 %v4492
        %v4766 = vpop.f32.mrf.mxu0
        %v4767 = vadd.f32 %v4753, %v4766
        %v4768 = vpop.f32.mrf.mxu0
        %v4769 = vadd.f32 %v4755, %v4768
        %4770 = vdwg.mxu0
        %4771 = vmatpush.bf16.msra.mxu0 0
        %4772 = vmatpush.bf16.msra.mxu0 0
        %4773 = vmatpush.bf16.msra.mxu0 0
        %4774 = vmatpush.bf16.msra.mxu0 0
        %4775 = vmatpush.bf16.msra.mxu0 %v4676
        %4776 = vmatpush.bf16.msra.mxu0 %v4675
        %4777 = vmatpush.bf16.msra.mxu0 %v4674
        %4778 = vmatpush.bf16.msra.mxu0 %v4673
        %4779 = vmatmul.bf16.gmra.mxu0 %v4713
        %v4780 = vpop.f32.mrf.mxu0
        %v4781 = vadd.f32 %v4767, %v4780
        %v4782 = vpop.f32.mrf.mxu0
        %v4783 = vadd.f32 %v4769, %v4782
        %4784 = vdwg.mxu0
        %v4785 = vsel %vm813, %v4781, 0.0
        %v4786 = vsel %vm813, %v4783, 0.0
        %v4787 = vadd.f32 %v4785, %v4786
        %v4788 = vrot.slane %v4787, 4
        %v4789 = vadd.f32 %v4787, %v4788
        %v4790 = vrot.slane %v4789, 2
        %v4791 = vadd.f32 %v4789, %v4790
        %v4792 = vrot.slane %v4791, 1
        %v4793 = vadd.f32 %v4791, %v4792
        %v4794 = vmul.f32 %v4793, %v1185
        %v4795 = vsub.f32 %v4781, %v4794
        %v4796 = vsub.f32 %v4783, %v4794
        %v4797 = vmul.f32 %v4795, %v4795
        %v4798 = vmul.f32 %v4796, %v4796
        %v4799 = vsel %vm813, %v4797, 0.0
        %v4800 = vsel %vm813, %v4798, 0.0
        %v4801 = vadd.f32 %v4799, %v4800
        %v4802 = vrot.slane %v4801, 4
        %v4803 = vadd.f32 %v4801, %v4802
        %v4804 = vrot.slane %v4803, 2
        %v4805 = vadd.f32 %v4803, %v4804
        %v4806 = vrot.slane %v4805, 1
        %v4807 = vadd.f32 %v4805, %v4806
        %v4808 = vmul.f32 %v4807, %v1185
        %v4809 = vadd.f32 %v4808, 1e-05
        %v4810 = vrsqrt.pop %v4809
        %v4811 = vmul.f32 %v4810, %v4809
        %v4812 = vmul.f32 %v4811, %v4810
        %v4813 = vmul.f32 0.5, %v4812
        %v4814 = vsub.f32 1.5, %v4813
        %v4815 = vmul.f32 %v4810, %v4814
        %vm4816 = vweird.f32 %v4809
        %vm4817 = vweird.f32 %v4810
        %vm4818 = vmor %vm4816, %vm4817
        %v4819 = vsel %vm4818, %v4810, %v4815
        %v4820 = vmul.f32 %v4795, %v4819
        %v4821 = vmul.f32 %v4796, %v4819
        %v4822 = vperm.slane %v4303, 1
        %v4823 = vmul.f32 %v4820, %v4822
        %v4824 = vmul.f32 %v4821, %v4822
        %v4825 = vperm.slane %v4303, 2
        %v4826 = vadd.f32 %v4823, %v4825
        %v4827 = vadd.f32 %v4824, %v4825
        %v4828 = vadd.f32 %v4826, %v3626
        %v4829 = vadd.f32 %v4827, %v3627
        %4830 = vst.msk [vmem:[%s271] sm:$0xff] %vm813, %v4828
        %4831 = vst.msk [vmem:[%s271 + $0x8] sm:$0xff] %vm813, %v4829
        %s4832 = sand.u32 %s181, 1
        %s4833 = scalar_lea.sflag [#allocation3], %s4832
        %s4834 = sand.u32 %s181, 1
        %s4835 = smul.addr %s4834, 16
        %s4836 = scalar_lea.vmem [#allocation2], %s4835
        // Predicated region
        $region49: #{l_block_forward.3} parent=47 // pred_check
          %p4837 = pneg %p191
        $region50: #{l_block_forward.3} parent=47 // pred_check_branch
          %4839 = sbr.rel (%p4837) target = $region52
        $region51: #{l_block_forward.3} parent=47 // pred_region
          %4841 = vsyncadd %s4833, 0
          %s4842 = smul.addr %s21, 2
          %s4843 = smul.addr %s4842, 8
          %s4844 = scalar_lea.hbm %s7, %s4843
          %s4845 = sshll.u32 %s4836, 4
          %s4846 = int_to_ptr.vmem [resolvable:$true] %s4845
          %s4847 = sshll.u32 %s4844, 4
          %s4848 = int_to_ptr.hbm [resolvable:$true] %s4847
          %4853 = dma.vmem_to_hbm [thread:$0]  %s4846, 256, %s4848, %s4833, 128, 128, 8
        $region52: #{l_block_forward.3} parent=47 // pred_fallthru
          _
      $region48: #{l_block_forward.3} parent=5 // pred_fallthru
        _
      %p4854 = scmp.le.s32.totalorder 2, %s16
      // Predicated region
      $region53: #{l_block_forward.3} parent=5 // pred_check
        %p4855 = pneg %p4854
      $region54: #{l_block_forward.3} parent=5 // pred_check_branch
        %4857 = sbr.rel (%p4855) target = $region56
      $region55: #{l_block_forward.3} parent=5 // pred_region
        %s4858 = ssub.s32 %s16, 2
        // Predicated region
        $region57: #{l_block_forward.3} parent=55 // pred_check
          %p4859 = pneg %p197
        $region58: #{l_block_forward.3} parent=55 // pred_check_branch
          %4861 = sbr.rel (%p4859) target = $region60
        $region59: #{l_block_forward.3} parent=55 // pred_region
          %s4862 = sand.u32 %s182, 1
          %s4863 = scalar_lea.sflag [#allocation3], %s4862
          %s4864 = sand.u32 %s182, 1
          %s4865 = smul.addr %s4864, 16
          %s4866 = scalar_lea.vmem [#allocation2], %s4865
          %4868 = dma.done %s4863, 256
        $region60: #{l_block_forward.3} parent=55 // pred_fallthru
          _
      $region56: #{l_block_forward.3} parent=5 // pred_fallthru
        _
    $region6: #{l_block_forward.3} parent=1 // loop_footer
      %s20 = sadd.s32 1, %s16
    $region7: #{l_block_forward.3} parent=1 // loop_footer_branch
      %15 = sbr.rel target = $region3
    $region8: #{l_block_forward.3} parent=1 // loop_exit
      _
    %4869 = vsyncpa [#allocation3], 1
    %s4870 = scalar_lea.sflag [#allocation3], 1
    %4871 = vsyncpa %s4870, 1

</llo_original>
